<compile_context>
chip_gen: v7x
topology: tpu7x:2x2x1
jax: 0.10.0
libtpu: 0.0.40
codegen_flags: <defaults>
</compile_context>

<pallas_src>
import functools

import numpy as np
import jax
import jax.numpy as jnp
from jax.experimental import pallas as pl
from jax.experimental.pallas import tpu as pltpu


def paiconv_max_kernel(g_ref, p_ref, w1_ref, w2r_ref, w2c_ref, b_ref, o_ref,
                       r_scr, z_scr, pinv_scr, *, use_stride0):
    # g_ref : (C, k*TM)          gathered neighbour features, k folded onto lanes
    # p_ref : (Ksize, k*TM)      permatrix, k folded onto lanes
    # w1_ref: (C*out_h, Ksize)   Linear weight, rows ordered c*out_h + o
    # w2r_ref, w2c_ref: (out_h, C)  Conv1d weight (relative / centre part)
    # b_ref : (out_c, 1)         [bias1 ; bias2]
    # o_ref : (out_c, TM)
    # r_scr : (C*out_h, k*TM)    branch-1 MXU result
    # z_scr : (out_h+Ksize, k*TM) branch-2 MXU result (extra rows = padding for
    #                             stride-0 sublane-broadcast loads)
    # pinv_scr: (Ksize, TM)      1 / (sum_k permatrix + 1e-6)
    C = g_ref.shape[0]
    Ksize = p_ref.shape[0]
    out_h = w2r_ref.shape[0]
    TM = o_ref.shape[1]
    k = p_ref.shape[1] // TM
    f32 = jnp.float32
    cdt = p_ref.dtype                     # MXU operand dtype (f32, or bf16 opt-in)

    # ---- MXU: one wide dot per weight over all k*TM lanes (no per-k launches) --
    # branch-1 kernel_size contraction: r[(c,o), kk*TM+m] = sum_j W1[o,c,j] p[kk,j,m]
    r_scr[...] = jnp.dot(w1_ref[...].astype(cdt), p_ref[...],
                         preferred_element_type=f32)
    # branch-2 channel projection (torch's concat folded into w2_rel / w2_ctr):
    #   z[o, kk*TM+m] = w2_rel @ g_kk + w2_ctr @ g_0
    zc = jnp.dot(w2c_ref[...].astype(cdt), g_ref[:, 0:TM],
                 preferred_element_type=f32)                          # (out_h, TM)
    zr = jnp.dot(w2r_ref[...].astype(cdt), g_ref[...],
                 preferred_element_type=f32)                          # (out_h, k*TM)
    z_scr[0:out_h, :] = zr + jnp.concatenate([zc] * k, axis=1)

    # ---- permatrix normalisation: pinv[j,m] = 1/(sum_kk p[kk,j,m] + 1e-6) ------
    psum = p_ref[:, 0:TM].astype(f32)
    for kk in range(1, k):
        psum = psum + p_ref[:, kk * TM:(kk + 1) * TM].astype(f32)
    pinv_scr[...] = pl.reciprocal(psum + 1e-6, approx=True)           # EUP slot

    b = b_ref[...].astype(f32)                                        # (out_c, 1)

    # ---- branch 1: out1[o,m] = sum_{kk,c} r[(c,o),kk,m] * g[c,kk,m] ------------
    out1 = jnp.zeros((out_h, TM), f32)
    for kk in range(k):
        lo = kk * TM
        for c in range(C):
            out1 = out1 + (r_scr[c * out_h:(c + 1) * out_h, lo:lo + TM]
                           * g_ref[c:c + 1, lo:lo + TM].astype(f32))
    o_ref[0:out_h, :] = out1 + b[0:out_h, :]

    # ---- branch 2: kernel_size axis on sublanes, max goes to the XLU -----------
    # S_o[j,m] = sum_kk z[o,kk,m] * p[kk,j,m];  out2[o,m] = max_j S_o[j,m]*pinv[j,m]
    for o in range(out_h):
        acc = jnp.zeros((Ksize, TM), f32)
        for kk in range(k):
            lo = kk * TM
            if use_stride0:
                # sublane-broadcast load of z[o, kk-slice] over the Ksize rows
                zb = z_scr[pl.ds(o, Ksize, stride=0), pl.ds(lo, TM)]
            else:
                zb = jnp.broadcast_to(z_scr[o:o + 1, lo:lo + TM], (Ksize, TM))
            acc = acc + p_ref[:, lo:lo + TM].astype(f32) * zb
        y = acc * pinv_scr[...]                                       # (Ksize, TM)
        o_ref[out_h + o:out_h + o + 1, :] = (
            jnp.max(y, axis=0, keepdims=True) + b[out_h + o:out_h + o + 1, :])


def paiconv_max_forward(feature, neigh_indexs, permatrix,
                        w1, b1, w2, b2, bn_gamma, bn_beta,
                        *, k, kernel_size, tm=1024, input_dtype=jnp.float32):
    B, C, N = feature.shape
    M = B * N
    Ksize = kernel_size
    out_h = w1.shape[0]
    out_c = 2 * out_h

    # ---- glue: data-dependent neighbour gather (stays in XLA) ----
    # TODO(synk): in-kernel DMA gather (scalar-prefetched indices) would remove this
    # pass and the layout transpose below from HBM traffic (dominant on v5e).
    feat_flat = jnp.transpose(feature, (0, 2, 1)).reshape(M, C)
    gathered = jnp.take(feat_flat, neigh_indexs.reshape(-1), axis=0).reshape(M, k, C)

    # ---- point tile (lane-dense, multiple of 128) and zero padding ----
    pts128 = ((M + 127) // 128) * 128
    tm_eff = max(128, (min(tm, pts128) // 128) * 128)
    # v7x megacore: keep >=2 grid steps when there is enough work to split
    if pts128 <= tm_eff and pts128 >= 256:
        tm_eff = max(128, ((pts128 // 2 + 127) // 128) * 128)
    mpad = ((M + tm_eff - 1) // tm_eff) * tm_eff
    n_tiles = mpad // tm_eff
    if mpad != M:
        gathered = jnp.pad(gathered, ((0, mpad - M), (0, 0), (0, 0)))
        permatrix = jnp.pad(permatrix, ((0, mpad - M), (0, 0), (0, 0)))

    # ---- kernel layouts: ONE fused transpose each, k folded onto the lane axis --
    # column index within a tile = kk*tm + m  (tile-major, neighbour-major, point)
    g2 = jnp.transpose(gathered.reshape(n_tiles, tm_eff, k, C),
                       (3, 0, 2, 1)).reshape(C, n_tiles * k * tm_eff).astype(input_dtype)
    p2 = jnp.transpose(permatrix.reshape(n_tiles, tm_eff, k, Ksize),
                       (3, 0, 2, 1)).reshape(Ksize, n_tiles * k * tm_eff).astype(input_dtype)

    # ---- fold torch layouts into kernel-friendly weights ----
    w1_mat = jnp.transpose(w1.reshape(out_h, C, Ksize), (1, 0, 2)).reshape(C * out_h, Ksize)
    w2m = w2.reshape(out_h, 2 * C)
    w2_rel = w2m[:, C:]                 # acts on every neighbour feature
    w2_ctr = w2m[:, :C] - w2m[:, C:]    # acts on the centre feature (concat folded away)
    bias = jnp.concatenate([b1, b2]).reshape(out_c, 1)

    ktm = k * tm_eff

    def build(use_stride0):
        return pl.pallas_call(
            functools.partial(paiconv_max_kernel, use_stride0=use_stride0),
            out_shape=jax.ShapeDtypeStruct((out_c, mpad), jnp.float32),
            grid_spec=pltpu.PrefetchScalarGridSpec(
                num_scalar_prefetch=0,
                grid=(n_tiles,),
                in_specs=[
                    pl.BlockSpec((C, ktm), lambda i: (0, i)),
                    pl.BlockSpec((Ksize, ktm), lambda i: (0, i)),
                    pl.BlockSpec((C * out_h, Ksize), lambda i: (0, 0)),
                    pl.BlockSpec((out_h, C), lambda i: (0, 0)),
                    pl.BlockSpec((out_h, C), lambda i: (0, 0)),
                    pl.BlockSpec((out_c, 1), lambda i: (0, 0)),
                ],
                out_specs=pl.BlockSpec((out_c, tm_eff), lambda i: (0, i)),
                scratch_shapes=[
                    pltpu.VMEM((C * out_h, ktm), jnp.float32),        # r  (branch 1)
                    pltpu.VMEM((out_h + Ksize, ktm), jnp.float32),    # z  (branch 2)
                    pltpu.VMEM((Ksize, tm_eff), jnp.float32),         # pinv
                ],
            ),
            compiler_params=pltpu.CompilerParams(
                dimension_semantics=("parallel",)),
        )

    args = (g2, p2, w1_mat, w2_rel, w2_ctr, bias)
    try:
        out = build(use_stride0=True)(*args)
    except Exception:
        # graceful fallback if stride-0 sublane-broadcast loads are unavailable
        out = build(use_stride0=False)(*args)

    out = out[:, :M].reshape(out_c, B, N).transpose(1, 0, 2)          # (B, out_c, N)

    # ---- glue: BatchNorm1d, training-mode batch statistics, eps=1e-5 ----
    mean = jnp.mean(out, axis=(0, 2), keepdims=True)
    var = jnp.mean((out - mean) ** 2, axis=(0, 2), keepdims=True)
    out = (out - mean) * jax.lax.rsqrt(var + 1e-5)
    return out * bn_gamma.reshape(1, out_c, 1) + bn_beta.reshape(1, out_c, 1)


def reference_forward(feature, neigh_indexs, permatrix,
                      w1, b1, w2, b2, bn_gamma, bn_beta, *, k, kernel_size):
    # pure-JAX transcription of the torch PaiConvMax.forward for verification
    B, C, N = feature.shape
    M = B * N
    out_h = w1.shape[0]
    out_c = 2 * out_h
    feat_flat = jnp.transpose(feature, (0, 2, 1)).reshape(M, C)
    feats = feat_flat[neigh_indexs.reshape(-1)].reshape(M, k, C)
    feats = jnp.transpose(feats, (0, 2, 1))                             # (M, C, k)
    feats1 = jnp.einsum('mck,mkj->mcj', feats, permatrix)               # (M, C, Ksize)
    out1 = feats1.reshape(M, C * kernel_size) @ w1.T + b1               # (M, out_h)
    f_rep = jnp.broadcast_to(feats[:, :, 0:1], feats.shape)
    f_rel = feats - f_rep
    feats2 = jnp.concatenate([f_rep, f_rel], axis=1)                    # (M, 2C, k)
    pn = permatrix / (jnp.sum(permatrix, axis=1, keepdims=True) + 1e-6)
    feats2 = jnp.einsum('mck,mkj->mcj', feats2, pn)                     # (M, 2C, Ksize)
    w2m = w2.reshape(out_h, 2 * C)
    y2 = jnp.einsum('oc,mcj->moj', w2m, feats2) + b2[None, :, None]
    out2 = jnp.max(y2, axis=-1)                                         # (M, out_h)
    out = jnp.concatenate([out1, out2], axis=-1)                        # (M, out_c)
    out_bcn = jnp.transpose(out.reshape(B, N, out_c), (0, 2, 1))        # (B, out_c, N)
    mean = jnp.mean(out_bcn, axis=(0, 2), keepdims=True)
    var = jnp.mean((out_bcn - mean) ** 2, axis=(0, 2), keepdims=True)
    out_bn = (out_bcn - mean) / jnp.sqrt(var + 1e-5)
    return out_bn * bn_gamma.reshape(1, out_c, 1) + bn_beta.reshape(1, out_c, 1)


if __name__ == "__main__":
    B, in_c, N = 2, 4, 16               # bsize, in_c, num_pts
    k_nbrs, kernel_size, out_c = 8, 20, 8
    out_h = out_c // 2
    M = B * N

    key = jax.random.PRNGKey(0)
    keys = jax.random.split(key, 7)
    feature = jax.random.normal(keys[0], (B, in_c, N), jnp.float32)
    neigh_indexs = jax.random.randint(keys[1], (M, k_nbrs), 0, M, jnp.int32)
    permatrix = jax.random.uniform(keys[2], (M, k_nbrs, kernel_size), jnp.float32)
    w1 = jax.random.normal(keys[3], (out_h, in_c * kernel_size), jnp.float32) * 0.1  # nn.Linear
    b1 = jax.random.normal(keys[4], (out_h,), jnp.float32) * 0.1
    w2 = jax.random.normal(keys[5], (out_h, 2 * in_c, 1), jnp.float32) * 0.1         # nn.Conv1d
    b2 = jax.random.normal(keys[6], (out_h,), jnp.float32) * 0.1
    bn_gamma = jnp.ones((out_c,), jnp.float32)                                       # BN defaults
    bn_beta = jnp.zeros((out_c,), jnp.float32)

    out = paiconv_max_forward(feature, neigh_indexs, permatrix, w1, b1, w2, b2,
                              bn_gamma, bn_beta, k=k_nbrs, kernel_size=kernel_size)
    out = jax.block_until_ready(out)

    ref = reference_forward(feature, neigh_indexs, permatrix, w1, b1, w2, b2,
                            bn_gamma, bn_beta, k=k_nbrs, kernel_size=kernel_size)
    np.testing.assert_allclose(np.asarray(out), np.asarray(ref), rtol=1e-2, atol=1e-2)

    print("KERNEL_OK")
</pallas_src>

<mosaic_0001>
module attributes {stable_mosaic.version = 11 : i64} {
  func.func @paiconv_max_kernel(%arg0: i32, %arg1: memref<4x1024xf32, #tpu.memory_space<vmem>>, %arg2: memref<20x1024xf32, #tpu.memory_space<vmem>>, %arg3: memref<16x20xf32, #tpu.memory_space<vmem>>, %arg4: memref<4x4xf32, #tpu.memory_space<vmem>>, %arg5: memref<4x4xf32, #tpu.memory_space<vmem>>, %arg6: memref<8x1xf32, #tpu.memory_space<vmem>>, %arg7: memref<8x128xf32, #tpu.memory_space<vmem>>, %arg8: memref<16x1024xf32, #tpu.memory_space<vmem>>, %arg9: memref<24x1024xf32, #tpu.memory_space<vmem>>, %arg10: memref<20x128xf32, #tpu.memory_space<vmem>>) attributes {dimension_semantics = [#tpu.dimension_semantics<parallel>], iteration_bounds = array<i64: 1>, scalar_prefetch = 0 : i64, scratch_operands = 3 : i64, tpu.core_type = #tpu.core_type<tc>, window_params = [{transform_indices = @transform_0, window_bounds = array<i64: 4, 1024>}, {transform_indices = @transform_1, window_bounds = array<i64: 20, 1024>}, {pipeline_mode = #tpu.pipeline_mode<synchronous>, transform_indices = @transform_2, window_bounds = array<i64: 16, 20>}, {pipeline_mode = #tpu.pipeline_mode<synchronous>, transform_indices = @transform_3, window_bounds = array<i64: 4, 4>}, {pipeline_mode = #tpu.pipeline_mode<synchronous>, transform_indices = @transform_4, window_bounds = array<i64: 4, 4>}, {pipeline_mode = #tpu.pipeline_mode<synchronous>, transform_indices = @transform_5, window_bounds = array<i64: 8, 1>}, {transform_indices = @transform_6, window_bounds = array<i64: 8, 128>}]} {
    %c0 = arith.constant 0 : index
    %c0_0 = arith.constant 0 : index
    %0 = vector.load %arg3[%c0, %c0_0] : memref<16x20xf32, #tpu.memory_space<vmem>>, vector<16x20xf32>
    %c0_1 = arith.constant 0 : index
    %c0_2 = arith.constant 0 : index
    %1 = vector.load %arg2[%c0_1, %c0_2] : memref<20x1024xf32, #tpu.memory_space<vmem>>, vector<20x1024xf32>
    %cst = arith.constant dense<0.000000e+00> : vector<16x1024xf32>
    %2 = tpu.matmul %0, %1, %cst {dimension_numbers = #tpu.dot_dimension_numbers<[1], [0], [0], [1], [0, 0, 1, 1], [], []>} : vector<16x20xf32>, vector<20x1024xf32>, vector<16x1024xf32> -> vector<16x1024xf32>
    %c0_3 = arith.constant 0 : index
    %c0_4 = arith.constant 0 : index
    %3 = vector.load %arg8[%c0_3, %c0_4] : memref<16x1024xf32, #tpu.memory_space<vmem>>, vector<16x1024xf32>
    tpu.vector_store %arg8[%c0_3, %c0_4], %2 {strides = array<i32>} : memref<16x1024xf32, #tpu.memory_space<vmem>>, vector<16x1024xf32>,
    %c0_5 = arith.constant 0 : index
    %c0_6 = arith.constant 0 : index
    %4 = vector.load %arg5[%c0_5, %c0_6] : memref<4x4xf32, #tpu.memory_space<vmem>>, vector<4x4xf32>
    %c0_7 = arith.constant 0 : index
    %c0_8 = arith.constant 0 : index
    %5 = vector.load %arg1[%c0_7, %c0_8] : memref<4x1024xf32, #tpu.memory_space<vmem>>, vector<4x128xf32>
    %cst_9 = arith.constant dense<0.000000e+00> : vector<4x128xf32>
    %6 = tpu.matmul %4, %5, %cst_9 {dimension_numbers = #tpu.dot_dimension_numbers<[1], [0], [0], [1], [0, 0, 1, 1], [], []>} : vector<4x4xf32>, vector<4x128xf32>, vector<4x128xf32> -> vector<4x128xf32>
    %c0_10 = arith.constant 0 : index
    %c0_11 = arith.constant 0 : index
    %7 = vector.load %arg4[%c0_10, %c0_11] : memref<4x4xf32, #tpu.memory_space<vmem>>, vector<4x4xf32>
    %c0_12 = arith.constant 0 : index
    %c0_13 = arith.constant 0 : index
    %8 = vector.load %arg1[%c0_12, %c0_13] : memref<4x1024xf32, #tpu.memory_space<vmem>>, vector<4x1024xf32>
    %cst_14 = arith.constant dense<0.000000e+00> : vector<4x1024xf32>
    %9 = tpu.matmul %7, %8, %cst_14 {dimension_numbers = #tpu.dot_dimension_numbers<[1], [0], [0], [1], [0, 0, 1, 1], [], []>} : vector<4x4xf32>, vector<4x1024xf32>, vector<4x1024xf32> -> vector<4x1024xf32>
    %10 = tpu.concatenate %6, %6, %6, %6, %6, %6, %6, %6 in 1 : vector<4x128xf32>, vector<4x128xf32>, vector<4x128xf32>, vector<4x128xf32>, vector<4x128xf32>, vector<4x128xf32>, vector<4x128xf32>, vector<4x128xf32> -> vector<4x1024xf32>
    %11 = arith.addf %9, %10 : vector<4x1024xf32>
    %c0_15 = arith.constant 0 : index
    %c0_16 = arith.constant 0 : index
    %12 = vector.load %arg9[%c0_15, %c0_16] : memref<24x1024xf32, #tpu.memory_space<vmem>>, vector<4x1024xf32>
    tpu.vector_store %arg9[%c0_15, %c0_16], %11 {strides = array<i32>} : memref<24x1024xf32, #tpu.memory_space<vmem>>, vector<4x1024xf32>,
    %c0_17 = arith.constant 0 : index
    %c0_18 = arith.constant 0 : index
    %13 = vector.load %arg2[%c0_17, %c0_18] : memref<20x1024xf32, #tpu.memory_space<vmem>>, vector<20x128xf32>
    %c0_19 = arith.constant 0 : index
    %c128 = arith.constant 128 : index
    %14 = vector.load %arg2[%c0_19, %c128] : memref<20x1024xf32, #tpu.memory_space<vmem>>, vector<20x128xf32>
    %15 = arith.addf %13, %14 : vector<20x128xf32>
    %c0_20 = arith.constant 0 : index
    %c256 = arith.constant 256 : index
    %16 = vector.load %arg2[%c0_20, %c256] : memref<20x1024xf32, #tpu.memory_space<vmem>>, vector<20x128xf32>
    %17 = arith.addf %15, %16 : vector<20x128xf32>
    %c0_21 = arith.constant 0 : index
    %c384 = arith.constant 384 : index
    %18 = vector.load %arg2[%c0_21, %c384] : memref<20x1024xf32, #tpu.memory_space<vmem>>, vector<20x128xf32>
    %19 = arith.addf %17, %18 : vector<20x128xf32>
    %c0_22 = arith.constant 0 : index
    %c512 = arith.constant 512 : index
    %20 = vector.load %arg2[%c0_22, %c512] : memref<20x1024xf32, #tpu.memory_space<vmem>>, vector<20x128xf32>
    %21 = arith.addf %19, %20 : vector<20x128xf32>
    %c0_23 = arith.constant 0 : index
    %c640 = arith.constant 640 : index
    %22 = vector.load %arg2[%c0_23, %c640] : memref<20x1024xf32, #tpu.memory_space<vmem>>, vector<20x128xf32>
    %23 = arith.addf %21, %22 : vector<20x128xf32>
    %c0_24 = arith.constant 0 : index
    %c768 = arith.constant 768 : index
    %24 = vector.load %arg2[%c0_24, %c768] : memref<20x1024xf32, #tpu.memory_space<vmem>>, vector<20x128xf32>
    %25 = arith.addf %23, %24 : vector<20x128xf32>
    %c0_25 = arith.constant 0 : index
    %c896 = arith.constant 896 : index
    %26 = vector.load %arg2[%c0_25, %c896] : memref<20x1024xf32, #tpu.memory_space<vmem>>, vector<20x128xf32>
    %27 = arith.addf %25, %26 : vector<20x128xf32>
    %cst_26 = arith.constant 9.99999997E-7 : f32
    %28 = vector.broadcast %cst_26 : f32 to vector<20x128xf32>
    %29 = arith.addf %27, %28 : vector<20x128xf32>
    %30 = tpu.reciprocal %29 {approx = true} : vector<20x128xf32> -> vector<20x128xf32>
    %c0_27 = arith.constant 0 : index
    %c0_28 = arith.constant 0 : index
    %31 = vector.load %arg10[%c0_27, %c0_28] : memref<20x128xf32, #tpu.memory_space<vmem>>, vector<20x128xf32>
    tpu.vector_store %arg10[%c0_27, %c0_28], %30 {strides = array<i32>} : memref<20x128xf32, #tpu.memory_space<vmem>>, vector<20x128xf32>,
    %c0_29 = arith.constant 0 : index
    %c0_30 = arith.constant 0 : index
    %32 = vector.load %arg6[%c0_29, %c0_30] : memref<8x1xf32, #tpu.memory_space<vmem>>, vector<8x1xf32>
    %cst_31 = arith.constant 0.000000e+00 : f32
    %33 = vector.broadcast %cst_31 : f32 to vector<4x128xf32>
    %c0_32 = arith.constant 0 : index
    %c0_33 = arith.constant 0 : index
    %34 = vector.load %arg8[%c0_32, %c0_33] : memref<16x1024xf32, #tpu.memory_space<vmem>>, vector<4x128xf32>
    %c0_34 = arith.constant 0 : index
    %c0_35 = arith.constant 0 : index
    %35 = vector.load %arg1[%c0_34, %c0_35] : memref<4x1024xf32, #tpu.memory_space<vmem>>, vector<1x128xf32>
    %36 = vector.broadcast %35 : vector<1x128xf32> to vector<4x128xf32>
    %37 = arith.mulf %34, %36 : vector<4x128xf32>
    %38 = arith.addf %33, %37 : vector<4x128xf32>
    %c4 = arith.constant 4 : index
    %c0_36 = arith.constant 0 : index
    %39 = vector.load %arg8[%c4, %c0_36] : memref<16x1024xf32, #tpu.memory_space<vmem>>, vector<4x128xf32>
    %c1 = arith.constant 1 : index
    %c0_37 = arith.constant 0 : index
    %40 = vector.load %arg1[%c1, %c0_37] : memref<4x1024xf32, #tpu.memory_space<vmem>>, vector<1x128xf32>
    %41 = vector.broadcast %40 : vector<1x128xf32> to vector<4x128xf32>
    %42 = arith.mulf %39, %41 : vector<4x128xf32>
    %43 = arith.addf %38, %42 : vector<4x128xf32>
    %c8 = arith.constant 8 : index
    %c0_38 = arith.constant 0 : index
    %44 = vector.load %arg8[%c8, %c0_38] : memref<16x1024xf32, #tpu.memory_space<vmem>>, vector<4x128xf32>
    %c2 = arith.constant 2 : index
    %c0_39 = arith.constant 0 : index
    %45 = vector.load %arg1[%c2, %c0_39] : memref<4x1024xf32, #tpu.memory_space<vmem>>, vector<1x128xf32>
    %46 = vector.broadcast %45 : vector<1x128xf32> to vector<4x128xf32>
    %47 = arith.mulf %44, %46 : vector<4x128xf32>
    %48 = arith.addf %43, %47 : vector<4x128xf32>
    %c12 = arith.constant 12 : index
    %c0_40 = arith.constant 0 : index
    %49 = vector.load %arg8[%c12, %c0_40] : memref<16x1024xf32, #tpu.memory_space<vmem>>, vector<4x128xf32>
    %c3 = arith.constant 3 : index
    %c0_41 = arith.constant 0 : index
    %50 = vector.load %arg1[%c3, %c0_41] : memref<4x1024xf32, #tpu.memory_space<vmem>>, vector<1x128xf32>
    %51 = vector.broadcast %50 : vector<1x128xf32> to vector<4x128xf32>
    %52 = arith.mulf %49, %51 : vector<4x128xf32>
    %53 = arith.addf %48, %52 : vector<4x128xf32>
    %c0_42 = arith.constant 0 : index
    %c128_43 = arith.constant 128 : index
    %54 = vector.load %arg8[%c0_42, %c128_43] : memref<16x1024xf32, #tpu.memory_space<vmem>>, vector<4x128xf32>
    %c0_44 = arith.constant 0 : index
    %c128_45 = arith.constant 128 : index
    %55 = vector.load %arg1[%c0_44, %c128_45] : memref<4x1024xf32, #tpu.memory_space<vmem>>, vector<1x128xf32>
    %56 = vector.broadcast %55 : vector<1x128xf32> to vector<4x128xf32>
    %57 = arith.mulf %54, %56 : vector<4x128xf32>
    %58 = arith.addf %53, %57 : vector<4x128xf32>
    %c4_46 = arith.constant 4 : index
    %c128_47 = arith.constant 128 : index
    %59 = vector.load %arg8[%c4_46, %c128_47] : memref<16x1024xf32, #tpu.memory_space<vmem>>, vector<4x128xf32>
    %c1_48 = arith.constant 1 : index
    %c128_49 = arith.constant 128 : index
    %60 = vector.load %arg1[%c1_48, %c128_49] : memref<4x1024xf32, #tpu.memory_space<vmem>>, vector<1x128xf32>
    %61 = vector.broadcast %60 : vector<1x128xf32> to vector<4x128xf32>
    %62 = arith.mulf %59, %61 : vector<4x128xf32>
    %63 = arith.addf %58, %62 : vector<4x128xf32>
    %c8_50 = arith.constant 8 : index
    %c128_51 = arith.constant 128 : index
    %64 = vector.load %arg8[%c8_50, %c128_51] : memref<16x1024xf32, #tpu.memory_space<vmem>>, vector<4x128xf32>
    %c2_52 = arith.constant 2 : index
    %c128_53 = arith.constant 128 : index
    %65 = vector.load %arg1[%c2_52, %c128_53] : memref<4x1024xf32, #tpu.memory_space<vmem>>, vector<1x128xf32>
    %66 = vector.broadcast %65 : vector<1x128xf32> to vector<4x128xf32>
    %67 = arith.mulf %64, %66 : vector<4x128xf32>
    %68 = arith.addf %63, %67 : vector<4x128xf32>
    %c12_54 = arith.constant 12 : index
    %c128_55 = arith.constant 128 : index
    %69 = vector.load %arg8[%c12_54, %c128_55] : memref<16x1024xf32, #tpu.memory_space<vmem>>, vector<4x128xf32>
    %c3_56 = arith.constant 3 : index
    %c128_57 = arith.constant 128 : index
    %70 = vector.load %arg1[%c3_56, %c128_57] : memref<4x1024xf32, #tpu.memory_space<vmem>>, vector<1x128xf32>
    %71 = vector.broadcast %70 : vector<1x128xf32> to vector<4x128xf32>
    %72 = arith.mulf %69, %71 : vector<4x128xf32>
    %73 = arith.addf %68, %72 : vector<4x128xf32>
    %c0_58 = arith.constant 0 : index
    %c256_59 = arith.constant 256 : index
    %74 = vector.load %arg8[%c0_58, %c256_59] : memref<16x1024xf32, #tpu.memory_space<vmem>>, vector<4x128xf32>
    %c0_60 = arith.constant 0 : index
    %c256_61 = arith.constant 256 : index
    %75 = vector.load %arg1[%c0_60, %c256_61] : memref<4x1024xf32, #tpu.memory_space<vmem>>, vector<1x128xf32>
    %76 = vector.broadcast %75 : vector<1x128xf32> to vector<4x128xf32>
    %77 = arith.mulf %74, %76 : vector<4x128xf32>
    %78 = arith.addf %73, %77 : vector<4x128xf32>
    %c4_62 = arith.constant 4 : index
    %c256_63 = arith.constant 256 : index
    %79 = vector.load %arg8[%c4_62, %c256_63] : memref<16x1024xf32, #tpu.memory_space<vmem>>, vector<4x128xf32>
    %c1_64 = arith.constant 1 : index
    %c256_65 = arith.constant 256 : index
    %80 = vector.load %arg1[%c1_64, %c256_65] : memref<4x1024xf32, #tpu.memory_space<vmem>>, vector<1x128xf32>
    %81 = vector.broadcast %80 : vector<1x128xf32> to vector<4x128xf32>
    %82 = arith.mulf %79, %81 : vector<4x128xf32>
    %83 = arith.addf %78, %82 : vector<4x128xf32>
    %c8_66 = arith.constant 8 : index
    %c256_67 = arith.constant 256 : index
    %84 = vector.load %arg8[%c8_66, %c256_67] : memref<16x1024xf32, #tpu.memory_space<vmem>>, vector<4x128xf32>
    %c2_68 = arith.constant 2 : index
    %c256_69 = arith.constant 256 : index
    %85 = vector.load %arg1[%c2_68, %c256_69] : memref<4x1024xf32, #tpu.memory_space<vmem>>, vector<1x128xf32>
    %86 = vector.broadcast %85 : vector<1x128xf32> to vector<4x128xf32>
    %87 = arith.mulf %84, %86 : vector<4x128xf32>
    %88 = arith.addf %83, %87 : vector<4x128xf32>
    %c12_70 = arith.constant 12 : index
    %c256_71 = arith.constant 256 : index
    %89 = vector.load %arg8[%c12_70, %c256_71] : memref<16x1024xf32, #tpu.memory_space<vmem>>, vector<4x128xf32>
    %c3_72 = arith.constant 3 : index
    %c256_73 = arith.constant 256 : index
    %90 = vector.load %arg1[%c3_72, %c256_73] : memref<4x1024xf32, #tpu.memory_space<vmem>>, vector<1x128xf32>
    %91 = vector.broadcast %90 : vector<1x128xf32> to vector<4x128xf32>
    %92 = arith.mulf %89, %91 : vector<4x128xf32>
    %93 = arith.addf %88, %92 : vector<4x128xf32>
    %c0_74 = arith.constant 0 : index
    %c384_75 = arith.constant 384 : index
    %94 = vector.load %arg8[%c0_74, %c384_75] : memref<16x1024xf32, #tpu.memory_space<vmem>>, vector<4x128xf32>
    %c0_76 = arith.constant 0 : index
    %c384_77 = arith.constant 384 : index
    %95 = vector.load %arg1[%c0_76, %c384_77] : memref<4x1024xf32, #tpu.memory_space<vmem>>, vector<1x128xf32>
    %96 = vector.broadcast %95 : vector<1x128xf32> to vector<4x128xf32>
    %97 = arith.mulf %94, %96 : vector<4x128xf32>
    %98 = arith.addf %93, %97 : vector<4x128xf32>
    %c4_78 = arith.constant 4 : index
    %c384_79 = arith.constant 384 : index
    %99 = vector.load %arg8[%c4_78, %c384_79] : memref<16x1024xf32, #tpu.memory_space<vmem>>, vector<4x128xf32>
    %c1_80 = arith.constant 1 : index
    %c384_81 = arith.constant 384 : index
    %100 = vector.load %arg1[%c1_80, %c384_81] : memref<4x1024xf32, #tpu.memory_space<vmem>>, vector<1x128xf32>
    %101 = vector.broadcast %100 : vector<1x128xf32> to vector<4x128xf32>
    %102 = arith.mulf %99, %101 : vector<4x128xf32>
    %103 = arith.addf %98, %102 : vector<4x128xf32>
    %c8_82 = arith.constant 8 : index
    %c384_83 = arith.constant 384 : index
    %104 = vector.load %arg8[%c8_82, %c384_83] : memref<16x1024xf32, #tpu.memory_space<vmem>>, vector<4x128xf32>
    %c2_84 = arith.constant 2 : index
    %c384_85 = arith.constant 384 : index
    %105 = vector.load %arg1[%c2_84, %c384_85] : memref<4x1024xf32, #tpu.memory_space<vmem>>, vector<1x128xf32>
    %106 = vector.broadcast %105 : vector<1x128xf32> to vector<4x128xf32>
    %107 = arith.mulf %104, %106 : vector<4x128xf32>
    %108 = arith.addf %103, %107 : vector<4x128xf32>
    %c12_86 = arith.constant 12 : index
    %c384_87 = arith.constant 384 : index
    %109 = vector.load %arg8[%c12_86, %c384_87] : memref<16x1024xf32, #tpu.memory_space<vmem>>, vector<4x128xf32>
    %c3_88 = arith.constant 3 : index
    %c384_89 = arith.constant 384 : index
    %110 = vector.load %arg1[%c3_88, %c384_89] : memref<4x1024xf32, #tpu.memory_space<vmem>>, vector<1x128xf32>
    %111 = vector.broadcast %110 : vector<1x128xf32> to vector<4x128xf32>
    %112 = arith.mulf %109, %111 : vector<4x128xf32>
    %113 = arith.addf %108, %112 : vector<4x128xf32>
    %c0_90 = arith.constant 0 : index
    %c512_91 = arith.constant 512 : index
    %114 = vector.load %arg8[%c0_90, %c512_91] : memref<16x1024xf32, #tpu.memory_space<vmem>>, vector<4x128xf32>
    %c0_92 = arith.constant 0 : index
    %c512_93 = arith.constant 512 : index
    %115 = vector.load %arg1[%c0_92, %c512_93] : memref<4x1024xf32, #tpu.memory_space<vmem>>, vector<1x128xf32>
    %116 = vector.broadcast %115 : vector<1x128xf32> to vector<4x128xf32>
    %117 = arith.mulf %114, %116 : vector<4x128xf32>
    %118 = arith.addf %113, %117 : vector<4x128xf32>
    %c4_94 = arith.constant 4 : index
    %c512_95 = arith.constant 512 : index
    %119 = vector.load %arg8[%c4_94, %c512_95] : memref<16x1024xf32, #tpu.memory_space<vmem>>, vector<4x128xf32>
    %c1_96 = arith.constant 1 : index
    %c512_97 = arith.constant 512 : index
    %120 = vector.load %arg1[%c1_96, %c512_97] : memref<4x1024xf32, #tpu.memory_space<vmem>>, vector<1x128xf32>
    %121 = vector.broadcast %120 : vector<1x128xf32> to vector<4x128xf32>
    %122 = arith.mulf %119, %121 : vector<4x128xf32>
    %123 = arith.addf %118, %122 : vector<4x128xf32>
    %c8_98 = arith.constant 8 : index
    %c512_99 = arith.constant 512 : index
    %124 = vector.load %arg8[%c8_98, %c512_99] : memref<16x1024xf32, #tpu.memory_space<vmem>>, vector<4x128xf32>
    %c2_100 = arith.constant 2 : index
    %c512_101 = arith.constant 512 : index
    %125 = vector.load %arg1[%c2_100, %c512_101] : memref<4x1024xf32, #tpu.memory_space<vmem>>, vector<1x128xf32>
    %126 = vector.broadcast %125 : vector<1x128xf32> to vector<4x128xf32>
    %127 = arith.mulf %124, %126 : vector<4x128xf32>
    %128 = arith.addf %123, %127 : vector<4x128xf32>
    %c12_102 = arith.constant 12 : index
    %c512_103 = arith.constant 512 : index
    %129 = vector.load %arg8[%c12_102, %c512_103] : memref<16x1024xf32, #tpu.memory_space<vmem>>, vector<4x128xf32>
    %c3_104 = arith.constant 3 : index
    %c512_105 = arith.constant 512 : index
    %130 = vector.load %arg1[%c3_104, %c512_105] : memref<4x1024xf32, #tpu.memory_space<vmem>>, vector<1x128xf32>
    %131 = vector.broadcast %130 : vector<1x128xf32> to vector<4x128xf32>
    %132 = arith.mulf %129, %131 : vector<4x128xf32>
    %133 = arith.addf %128, %132 : vector<4x128xf32>
    %c0_106 = arith.constant 0 : index
    %c640_107 = arith.constant 640 : index
    %134 = vector.load %arg8[%c0_106, %c640_107] : memref<16x1024xf32, #tpu.memory_space<vmem>>, vector<4x128xf32>
    %c0_108 = arith.constant 0 : index
    %c640_109 = arith.constant 640 : index
    %135 = vector.load %arg1[%c0_108, %c640_109] : memref<4x1024xf32, #tpu.memory_space<vmem>>, vector<1x128xf32>
    %136 = vector.broadcast %135 : vector<1x128xf32> to vector<4x128xf32>
    %137 = arith.mulf %134, %136 : vector<4x128xf32>
    %138 = arith.addf %133, %137 : vector<4x128xf32>
    %c4_110 = arith.constant 4 : index
    %c640_111 = arith.constant 640 : index
    %139 = vector.load %arg8[%c4_110, %c640_111] : memref<16x1024xf32, #tpu.memory_space<vmem>>, vector<4x128xf32>
    %c1_112 = arith.constant 1 : index
    %c640_113 = arith.constant 640 : index
    %140 = vector.load %arg1[%c1_112, %c640_113] : memref<4x1024xf32, #tpu.memory_space<vmem>>, vector<1x128xf32>
    %141 = vector.broadcast %140 : vector<1x128xf32> to vector<4x128xf32>
    %142 = arith.mulf %139, %141 : vector<4x128xf32>
    %143 = arith.addf %138, %142 : vector<4x128xf32>
    %c8_114 = arith.constant 8 : index
    %c640_115 = arith.constant 640 : index
    %144 = vector.load %arg8[%c8_114, %c640_115] : memref<16x1024xf32, #tpu.memory_space<vmem>>, vector<4x128xf32>
    %c2_116 = arith.constant 2 : index
    %c640_117 = arith.constant 640 : index
    %145 = vector.load %arg1[%c2_116, %c640_117] : memref<4x1024xf32, #tpu.memory_space<vmem>>, vector<1x128xf32>
    %146 = vector.broadcast %145 : vector<1x128xf32> to vector<4x128xf32>
    %147 = arith.mulf %144, %146 : vector<4x128xf32>
    %148 = arith.addf %143, %147 : vector<4x128xf32>
    %c12_118 = arith.constant 12 : index
    %c640_119 = arith.constant 640 : index
    %149 = vector.load %arg8[%c12_118, %c640_119] : memref<16x1024xf32, #tpu.memory_space<vmem>>, vector<4x128xf32>
    %c3_120 = arith.constant 3 : index
    %c640_121 = arith.constant 640 : index
    %150 = vector.load %arg1[%c3_120, %c640_121] : memref<4x1024xf32, #tpu.memory_space<vmem>>, vector<1x128xf32>
    %151 = vector.broadcast %150 : vector<1x128xf32> to vector<4x128xf32>
    %152 = arith.mulf %149, %151 : vector<4x128xf32>
    %153 = arith.addf %148, %152 : vector<4x128xf32>
    %c0_122 = arith.constant 0 : index
    %c768_123 = arith.constant 768 : index
    %154 = vector.load %arg8[%c0_122, %c768_123] : memref<16x1024xf32, #tpu.memory_space<vmem>>, vector<4x128xf32>
    %c0_124 = arith.constant 0 : index
    %c768_125 = arith.constant 768 : index
    %155 = vector.load %arg1[%c0_124, %c768_125] : memref<4x1024xf32, #tpu.memory_space<vmem>>, vector<1x128xf32>
    %156 = vector.broadcast %155 : vector<1x128xf32> to vector<4x128xf32>
    %157 = arith.mulf %154, %156 : vector<4x128xf32>
    %158 = arith.addf %153, %157 : vector<4x128xf32>
    %c4_126 = arith.constant 4 : index
    %c768_127 = arith.constant 768 : index
    %159 = vector.load %arg8[%c4_126, %c768_127] : memref<16x1024xf32, #tpu.memory_space<vmem>>, vector<4x128xf32>
    %c1_128 = arith.constant 1 : index
    %c768_129 = arith.constant 768 : index
    %160 = vector.load %arg1[%c1_128, %c768_129] : memref<4x1024xf32, #tpu.memory_space<vmem>>, vector<1x128xf32>
    %161 = vector.broadcast %160 : vector<1x128xf32> to vector<4x128xf32>
    %162 = arith.mulf %159, %161 : vector<4x128xf32>
    %163 = arith.addf %158, %162 : vector<4x128xf32>
    %c8_130 = arith.constant 8 : index
    %c768_131 = arith.constant 768 : index
    %164 = vector.load %arg8[%c8_130, %c768_131] : memref<16x1024xf32, #tpu.memory_space<vmem>>, vector<4x128xf32>
    %c2_132 = arith.constant 2 : index
    %c768_133 = arith.constant 768 : index
    %165 = vector.load %arg1[%c2_132, %c768_133] : memref<4x1024xf32, #tpu.memory_space<vmem>>, vector<1x128xf32>
    %166 = vector.broadcast %165 : vector<1x128xf32> to vector<4x128xf32>
    %167 = arith.mulf %164, %166 : vector<4x128xf32>
    %168 = arith.addf %163, %167 : vector<4x128xf32>
    %c12_134 = arith.constant 12 : index
    %c768_135 = arith.constant 768 : index
    %169 = vector.load %arg8[%c12_134, %c768_135] : memref<16x1024xf32, #tpu.memory_space<vmem>>, vector<4x128xf32>
    %c3_136 = arith.constant 3 : index
    %c768_137 = arith.constant 768 : index
    %170 = vector.load %arg1[%c3_136, %c768_137] : memref<4x1024xf32, #tpu.memory_space<vmem>>, vector<1x128xf32>
    %171 = vector.broadcast %170 : vector<1x128xf32> to vector<4x128xf32>
    %172 = arith.mulf %169, %171 : vector<4x128xf32>
    %173 = arith.addf %168, %172 : vector<4x128xf32>
    %c0_138 = arith.constant 0 : index
    %c896_139 = arith.constant 896 : index
    %174 = vector.load %arg8[%c0_138, %c896_139] : memref<16x1024xf32, #tpu.memory_space<vmem>>, vector<4x128xf32>
    %c0_140 = arith.constant 0 : index
    %c896_141 = arith.constant 896 : index
    %175 = vector.load %arg1[%c0_140, %c896_141] : memref<4x1024xf32, #tpu.memory_space<vmem>>, vector<1x128xf32>
    %176 = vector.broadcast %175 : vector<1x128xf32> to vector<4x128xf32>
    %177 = arith.mulf %174, %176 : vector<4x128xf32>
    %178 = arith.addf %173, %177 : vector<4x128xf32>
    %c4_142 = arith.constant 4 : index
    %c896_143 = arith.constant 896 : index
    %179 = vector.load %arg8[%c4_142, %c896_143] : memref<16x1024xf32, #tpu.memory_space<vmem>>, vector<4x128xf32>
    %c1_144 = arith.constant 1 : index
    %c896_145 = arith.constant 896 : index
    %180 = vector.load %arg1[%c1_144, %c896_145] : memref<4x1024xf32, #tpu.memory_space<vmem>>, vector<1x128xf32>
    %181 = vector.broadcast %180 : vector<1x128xf32> to vector<4x128xf32>
    %182 = arith.mulf %179, %181 : vector<4x128xf32>
    %183 = arith.addf %178, %182 : vector<4x128xf32>
    %c8_146 = arith.constant 8 : index
    %c896_147 = arith.constant 896 : index
    %184 = vector.load %arg8[%c8_146, %c896_147] : memref<16x1024xf32, #tpu.memory_space<vmem>>, vector<4x128xf32>
    %c2_148 = arith.constant 2 : index
    %c896_149 = arith.constant 896 : index
    %185 = vector.load %arg1[%c2_148, %c896_149] : memref<4x1024xf32, #tpu.memory_space<vmem>>, vector<1x128xf32>
    %186 = vector.broadcast %185 : vector<1x128xf32> to vector<4x128xf32>
    %187 = arith.mulf %184, %186 : vector<4x128xf32>
    %188 = arith.addf %183, %187 : vector<4x128xf32>
    %c12_150 = arith.constant 12 : index
    %c896_151 = arith.constant 896 : index
    %189 = vector.load %arg8[%c12_150, %c896_151] : memref<16x1024xf32, #tpu.memory_space<vmem>>, vector<4x128xf32>
    %c3_152 = arith.constant 3 : index
    %c896_153 = arith.constant 896 : index
    %190 = vector.load %arg1[%c3_152, %c896_153] : memref<4x1024xf32, #tpu.memory_space<vmem>>, vector<1x128xf32>
    %191 = vector.broadcast %190 : vector<1x128xf32> to vector<4x128xf32>
    %192 = arith.mulf %189, %191 : vector<4x128xf32>
    %193 = arith.addf %188, %192 : vector<4x128xf32>
    %194 = vector.extract_strided_slice %32 {offsets = [0, 0], sizes = [4, 1], strides = [1, 1]} : vector<8x1xf32> to vector<4x1xf32>
    %195 = vector.broadcast %194 : vector<4x1xf32> to vector<4x128xf32>
    %196 = arith.addf %193, %195 : vector<4x128xf32>
    %c0_154 = arith.constant 0 : index
    %c0_155 = arith.constant 0 : index
    %197 = vector.load %arg7[%c0_154, %c0_155] : memref<8x128xf32, #tpu.memory_space<vmem>>, vector<4x128xf32>
    tpu.vector_store %arg7[%c0_154, %c0_155], %196 {strides = array<i32>} : memref<8x128xf32, #tpu.memory_space<vmem>>, vector<4x128xf32>,
    %cst_156 = arith.constant 0.000000e+00 : f32
    %198 = vector.broadcast %cst_156 : f32 to vector<20x128xf32>
    %c0_157 = arith.constant 0 : index
    %c0_158 = arith.constant 0 : index
    %199 = tpu.strided_load %arg9[%c0_157, %c0_158] {strides = array<i32: 0, 1>} : memref<24x1024xf32, #tpu.memory_space<vmem>>, vector<20x128xf32>
    %c0_159 = arith.constant 0 : index
    %c0_160 = arith.constant 0 : index
    %200 = vector.load %arg2[%c0_159, %c0_160] : memref<20x1024xf32, #tpu.memory_space<vmem>>, vector<20x128xf32>
    %201 = arith.mulf %200, %199 : vector<20x128xf32>
    %202 = arith.addf %198, %201 : vector<20x128xf32>
    %c0_161 = arith.constant 0 : index
    %c128_162 = arith.constant 128 : index
    %203 = tpu.strided_load %arg9[%c0_161, %c128_162] {strides = array<i32: 0, 1>} : memref<24x1024xf32, #tpu.memory_space<vmem>>, vector<20x128xf32>
    %c0_163 = arith.constant 0 : index
    %c128_164 = arith.constant 128 : index
    %204 = vector.load %arg2[%c0_163, %c128_164] : memref<20x1024xf32, #tpu.memory_space<vmem>>, vector<20x128xf32>
    %205 = arith.mulf %204, %203 : vector<20x128xf32>
    %206 = arith.addf %202, %205 : vector<20x128xf32>
    %c0_165 = arith.constant 0 : index
    %c256_166 = arith.constant 256 : index
    %207 = tpu.strided_load %arg9[%c0_165, %c256_166] {strides = array<i32: 0, 1>} : memref<24x1024xf32, #tpu.memory_space<vmem>>, vector<20x128xf32>
    %c0_167 = arith.constant 0 : index
    %c256_168 = arith.constant 256 : index
    %208 = vector.load %arg2[%c0_167, %c256_168] : memref<20x1024xf32, #tpu.memory_space<vmem>>, vector<20x128xf32>
    %209 = arith.mulf %208, %207 : vector<20x128xf32>
    %210 = arith.addf %206, %209 : vector<20x128xf32>
    %c0_169 = arith.constant 0 : index
    %c384_170 = arith.constant 384 : index
    %211 = tpu.strided_load %arg9[%c0_169, %c384_170] {strides = array<i32: 0, 1>} : memref<24x1024xf32, #tpu.memory_space<vmem>>, vector<20x128xf32>
    %c0_171 = arith.constant 0 : index
    %c384_172 = arith.constant 384 : index
    %212 = vector.load %arg2[%c0_171, %c384_172] : memref<20x1024xf32, #tpu.memory_space<vmem>>, vector<20x128xf32>
    %213 = arith.mulf %212, %211 : vector<20x128xf32>
    %214 = arith.addf %210, %213 : vector<20x128xf32>
    %c0_173 = arith.constant 0 : index
    %c512_174 = arith.constant 512 : index
    %215 = tpu.strided_load %arg9[%c0_173, %c512_174] {strides = array<i32: 0, 1>} : memref<24x1024xf32, #tpu.memory_space<vmem>>, vector<20x128xf32>
    %c0_175 = arith.constant 0 : index
    %c512_176 = arith.constant 512 : index
    %216 = vector.load %arg2[%c0_175, %c512_176] : memref<20x1024xf32, #tpu.memory_space<vmem>>, vector<20x128xf32>
    %217 = arith.mulf %216, %215 : vector<20x128xf32>
    %218 = arith.addf %214, %217 : vector<20x128xf32>
    %c0_177 = arith.constant 0 : index
    %c640_178 = arith.constant 640 : index
    %219 = tpu.strided_load %arg9[%c0_177, %c640_178] {strides = array<i32: 0, 1>} : memref<24x1024xf32, #tpu.memory_space<vmem>>, vector<20x128xf32>
    %c0_179 = arith.constant 0 : index
    %c640_180 = arith.constant 640 : index
    %220 = vector.load %arg2[%c0_179, %c640_180] : memref<20x1024xf32, #tpu.memory_space<vmem>>, vector<20x128xf32>
    %221 = arith.mulf %220, %219 : vector<20x128xf32>
    %222 = arith.addf %218, %221 : vector<20x128xf32>
    %c0_181 = arith.constant 0 : index
    %c768_182 = arith.constant 768 : index
    %223 = tpu.strided_load %arg9[%c0_181, %c768_182] {strides = array<i32: 0, 1>} : memref<24x1024xf32, #tpu.memory_space<vmem>>, vector<20x128xf32>
    %c0_183 = arith.constant 0 : index
    %c768_184 = arith.constant 768 : index
    %224 = vector.load %arg2[%c0_183, %c768_184] : memref<20x1024xf32, #tpu.memory_space<vmem>>, vector<20x128xf32>
    %225 = arith.mulf %224, %223 : vector<20x128xf32>
    %226 = arith.addf %222, %225 : vector<20x128xf32>
    %c0_185 = arith.constant 0 : index
    %c896_186 = arith.constant 896 : index
    %227 = tpu.strided_load %arg9[%c0_185, %c896_186] {strides = array<i32: 0, 1>} : memref<24x1024xf32, #tpu.memory_space<vmem>>, vector<20x128xf32>
    %c0_187 = arith.constant 0 : index
    %c896_188 = arith.constant 896 : index
    %228 = vector.load %arg2[%c0_187, %c896_188] : memref<20x1024xf32, #tpu.memory_space<vmem>>, vector<20x128xf32>
    %229 = arith.mulf %228, %227 : vector<20x128xf32>
    %230 = arith.addf %226, %229 : vector<20x128xf32>
    %c0_189 = arith.constant 0 : index
    %c0_190 = arith.constant 0 : index
    %231 = vector.load %arg10[%c0_189, %c0_190] : memref<20x128xf32, #tpu.memory_space<vmem>>, vector<20x128xf32>
    %232 = arith.mulf %230, %231 : vector<20x128xf32>
    %cst_191 = arith.constant dense<0xFF800000> : vector<128xf32>
    %233 = vector.multi_reduction <maximumf>, %232, %cst_191 [0] : vector<20x128xf32> to vector<128xf32>
    %234 = vector.shape_cast %233 : vector<128xf32> to vector<1x128xf32>
    %235 = vector.extract_strided_slice %32 {offsets = [4, 0], sizes = [1, 1], strides = [1, 1]} : vector<8x1xf32> to vector<1x1xf32>
    %236 = vector.broadcast %235 : vector<1x1xf32> to vector<1x128xf32>
    %237 = arith.addf %234, %236 : vector<1x128xf32>
    %c4_192 = arith.constant 4 : index
    %c0_193 = arith.constant 0 : index
    %238 = vector.load %arg7[%c4_192, %c0_193] : memref<8x128xf32, #tpu.memory_space<vmem>>, vector<1x128xf32>
    tpu.vector_store %arg7[%c4_192, %c0_193], %237 {strides = array<i32>} : memref<8x128xf32, #tpu.memory_space<vmem>>, vector<1x128xf32>,
    %cst_194 = arith.constant 0.000000e+00 : f32
    %239 = vector.broadcast %cst_194 : f32 to vector<20x128xf32>
    %c1_195 = arith.constant 1 : index
    %c0_196 = arith.constant 0 : index
    %240 = tpu.strided_load %arg9[%c1_195, %c0_196] {strides = array<i32: 0, 1>} : memref<24x1024xf32, #tpu.memory_space<vmem>>, vector<20x128xf32>
    %c0_197 = arith.constant 0 : index
    %c0_198 = arith.constant 0 : index
    %241 = vector.load %arg2[%c0_197, %c0_198] : memref<20x1024xf32, #tpu.memory_space<vmem>>, vector<20x128xf32>
    %242 = arith.mulf %241, %240 : vector<20x128xf32>
    %243 = arith.addf %239, %242 : vector<20x128xf32>
    %c1_199 = arith.constant 1 : index
    %c128_200 = arith.constant 128 : index
    %244 = tpu.strided_load %arg9[%c1_199, %c128_200] {strides = array<i32: 0, 1>} : memref<24x1024xf32, #tpu.memory_space<vmem>>, vector<20x128xf32>
    %c0_201 = arith.constant 0 : index
    %c128_202 = arith.constant 128 : index
    %245 = vector.load %arg2[%c0_201, %c128_202] : memref<20x1024xf32, #tpu.memory_space<vmem>>, vector<20x128xf32>
    %246 = arith.mulf %245, %244 : vector<20x128xf32>
    %247 = arith.addf %243, %246 : vector<20x128xf32>
    %c1_203 = arith.constant 1 : index
    %c256_204 = arith.constant 256 : index
    %248 = tpu.strided_load %arg9[%c1_203, %c256_204] {strides = array<i32: 0, 1>} : memref<24x1024xf32, #tpu.memory_space<vmem>>, vector<20x128xf32>
    %c0_205 = arith.constant 0 : index
    %c256_206 = arith.constant 256 : index
    %249 = vector.load %arg2[%c0_205, %c256_206] : memref<20x1024xf32, #tpu.memory_space<vmem>>, vector<20x128xf32>
    %250 = arith.mulf %249, %248 : vector<20x128xf32>
    %251 = arith.addf %247, %250 : vector<20x128xf32>
    %c1_207 = arith.constant 1 : index
    %c384_208 = arith.constant 384 : index
    %252 = tpu.strided_load %arg9[%c1_207, %c384_208] {strides = array<i32: 0, 1>} : memref<24x1024xf32, #tpu.memory_space<vmem>>, vector<20x128xf32>
    %c0_209 = arith.constant 0 : index
    %c384_210 = arith.constant 384 : index
    %253 = vector.load %arg2[%c0_209, %c384_210] : memref<20x1024xf32, #tpu.memory_space<vmem>>, vector<20x128xf32>
    %254 = arith.mulf %253, %252 : vector<20x128xf32>
    %255 = arith.addf %251, %254 : vector<20x128xf32>
    %c1_211 = arith.constant 1 : index
    %c512_212 = arith.constant 512 : index
    %256 = tpu.strided_load %arg9[%c1_211, %c512_212] {strides = array<i32: 0, 1>} : memref<24x1024xf32, #tpu.memory_space<vmem>>, vector<20x128xf32>
    %c0_213 = arith.constant 0 : index
    %c512_214 = arith.constant 512 : index
    %257 = vector.load %arg2[%c0_213, %c512_214] : memref<20x1024xf32, #tpu.memory_space<vmem>>, vector<20x128xf32>
    %258 = arith.mulf %257, %256 : vector<20x128xf32>
    %259 = arith.addf %255, %258 : vector<20x128xf32>
    %c1_215 = arith.constant 1 : index
    %c640_216 = arith.constant 640 : index
    %260 = tpu.strided_load %arg9[%c1_215, %c640_216] {strides = array<i32: 0, 1>} : memref<24x1024xf32, #tpu.memory_space<vmem>>, vector<20x128xf32>
    %c0_217 = arith.constant 0 : index
    %c640_218 = arith.constant 640 : index
    %261 = vector.load %arg2[%c0_217, %c640_218] : memref<20x1024xf32, #tpu.memory_space<vmem>>, vector<20x128xf32>
    %262 = arith.mulf %261, %260 : vector<20x128xf32>
    %263 = arith.addf %259, %262 : vector<20x128xf32>
    %c1_219 = arith.constant 1 : index
    %c768_220 = arith.constant 768 : index
    %264 = tpu.strided_load %arg9[%c1_219, %c768_220] {strides = array<i32: 0, 1>} : memref<24x1024xf32, #tpu.memory_space<vmem>>, vector<20x128xf32>
    %c0_221 = arith.constant 0 : index
    %c768_222 = arith.constant 768 : index
    %265 = vector.load %arg2[%c0_221, %c768_222] : memref<20x1024xf32, #tpu.memory_space<vmem>>, vector<20x128xf32>
    %266 = arith.mulf %265, %264 : vector<20x128xf32>
    %267 = arith.addf %263, %266 : vector<20x128xf32>
    %c1_223 = arith.constant 1 : index
    %c896_224 = arith.constant 896 : index
    %268 = tpu.strided_load %arg9[%c1_223, %c896_224] {strides = array<i32: 0, 1>} : memref<24x1024xf32, #tpu.memory_space<vmem>>, vector<20x128xf32>
    %c0_225 = arith.constant 0 : index
    %c896_226 = arith.constant 896 : index
    %269 = vector.load %arg2[%c0_225, %c896_226] : memref<20x1024xf32, #tpu.memory_space<vmem>>, vector<20x128xf32>
    %270 = arith.mulf %269, %268 : vector<20x128xf32>
    %271 = arith.addf %267, %270 : vector<20x128xf32>
    %c0_227 = arith.constant 0 : index
    %c0_228 = arith.constant 0 : index
    %272 = vector.load %arg10[%c0_227, %c0_228] : memref<20x128xf32, #tpu.memory_space<vmem>>, vector<20x128xf32>
    %273 = arith.mulf %271, %272 : vector<20x128xf32>
    %cst_229 = arith.constant dense<0xFF800000> : vector<128xf32>
    %274 = vector.multi_reduction <maximumf>, %273, %cst_229 [0] : vector<20x128xf32> to vector<128xf32>
    %275 = vector.shape_cast %274 : vector<128xf32> to vector<1x128xf32>
    %276 = vector.extract_strided_slice %32 {offsets = [5, 0], sizes = [1, 1], strides = [1, 1]} : vector<8x1xf32> to vector<1x1xf32>
    %277 = vector.broadcast %276 : vector<1x1xf32> to vector<1x128xf32>
    %278 = arith.addf %275, %277 : vector<1x128xf32>
    %c5 = arith.constant 5 : index
    %c0_230 = arith.constant 0 : index
    %279 = vector.load %arg7[%c5, %c0_230] : memref<8x128xf32, #tpu.memory_space<vmem>>, vector<1x128xf32>
    tpu.vector_store %arg7[%c5, %c0_230], %278 {strides = array<i32>} : memref<8x128xf32, #tpu.memory_space<vmem>>, vector<1x128xf32>,
    %cst_231 = arith.constant 0.000000e+00 : f32
    %280 = vector.broadcast %cst_231 : f32 to vector<20x128xf32>
    %c2_232 = arith.constant 2 : index
    %c0_233 = arith.constant 0 : index
    %281 = tpu.strided_load %arg9[%c2_232, %c0_233] {strides = array<i32: 0, 1>} : memref<24x1024xf32, #tpu.memory_space<vmem>>, vector<20x128xf32>
    %c0_234 = arith.constant 0 : index
    %c0_235 = arith.constant 0 : index
    %282 = vector.load %arg2[%c0_234, %c0_235] : memref<20x1024xf32, #tpu.memory_space<vmem>>, vector<20x128xf32>
    %283 = arith.mulf %282, %281 : vector<20x128xf32>
    %284 = arith.addf %280, %283 : vector<20x128xf32>
    %c2_236 = arith.constant 2 : index
    %c128_237 = arith.constant 128 : index
    %285 = tpu.strided_load %arg9[%c2_236, %c128_237] {strides = array<i32: 0, 1>} : memref<24x1024xf32, #tpu.memory_space<vmem>>, vector<20x128xf32>
    %c0_238 = arith.constant 0 : index
    %c128_239 = arith.constant 128 : index
    %286 = vector.load %arg2[%c0_238, %c128_239] : memref<20x1024xf32, #tpu.memory_space<vmem>>, vector<20x128xf32>
    %287 = arith.mulf %286, %285 : vector<20x128xf32>
    %288 = arith.addf %284, %287 : vector<20x128xf32>
    %c2_240 = arith.constant 2 : index
    %c256_241 = arith.constant 256 : index
    %289 = tpu.strided_load %arg9[%c2_240, %c256_241] {strides = array<i32: 0, 1>} : memref<24x1024xf32, #tpu.memory_space<vmem>>, vector<20x128xf32>
    %c0_242 = arith.constant 0 : index
    %c256_243 = arith.constant 256 : index
    %290 = vector.load %arg2[%c0_242, %c256_243] : memref<20x1024xf32, #tpu.memory_space<vmem>>, vector<20x128xf32>
    %291 = arith.mulf %290, %289 : vector<20x128xf32>
    %292 = arith.addf %288, %291 : vector<20x128xf32>
    %c2_244 = arith.constant 2 : index
    %c384_245 = arith.constant 384 : index
    %293 = tpu.strided_load %arg9[%c2_244, %c384_245] {strides = array<i32: 0, 1>} : memref<24x1024xf32, #tpu.memory_space<vmem>>, vector<20x128xf32>
    %c0_246 = arith.constant 0 : index
    %c384_247 = arith.constant 384 : index
    %294 = vector.load %arg2[%c0_246, %c384_247] : memref<20x1024xf32, #tpu.memory_space<vmem>>, vector<20x128xf32>
    %295 = arith.mulf %294, %293 : vector<20x128xf32>
    %296 = arith.addf %292, %295 : vector<20x128xf32>
    %c2_248 = arith.constant 2 : index
    %c512_249 = arith.constant 512 : index
    %297 = tpu.strided_load %arg9[%c2_248, %c512_249] {strides = array<i32: 0, 1>} : memref<24x1024xf32, #tpu.memory_space<vmem>>, vector<20x128xf32>
    %c0_250 = arith.constant 0 : index
    %c512_251 = arith.constant 512 : index
    %298 = vector.load %arg2[%c0_250, %c512_251] : memref<20x1024xf32, #tpu.memory_space<vmem>>, vector<20x128xf32>
    %299 = arith.mulf %298, %297 : vector<20x128xf32>
    %300 = arith.addf %296, %299 : vector<20x128xf32>
    %c2_252 = arith.constant 2 : index
    %c640_253 = arith.constant 640 : index
    %301 = tpu.strided_load %arg9[%c2_252, %c640_253] {strides = array<i32: 0, 1>} : memref<24x1024xf32, #tpu.memory_space<vmem>>, vector<20x128xf32>
    %c0_254 = arith.constant 0 : index
    %c640_255 = arith.constant 640 : index
    %302 = vector.load %arg2[%c0_254, %c640_255] : memref<20x1024xf32, #tpu.memory_space<vmem>>, vector<20x128xf32>
    %303 = arith.mulf %302, %301 : vector<20x128xf32>
    %304 = arith.addf %300, %303 : vector<20x128xf32>
    %c2_256 = arith.constant 2 : index
    %c768_257 = arith.constant 768 : index
    %305 = tpu.strided_load %arg9[%c2_256, %c768_257] {strides = array<i32: 0, 1>} : memref<24x1024xf32, #tpu.memory_space<vmem>>, vector<20x128xf32>
    %c0_258 = arith.constant 0 : index
    %c768_259 = arith.constant 768 : index
    %306 = vector.load %arg2[%c0_258, %c768_259] : memref<20x1024xf32, #tpu.memory_space<vmem>>, vector<20x128xf32>
    %307 = arith.mulf %306, %305 : vector<20x128xf32>
    %308 = arith.addf %304, %307 : vector<20x128xf32>
    %c2_260 = arith.constant 2 : index
    %c896_261 = arith.constant 896 : index
    %309 = tpu.strided_load %arg9[%c2_260, %c896_261] {strides = array<i32: 0, 1>} : memref<24x1024xf32, #tpu.memory_space<vmem>>, vector<20x128xf32>
    %c0_262 = arith.constant 0 : index
    %c896_263 = arith.constant 896 : index
    %310 = vector.load %arg2[%c0_262, %c896_263] : memref<20x1024xf32, #tpu.memory_space<vmem>>, vector<20x128xf32>
    %311 = arith.mulf %310, %309 : vector<20x128xf32>
    %312 = arith.addf %308, %311 : vector<20x128xf32>
    %c0_264 = arith.constant 0 : index
    %c0_265 = arith.constant 0 : index
    %313 = vector.load %arg10[%c0_264, %c0_265] : memref<20x128xf32, #tpu.memory_space<vmem>>, vector<20x128xf32>
    %314 = arith.mulf %312, %313 : vector<20x128xf32>
    %cst_266 = arith.constant dense<0xFF800000> : vector<128xf32>
    %315 = vector.multi_reduction <maximumf>, %314, %cst_266 [0] : vector<20x128xf32> to vector<128xf32>
    %316 = vector.shape_cast %315 : vector<128xf32> to vector<1x128xf32>
    %317 = vector.extract_strided_slice %32 {offsets = [6, 0], sizes = [1, 1], strides = [1, 1]} : vector<8x1xf32> to vector<1x1xf32>
    %318 = vector.broadcast %317 : vector<1x1xf32> to vector<1x128xf32>
    %319 = arith.addf %316, %318 : vector<1x128xf32>
    %c6 = arith.constant 6 : index
    %c0_267 = arith.constant 0 : index
    %320 = vector.load %arg7[%c6, %c0_267] : memref<8x128xf32, #tpu.memory_space<vmem>>, vector<1x128xf32>
    tpu.vector_store %arg7[%c6, %c0_267], %319 {strides = array<i32>} : memref<8x128xf32, #tpu.memory_space<vmem>>, vector<1x128xf32>,
    %cst_268 = arith.constant 0.000000e+00 : f32
    %321 = vector.broadcast %cst_268 : f32 to vector<20x128xf32>
    %c3_269 = arith.constant 3 : index
    %c0_270 = arith.constant 0 : index
    %322 = tpu.strided_load %arg9[%c3_269, %c0_270] {strides = array<i32: 0, 1>} : memref<24x1024xf32, #tpu.memory_space<vmem>>, vector<20x128xf32>
    %c0_271 = arith.constant 0 : index
    %c0_272 = arith.constant 0 : index
    %323 = vector.load %arg2[%c0_271, %c0_272] : memref<20x1024xf32, #tpu.memory_space<vmem>>, vector<20x128xf32>
    %324 = arith.mulf %323, %322 : vector<20x128xf32>
    %325 = arith.addf %321, %324 : vector<20x128xf32>
    %c3_273 = arith.constant 3 : index
    %c128_274 = arith.constant 128 : index
    %326 = tpu.strided_load %arg9[%c3_273, %c128_274] {strides = array<i32: 0, 1>} : memref<24x1024xf32, #tpu.memory_space<vmem>>, vector<20x128xf32>
    %c0_275 = arith.constant 0 : index
    %c128_276 = arith.constant 128 : index
    %327 = vector.load %arg2[%c0_275, %c128_276] : memref<20x1024xf32, #tpu.memory_space<vmem>>, vector<20x128xf32>
    %328 = arith.mulf %327, %326 : vector<20x128xf32>
    %329 = arith.addf %325, %328 : vector<20x128xf32>
    %c3_277 = arith.constant 3 : index
    %c256_278 = arith.constant 256 : index
    %330 = tpu.strided_load %arg9[%c3_277, %c256_278] {strides = array<i32: 0, 1>} : memref<24x1024xf32, #tpu.memory_space<vmem>>, vector<20x128xf32>
    %c0_279 = arith.constant 0 : index
    %c256_280 = arith.constant 256 : index
    %331 = vector.load %arg2[%c0_279, %c256_280] : memref<20x1024xf32, #tpu.memory_space<vmem>>, vector<20x128xf32>
    %332 = arith.mulf %331, %330 : vector<20x128xf32>
    %333 = arith.addf %329, %332 : vector<20x128xf32>
    %c3_281 = arith.constant 3 : index
    %c384_282 = arith.constant 384 : index
    %334 = tpu.strided_load %arg9[%c3_281, %c384_282] {strides = array<i32: 0, 1>} : memref<24x1024xf32, #tpu.memory_space<vmem>>, vector<20x128xf32>
    %c0_283 = arith.constant 0 : index
    %c384_284 = arith.constant 384 : index
    %335 = vector.load %arg2[%c0_283, %c384_284] : memref<20x1024xf32, #tpu.memory_space<vmem>>, vector<20x128xf32>
    %336 = arith.mulf %335, %334 : vector<20x128xf32>
    %337 = arith.addf %333, %336 : vector<20x128xf32>
    %c3_285 = arith.constant 3 : index
    %c512_286 = arith.constant 512 : index
    %338 = tpu.strided_load %arg9[%c3_285, %c512_286] {strides = array<i32: 0, 1>} : memref<24x1024xf32, #tpu.memory_space<vmem>>, vector<20x128xf32>
    %c0_287 = arith.constant 0 : index
    %c512_288 = arith.constant 512 : index
    %339 = vector.load %arg2[%c0_287, %c512_288] : memref<20x1024xf32, #tpu.memory_space<vmem>>, vector<20x128xf32>
    %340 = arith.mulf %339, %338 : vector<20x128xf32>
    %341 = arith.addf %337, %340 : vector<20x128xf32>
    %c3_289 = arith.constant 3 : index
    %c640_290 = arith.constant 640 : index
    %342 = tpu.strided_load %arg9[%c3_289, %c640_290] {strides = array<i32: 0, 1>} : memref<24x1024xf32, #tpu.memory_space<vmem>>, vector<20x128xf32>
    %c0_291 = arith.constant 0 : index
    %c640_292 = arith.constant 640 : index
    %343 = vector.load %arg2[%c0_291, %c640_292] : memref<20x1024xf32, #tpu.memory_space<vmem>>, vector<20x128xf32>
    %344 = arith.mulf %343, %342 : vector<20x128xf32>
    %345 = arith.addf %341, %344 : vector<20x128xf32>
    %c3_293 = arith.constant 3 : index
    %c768_294 = arith.constant 768 : index
    %346 = tpu.strided_load %arg9[%c3_293, %c768_294] {strides = array<i32: 0, 1>} : memref<24x1024xf32, #tpu.memory_space<vmem>>, vector<20x128xf32>
    %c0_295 = arith.constant 0 : index
    %c768_296 = arith.constant 768 : index
    %347 = vector.load %arg2[%c0_295, %c768_296] : memref<20x1024xf32, #tpu.memory_space<vmem>>, vector<20x128xf32>
    %348 = arith.mulf %347, %346 : vector<20x128xf32>
    %349 = arith.addf %345, %348 : vector<20x128xf32>
    %c3_297 = arith.constant 3 : index
    %c896_298 = arith.constant 896 : index
    %350 = tpu.strided_load %arg9[%c3_297, %c896_298] {strides = array<i32: 0, 1>} : memref<24x1024xf32, #tpu.memory_space<vmem>>, vector<20x128xf32>
    %c0_299 = arith.constant 0 : index
    %c896_300 = arith.constant 896 : index
    %351 = vector.load %arg2[%c0_299, %c896_300] : memref<20x1024xf32, #tpu.memory_space<vmem>>, vector<20x128xf32>
    %352 = arith.mulf %351, %350 : vector<20x128xf32>
    %353 = arith.addf %349, %352 : vector<20x128xf32>
    %c0_301 = arith.constant 0 : index
    %c0_302 = arith.constant 0 : index
    %354 = vector.load %arg10[%c0_301, %c0_302] : memref<20x128xf32, #tpu.memory_space<vmem>>, vector<20x128xf32>
    %355 = arith.mulf %353, %354 : vector<20x128xf32>
    %cst_303 = arith.constant dense<0xFF800000> : vector<128xf32>
    %356 = vector.multi_reduction <maximumf>, %355, %cst_303 [0] : vector<20x128xf32> to vector<128xf32>
    %357 = vector.shape_cast %356 : vector<128xf32> to vector<1x128xf32>
    %358 = vector.extract_strided_slice %32 {offsets = [7, 0], sizes = [1, 1], strides = [1, 1]} : vector<8x1xf32> to vector<1x1xf32>
    %359 = vector.broadcast %358 : vector<1x1xf32> to vector<1x128xf32>
    %360 = arith.addf %357, %359 : vector<1x128xf32>
    %c7 = arith.constant 7 : index
    %c0_304 = arith.constant 0 : index
    %361 = vector.load %arg7[%c7, %c0_304] : memref<8x128xf32, #tpu.memory_space<vmem>>, vector<1x128xf32>
    tpu.vector_store %arg7[%c7, %c0_304], %360 {strides = array<i32>} : memref<8x128xf32, #tpu.memory_space<vmem>>, vector<1x128xf32>,
    return
  }
  func.func @transform_0(%arg0: i32) -> (i32, i32) {
    %c0_i32 = arith.constant 0 : i32
    %c0_i32_0 = arith.constant 0 : i32
    return %c0_i32, %arg0 : i32, i32
  }
  func.func @transform_1(%arg0: i32) -> (i32, i32) {
    %c0_i32 = arith.constant 0 : i32
    %c0_i32_0 = arith.constant 0 : i32
    return %c0_i32, %arg0 : i32, i32
  }
  func.func @transform_2(%arg0: i32) -> (i32, i32) {
    %c0_i32 = arith.constant 0 : i32
    %c0_i32_0 = arith.constant 0 : i32
    %c0_i32_1 = arith.constant 0 : i32
    return %c0_i32, %c0_i32_0 : i32, i32
  }
  func.func @transform_3(%arg0: i32) -> (i32, i32) {
    %c0_i32 = arith.constant 0 : i32
    %c0_i32_0 = arith.constant 0 : i32
    %c0_i32_1 = arith.constant 0 : i32
    return %c0_i32, %c0_i32_0 : i32, i32
  }
  func.func @transform_4(%arg0: i32) -> (i32, i32) {
    %c0_i32 = arith.constant 0 : i32
    %c0_i32_0 = arith.constant 0 : i32
    %c0_i32_1 = arith.constant 0 : i32
    return %c0_i32, %c0_i32_0 : i32, i32
  }
  func.func @transform_5(%arg0: i32) -> (i32, i32) {
    %c0_i32 = arith.constant 0 : i32
    %c0_i32_0 = arith.constant 0 : i32
    %c0_i32_1 = arith.constant 0 : i32
    return %c0_i32, %c0_i32_0 : i32, i32
  }
  func.func @transform_6(%arg0: i32) -> (i32, i32) {
    %c0_i32 = arith.constant 0 : i32
    %c0_i32_0 = arith.constant 0 : i32
    return %c0_i32, %arg0 : i32, i32
  }
}

module attributes {stable_mosaic.version = 11 : i64} {
  func.func @paiconv_max_kernel(%arg0: i32, %arg1: memref<4x1024xf32, #tpu.memory_space<vmem>>, %arg2: memref<20x1024xf32, #tpu.memory_space<vmem>>, %arg3: memref<16x20xf32, #tpu.memory_space<vmem>>, %arg4: memref<4x4xf32, #tpu.memory_space<vmem>>, %arg5: memref<4x4xf32, #tpu.memory_space<vmem>>, %arg6: memref<8x1xf32, #tpu.memory_space<vmem>>, %arg7: memref<8x128xf32, #tpu.memory_space<vmem>>, %arg8: memref<16x1024xf32, #tpu.memory_space<vmem>>, %arg9: memref<24x1024xf32, #tpu.memory_space<vmem>>, %arg10: memref<20x128xf32, #tpu.memory_space<vmem>>) attributes {dimension_semantics = [#tpu.dimension_semantics<parallel>], iteration_bounds = array<i64: 1>, scalar_prefetch = 0 : i64, scratch_operands = 3 : i64, tpu.core_type = #tpu.core_type<tc>, window_params = [{transform_indices = @transform_0, window_bounds = array<i64: 4, 1024>}, {transform_indices = @transform_1, window_bounds = array<i64: 20, 1024>}, {pipeline_mode = #tpu.pipeline_mode<synchronous>, transform_indices = @transform_2, window_bounds = array<i64: 16, 20>}, {pipeline_mode = #tpu.pipeline_mode<synchronous>, transform_indices = @transform_3, window_bounds = array<i64: 4, 4>}, {pipeline_mode = #tpu.pipeline_mode<synchronous>, transform_indices = @transform_4, window_bounds = array<i64: 4, 4>}, {pipeline_mode = #tpu.pipeline_mode<synchronous>, transform_indices = @transform_5, window_bounds = array<i64: 8, 1>}, {transform_indices = @transform_6, window_bounds = array<i64: 8, 128>}]} {
    %c0 = arith.constant 0 : index
    %c0_0 = arith.constant 0 : index
    %0 = vector.load %arg3[%c0, %c0_0] : memref<16x20xf32, #tpu.memory_space<vmem>>, vector<16x20xf32>
    %c0_1 = arith.constant 0 : index
    %c0_2 = arith.constant 0 : index
    %1 = vector.load %arg2[%c0_1, %c0_2] : memref<20x1024xf32, #tpu.memory_space<vmem>>, vector<20x1024xf32>
    %cst = arith.constant dense<0.000000e+00> : vector<16x1024xf32>
    %2 = tpu.matmul %0, %1, %cst {dimension_numbers = #tpu.dot_dimension_numbers<[1], [0], [0], [1], [0, 0, 1, 1], [], []>} : vector<16x20xf32>, vector<20x1024xf32>, vector<16x1024xf32> -> vector<16x1024xf32>
    %c0_3 = arith.constant 0 : index
    %c0_4 = arith.constant 0 : index
    %3 = vector.load %arg8[%c0_3, %c0_4] : memref<16x1024xf32, #tpu.memory_space<vmem>>, vector<16x1024xf32>
    tpu.vector_store %arg8[%c0_3, %c0_4], %2 {strides = array<i32>} : memref<16x1024xf32, #tpu.memory_space<vmem>>, vector<16x1024xf32>,
    %c0_5 = arith.constant 0 : index
    %c0_6 = arith.constant 0 : index
    %4 = vector.load %arg5[%c0_5, %c0_6] : memref<4x4xf32, #tpu.memory_space<vmem>>, vector<4x4xf32>
    %c0_7 = arith.constant 0 : index
    %c0_8 = arith.constant 0 : index
    %5 = vector.load %arg1[%c0_7, %c0_8] : memref<4x1024xf32, #tpu.memory_space<vmem>>, vector<4x128xf32>
    %cst_9 = arith.constant dense<0.000000e+00> : vector<4x128xf32>
    %6 = tpu.matmul %4, %5, %cst_9 {dimension_numbers = #tpu.dot_dimension_numbers<[1], [0], [0], [1], [0, 0, 1, 1], [], []>} : vector<4x4xf32>, vector<4x128xf32>, vector<4x128xf32> -> vector<4x128xf32>
    %c0_10 = arith.constant 0 : index
    %c0_11 = arith.constant 0 : index
    %7 = vector.load %arg4[%c0_10, %c0_11] : memref<4x4xf32, #tpu.memory_space<vmem>>, vector<4x4xf32>
    %c0_12 = arith.constant 0 : index
    %c0_13 = arith.constant 0 : index
    %8 = vector.load %arg1[%c0_12, %c0_13] : memref<4x1024xf32, #tpu.memory_space<vmem>>, vector<4x1024xf32>
    %cst_14 = arith.constant dense<0.000000e+00> : vector<4x1024xf32>
    %9 = tpu.matmul %7, %8, %cst_14 {dimension_numbers = #tpu.dot_dimension_numbers<[1], [0], [0], [1], [0, 0, 1, 1], [], []>} : vector<4x4xf32>, vector<4x1024xf32>, vector<4x1024xf32> -> vector<4x1024xf32>
    %10 = tpu.concatenate %6, %6, %6, %6, %6, %6, %6, %6 in 1 : vector<4x128xf32>, vector<4x128xf32>, vector<4x128xf32>, vector<4x128xf32>, vector<4x128xf32>, vector<4x128xf32>, vector<4x128xf32>, vector<4x128xf32> -> vector<4x1024xf32>
    %11 = arith.addf %9, %10 : vector<4x1024xf32>
    %c0_15 = arith.constant 0 : index
    %c0_16 = arith.constant 0 : index
    %12 = vector.load %arg9[%c0_15, %c0_16] : memref<24x1024xf32, #tpu.memory_space<vmem>>, vector<4x1024xf32>
    tpu.vector_store %arg9[%c0_15, %c0_16], %11 {strides = array<i32>} : memref<24x1024xf32, #tpu.memory_space<vmem>>, vector<4x1024xf32>,
    %c0_17 = arith.constant 0 : index
    %c0_18 = arith.constant 0 : index
    %13 = vector.load %arg2[%c0_17, %c0_18] : memref<20x1024xf32, #tpu.memory_space<vmem>>, vector<20x128xf32>
    %c0_19 = arith.constant 0 : index
    %c128 = arith.constant 128 : index
    %14 = vector.load %arg2[%c0_19, %c128] : memref<20x1024xf32, #tpu.memory_space<vmem>>, vector<20x128xf32>
    %15 = arith.addf %13, %14 : vector<20x128xf32>
    %c0_20 = arith.constant 0 : index
    %c256 = arith.constant 256 : index
    %16 = vector.load %arg2[%c0_20, %c256] : memref<20x1024xf32, #tpu.memory_space<vmem>>, vector<20x128xf32>
    %17 = arith.addf %15, %16 : vector<20x128xf32>
    %c0_21 = arith.constant 0 : index
    %c384 = arith.constant 384 : index
    %18 = vector.load %arg2[%c0_21, %c384] : memref<20x1024xf32, #tpu.memory_space<vmem>>, vector<20x128xf32>
    %19 = arith.addf %17, %18 : vector<20x128xf32>
    %c0_22 = arith.constant 0 : index
    %c512 = arith.constant 512 : index
    %20 = vector.load %arg2[%c0_22, %c512] : memref<20x1024xf32, #tpu.memory_space<vmem>>, vector<20x128xf32>
    %21 = arith.addf %19, %20 : vector<20x128xf32>
    %c0_23 = arith.constant 0 : index
    %c640 = arith.constant 640 : index
    %22 = vector.load %arg2[%c0_23, %c640] : memref<20x1024xf32, #tpu.memory_space<vmem>>, vector<20x128xf32>
    %23 = arith.addf %21, %22 : vector<20x128xf32>
    %c0_24 = arith.constant 0 : index
    %c768 = arith.constant 768 : index
    %24 = vector.load %arg2[%c0_24, %c768] : memref<20x1024xf32, #tpu.memory_space<vmem>>, vector<20x128xf32>
    %25 = arith.addf %23, %24 : vector<20x128xf32>
    %c0_25 = arith.constant 0 : index
    %c896 = arith.constant 896 : index
    %26 = vector.load %arg2[%c0_25, %c896] : memref<20x1024xf32, #tpu.memory_space<vmem>>, vector<20x128xf32>
    %27 = arith.addf %25, %26 : vector<20x128xf32>
    %cst_26 = arith.constant 9.99999997E-7 : f32
    %28 = vector.broadcast %cst_26 : f32 to vector<20x128xf32>
    %29 = arith.addf %27, %28 : vector<20x128xf32>
    %30 = tpu.reciprocal %29 {approx = true} : vector<20x128xf32> -> vector<20x128xf32>
    %c0_27 = arith.constant 0 : index
    %c0_28 = arith.constant 0 : index
    %31 = vector.load %arg10[%c0_27, %c0_28] : memref<20x128xf32, #tpu.memory_space<vmem>>, vector<20x128xf32>
    tpu.vector_store %arg10[%c0_27, %c0_28], %30 {strides = array<i32>} : memref<20x128xf32, #tpu.memory_space<vmem>>, vector<20x128xf32>,
    %c0_29 = arith.constant 0 : index
    %c0_30 = arith.constant 0 : index
    %32 = vector.load %arg6[%c0_29, %c0_30] : memref<8x1xf32, #tpu.memory_space<vmem>>, vector<8x1xf32>
    %cst_31 = arith.constant 0.000000e+00 : f32
    %33 = vector.broadcast %cst_31 : f32 to vector<4x128xf32>
    %c0_32 = arith.constant 0 : index
    %c0_33 = arith.constant 0 : index
    %34 = vector.load %arg8[%c0_32, %c0_33] : memref<16x1024xf32, #tpu.memory_space<vmem>>, vector<4x128xf32>
    %c0_34 = arith.constant 0 : index
    %c0_35 = arith.constant 0 : index
    %35 = vector.load %arg1[%c0_34, %c0_35] : memref<4x1024xf32, #tpu.memory_space<vmem>>, vector<1x128xf32>
    %36 = vector.broadcast %35 : vector<1x128xf32> to vector<4x128xf32>
    %37 = arith.mulf %34, %36 : vector<4x128xf32>
    %38 = arith.addf %33, %37 : vector<4x128xf32>
    %c4 = arith.constant 4 : index
    %c0_36 = arith.constant 0 : index
    %39 = vector.load %arg8[%c4, %c0_36] : memref<16x1024xf32, #tpu.memory_space<vmem>>, vector<4x128xf32>
    %c1 = arith.constant 1 : index
    %c0_37 = arith.constant 0 : index
    %40 = vector.load %arg1[%c1, %c0_37] : memref<4x1024xf32, #tpu.memory_space<vmem>>, vector<1x128xf32>
    %41 = vector.broadcast %40 : vector<1x128xf32> to vector<4x128xf32>
    %42 = arith.mulf %39, %41 : vector<4x128xf32>
    %43 = arith.addf %38, %42 : vector<4x128xf32>
    %c8 = arith.constant 8 : index
    %c0_38 = arith.constant 0 : index
    %44 = vector.load %arg8[%c8, %c0_38] : memref<16x1024xf32, #tpu.memory_space<vmem>>, vector<4x128xf32>
    %c2 = arith.constant 2 : index
    %c0_39 = arith.constant 0 : index
    %45 = vector.load %arg1[%c2, %c0_39] : memref<4x1024xf32, #tpu.memory_space<vmem>>, vector<1x128xf32>
    %46 = vector.broadcast %45 : vector<1x128xf32> to vector<4x128xf32>
    %47 = arith.mulf %44, %46 : vector<4x128xf32>
    %48 = arith.addf %43, %47 : vector<4x128xf32>
    %c12 = arith.constant 12 : index
    %c0_40 = arith.constant 0 : index
    %49 = vector.load %arg8[%c12, %c0_40] : memref<16x1024xf32, #tpu.memory_space<vmem>>, vector<4x128xf32>
    %c3 = arith.constant 3 : index
    %c0_41 = arith.constant 0 : index
    %50 = vector.load %arg1[%c3, %c0_41] : memref<4x1024xf32, #tpu.memory_space<vmem>>, vector<1x128xf32>
    %51 = vector.broadcast %50 : vector<1x128xf32> to vector<4x128xf32>
    %52 = arith.mulf %49, %51 : vector<4x128xf32>
    %53 = arith.addf %48, %52 : vector<4x128xf32>
    %c0_42 = arith.constant 0 : index
    %c128_43 = arith.constant 128 : index
    %54 = vector.load %arg8[%c0_42, %c128_43] : memref<16x1024xf32, #tpu.memory_space<vmem>>, vector<4x128xf32>
    %c0_44 = arith.constant 0 : index
    %c128_45 = arith.constant 128 : index
    %55 = vector.load %arg1[%c0_44, %c128_45] : memref<4x1024xf32, #tpu.memory_space<vmem>>, vector<1x128xf32>
    %56 = vector.broadcast %55 : vector<1x128xf32> to vector<4x128xf32>
    %57 = arith.mulf %54, %56 : vector<4x128xf32>
    %58 = arith.addf %53, %57 : vector<4x128xf32>
    %c4_46 = arith.constant 4 : index
    %c128_47 = arith.constant 128 : index
    %59 = vector.load %arg8[%c4_46, %c128_47] : memref<16x1024xf32, #tpu.memory_space<vmem>>, vector<4x128xf32>
    %c1_48 = arith.constant 1 : index
    %c128_49 = arith.constant 128 : index
    %60 = vector.load %arg1[%c1_48, %c128_49] : memref<4x1024xf32, #tpu.memory_space<vmem>>, vector<1x128xf32>
    %61 = vector.broadcast %60 : vector<1x128xf32> to vector<4x128xf32>
    %62 = arith.mulf %59, %61 : vector<4x128xf32>
    %63 = arith.addf %58, %62 : vector<4x128xf32>
    %c8_50 = arith.constant 8 : index
    %c128_51 = arith.constant 128 : index
    %64 = vector.load %arg8[%c8_50, %c128_51] : memref<16x1024xf32, #tpu.memory_space<vmem>>, vector<4x128xf32>
    %c2_52 = arith.constant 2 : index
    %c128_53 = arith.constant 128 : index
    %65 = vector.load %arg1[%c2_52, %c128_53] : memref<4x1024xf32, #tpu.memory_space<vmem>>, vector<1x128xf32>
    %66 = vector.broadcast %65 : vector<1x128xf32> to vector<4x128xf32>
    %67 = arith.mulf %64, %66 : vector<4x128xf32>
    %68 = arith.addf %63, %67 : vector<4x128xf32>
    %c12_54 = arith.constant 12 : index
    %c128_55 = arith.constant 128 : index
    %69 = vector.load %arg8[%c12_54, %c128_55] : memref<16x1024xf32, #tpu.memory_space<vmem>>, vector<4x128xf32>
    %c3_56 = arith.constant 3 : index
    %c128_57 = arith.constant 128 : index
    %70 = vector.load %arg1[%c3_56, %c128_57] : memref<4x1024xf32, #tpu.memory_space<vmem>>, vector<1x128xf32>
    %71 = vector.broadcast %70 : vector<1x128xf32> to vector<4x128xf32>
    %72 = arith.mulf %69, %71 : vector<4x128xf32>
    %73 = arith.addf %68, %72 : vector<4x128xf32>
    %c0_58 = arith.constant 0 : index
    %c256_59 = arith.constant 256 : index
    %74 = vector.load %arg8[%c0_58, %c256_59] : memref<16x1024xf32, #tpu.memory_space<vmem>>, vector<4x128xf32>
    %c0_60 = arith.constant 0 : index
    %c256_61 = arith.constant 256 : index
    %75 = vector.load %arg1[%c0_60, %c256_61] : memref<4x1024xf32, #tpu.memory_space<vmem>>, vector<1x128xf32>
    %76 = vector.broadcast %75 : vector<1x128xf32> to vector<4x128xf32>
    %77 = arith.mulf %74, %76 : vector<4x128xf32>
    %78 = arith.addf %73, %77 : vector<4x128xf32>
    %c4_62 = arith.constant 4 : index
    %c256_63 = arith.constant 256 : index
    %79 = vector.load %arg8[%c4_62, %c256_63] : memref<16x1024xf32, #tpu.memory_space<vmem>>, vector<4x128xf32>
    %c1_64 = arith.constant 1 : index
    %c256_65 = arith.constant 256 : index
    %80 = vector.load %arg1[%c1_64, %c256_65] : memref<4x1024xf32, #tpu.memory_space<vmem>>, vector<1x128xf32>
    %81 = vector.broadcast %80 : vector<1x128xf32> to vector<4x128xf32>
    %82 = arith.mulf %79, %81 : vector<4x128xf32>
    %83 = arith.addf %78, %82 : vector<4x128xf32>
    %c8_66 = arith.constant 8 : index
    %c256_67 = arith.constant 256 : index
    %84 = vector.load %arg8[%c8_66, %c256_67] : memref<16x1024xf32, #tpu.memory_space<vmem>>, vector<4x128xf32>
    %c2_68 = arith.constant 2 : index
    %c256_69 = arith.constant 256 : index
    %85 = vector.load %arg1[%c2_68, %c256_69] : memref<4x1024xf32, #tpu.memory_space<vmem>>, vector<1x128xf32>
    %86 = vector.broadcast %85 : vector<1x128xf32> to vector<4x128xf32>
    %87 = arith.mulf %84, %86 : vector<4x128xf32>
    %88 = arith.addf %83, %87 : vector<4x128xf32>
    %c12_70 = arith.constant 12 : index
    %c256_71 = arith.constant 256 : index
    %89 = vector.load %arg8[%c12_70, %c256_71] : memref<16x1024xf32, #tpu.memory_space<vmem>>, vector<4x128xf32>
    %c3_72 = arith.constant 3 : index
    %c256_73 = arith.constant 256 : index
    %90 = vector.load %arg1[%c3_72, %c256_73] : memref<4x1024xf32, #tpu.memory_space<vmem>>, vector<1x128xf32>
    %91 = vector.broadcast %90 : vector<1x128xf32> to vector<4x128xf32>
    %92 = arith.mulf %89, %91 : vector<4x128xf32>
    %93 = arith.addf %88, %92 : vector<4x128xf32>
    %c0_74 = arith.constant 0 : index
    %c384_75 = arith.constant 384 : index
    %94 = vector.load %arg8[%c0_74, %c384_75] : memref<16x1024xf32, #tpu.memory_space<vmem>>, vector<4x128xf32>
    %c0_76 = arith.constant 0 : index
    %c384_77 = arith.constant 384 : index
    %95 = vector.load %arg1[%c0_76, %c384_77] : memref<4x1024xf32, #tpu.memory_space<vmem>>, vector<1x128xf32>
    %96 = vector.broadcast %95 : vector<1x128xf32> to vector<4x128xf32>
    %97 = arith.mulf %94, %96 : vector<4x128xf32>
    %98 = arith.addf %93, %97 : vector<4x128xf32>
    %c4_78 = arith.constant 4 : index
    %c384_79 = arith.constant 384 : index
    %99 = vector.load %arg8[%c4_78, %c384_79] : memref<16x1024xf32, #tpu.memory_space<vmem>>, vector<4x128xf32>
    %c1_80 = arith.constant 1 : index
    %c384_81 = arith.constant 384 : index
    %100 = vector.load %arg1[%c1_80, %c384_81] : memref<4x1024xf32, #tpu.memory_space<vmem>>, vector<1x128xf32>
    %101 = vector.broadcast %100 : vector<1x128xf32> to vector<4x128xf32>
    %102 = arith.mulf %99, %101 : vector<4x128xf32>
    %103 = arith.addf %98, %102 : vector<4x128xf32>
    %c8_82 = arith.constant 8 : index
    %c384_83 = arith.constant 384 : index
    %104 = vector.load %arg8[%c8_82, %c384_83] : memref<16x1024xf32, #tpu.memory_space<vmem>>, vector<4x128xf32>
    %c2_84 = arith.constant 2 : index
    %c384_85 = arith.constant 384 : index
    %105 = vector.load %arg1[%c2_84, %c384_85] : memref<4x1024xf32, #tpu.memory_space<vmem>>, vector<1x128xf32>
    %106 = vector.broadcast %105 : vector<1x128xf32> to vector<4x128xf32>
    %107 = arith.mulf %104, %106 : vector<4x128xf32>
    %108 = arith.addf %103, %107 : vector<4x128xf32>
    %c12_86 = arith.constant 12 : index
    %c384_87 = arith.constant 384 : index
    %109 = vector.load %arg8[%c12_86, %c384_87] : memref<16x1024xf32, #tpu.memory_space<vmem>>, vector<4x128xf32>
    %c3_88 = arith.constant 3 : index
    %c384_89 = arith.constant 384 : index
    %110 = vector.load %arg1[%c3_88, %c384_89] : memref<4x1024xf32, #tpu.memory_space<vmem>>, vector<1x128xf32>
    %111 = vector.broadcast %110 : vector<1x128xf32> to vector<4x128xf32>
    %112 = arith.mulf %109, %111 : vector<4x128xf32>
    %113 = arith.addf %108, %112 : vector<4x128xf32>
    %c0_90 = arith.constant 0 : index
    %c512_91 = arith.constant 512 : index
    %114 = vector.load %arg8[%c0_90, %c512_91] : memref<16x1024xf32, #tpu.memory_space<vmem>>, vector<4x128xf32>
    %c0_92 = arith.constant 0 : index
    %c512_93 = arith.constant 512 : index
    %115 = vector.load %arg1[%c0_92, %c512_93] : memref<4x1024xf32, #tpu.memory_space<vmem>>, vector<1x128xf32>
    %116 = vector.broadcast %115 : vector<1x128xf32> to vector<4x128xf32>
    %117 = arith.mulf %114, %116 : vector<4x128xf32>
    %118 = arith.addf %113, %117 : vector<4x128xf32>
    %c4_94 = arith.constant 4 : index
    %c512_95 = arith.constant 512 : index
    %119 = vector.load %arg8[%c4_94, %c512_95] : memref<16x1024xf32, #tpu.memory_space<vmem>>, vector<4x128xf32>
    %c1_96 = arith.constant 1 : index
    %c512_97 = arith.constant 512 : index
    %120 = vector.load %arg1[%c1_96, %c512_97] : memref<4x1024xf32, #tpu.memory_space<vmem>>, vector<1x128xf32>
    %121 = vector.broadcast %120 : vector<1x128xf32> to vector<4x128xf32>
    %122 = arith.mulf %119, %121 : vector<4x128xf32>
    %123 = arith.addf %118, %122 : vector<4x128xf32>
    %c8_98 = arith.constant 8 : index
    %c512_99 = arith.constant 512 : index
    %124 = vector.load %arg8[%c8_98, %c512_99] : memref<16x1024xf32, #tpu.memory_space<vmem>>, vector<4x128xf32>
    %c2_100 = arith.constant 2 : index
    %c512_101 = arith.constant 512 : index
    %125 = vector.load %arg1[%c2_100, %c512_101] : memref<4x1024xf32, #tpu.memory_space<vmem>>, vector<1x128xf32>
    %126 = vector.broadcast %125 : vector<1x128xf32> to vector<4x128xf32>
    %127 = arith.mulf %124, %126 : vector<4x128xf32>
    %128 = arith.addf %123, %127 : vector<4x128xf32>
    %c12_102 = arith.constant 12 : index
    %c512_103 = arith.constant 512 : index
    %129 = vector.load %arg8[%c12_102, %c512_103] : memref<16x1024xf32, #tpu.memory_space<vmem>>, vector<4x128xf32>
    %c3_104 = arith.constant 3 : index
    %c512_105 = arith.constant 512 : index
    %130 = vector.load %arg1[%c3_104, %c512_105] : memref<4x1024xf32, #tpu.memory_space<vmem>>, vector<1x128xf32>
    %131 = vector.broadcast %130 : vector<1x128xf32> to vector<4x128xf32>
    %132 = arith.mulf %129, %131 : vector<4x128xf32>
    %133 = arith.addf %128, %132 : vector<4x128xf32>
    %c0_106 = arith.constant 0 : index
    %c640_107 = arith.constant 640 : index
    %134 = vector.load %arg8[%c0_106, %c640_107] : memref<16x1024xf32, #tpu.memory_space<vmem>>, vector<4x128xf32>
    %c0_108 = arith.constant 0 : index
    %c640_109 = arith.constant 640 : index
    %135 = vector.load %arg1[%c0_108, %c640_109] : memref<4x1024xf32, #tpu.memory_space<vmem>>, vector<1x128xf32>
    %136 = vector.broadcast %135 : vector<1x128xf32> to vector<4x128xf32>
    %137 = arith.mulf %134, %136 : vector<4x128xf32>
    %138 = arith.addf %133, %137 : vector<4x128xf32>
    %c4_110 = arith.constant 4 : index
    %c640_111 = arith.constant 640 : index
    %139 = vector.load %arg8[%c4_110, %c640_111] : memref<16x1024xf32, #tpu.memory_space<vmem>>, vector<4x128xf32>
    %c1_112 = arith.constant 1 : index
    %c640_113 = arith.constant 640 : index
    %140 = vector.load %arg1[%c1_112, %c640_113] : memref<4x1024xf32, #tpu.memory_space<vmem>>, vector<1x128xf32>
    %141 = vector.broadcast %140 : vector<1x128xf32> to vector<4x128xf32>
    %142 = arith.mulf %139, %141 : vector<4x128xf32>
    %143 = arith.addf %138, %142 : vector<4x128xf32>
    %c8_114 = arith.constant 8 : index
    %c640_115 = arith.constant 640 : index
    %144 = vector.load %arg8[%c8_114, %c640_115] : memref<16x1024xf32, #tpu.memory_space<vmem>>, vector<4x128xf32>
    %c2_116 = arith.constant 2 : index
    %c640_117 = arith.constant 640 : index
    %145 = vector.load %arg1[%c2_116, %c640_117] : memref<4x1024xf32, #tpu.memory_space<vmem>>, vector<1x128xf32>
    %146 = vector.broadcast %145 : vector<1x128xf32> to vector<4x128xf32>
    %147 = arith.mulf %144, %146 : vector<4x128xf32>
    %148 = arith.addf %143, %147 : vector<4x128xf32>
    %c12_118 = arith.constant 12 : index
    %c640_119 = arith.constant 640 : index
    %149 = vector.load %arg8[%c12_118, %c640_119] : memref<16x1024xf32, #tpu.memory_space<vmem>>, vector<4x128xf32>
    %c3_120 = arith.constant 3 : index
    %c640_121 = arith.constant 640 : index
    %150 = vector.load %arg1[%c3_120, %c640_121] : memref<4x1024xf32, #tpu.memory_space<vmem>>, vector<1x128xf32>
    %151 = vector.broadcast %150 : vector<1x128xf32> to vector<4x128xf32>
    %152 = arith.mulf %149, %151 : vector<4x128xf32>
    %153 = arith.addf %148, %152 : vector<4x128xf32>
    %c0_122 = arith.constant 0 : index
    %c768_123 = arith.constant 768 : index
    %154 = vector.load %arg8[%c0_122, %c768_123] : memref<16x1024xf32, #tpu.memory_space<vmem>>, vector<4x128xf32>
    %c0_124 = arith.constant 0 : index
    %c768_125 = arith.constant 768 : index
    %155 = vector.load %arg1[%c0_124, %c768_125] : memref<4x1024xf32, #tpu.memory_space<vmem>>, vector<1x128xf32>
    %156 = vector.broadcast %155 : vector<1x128xf32> to vector<4x128xf32>
    %157 = arith.mulf %154, %156 : vector<4x128xf32>
    %158 = arith.addf %153, %157 : vector<4x128xf32>
    %c4_126 = arith.constant 4 : index
    %c768_127 = arith.constant 768 : index
    %159 = vector.load %arg8[%c4_126, %c768_127] : memref<16x1024xf32, #tpu.memory_space<vmem>>, vector<4x128xf32>
    %c1_128 = arith.constant 1 : index
    %c768_129 = arith.constant 768 : index
    %160 = vector.load %arg1[%c1_128, %c768_129] : memref<4x1024xf32, #tpu.memory_space<vmem>>, vector<1x128xf32>
    %161 = vector.broadcast %160 : vector<1x128xf32> to vector<4x128xf32>
    %162 = arith.mulf %159, %161 : vector<4x128xf32>
    %163 = arith.addf %158, %162 : vector<4x128xf32>
    %c8_130 = arith.constant 8 : index
    %c768_131 = arith.constant 768 : index
    %164 = vector.load %arg8[%c8_130, %c768_131] : memref<16x1024xf32, #tpu.memory_space<vmem>>, vector<4x128xf32>
    %c2_132 = arith.constant 2 : index
    %c768_133 = arith.constant 768 : index
    %165 = vector.load %arg1[%c2_132, %c768_133] : memref<4x1024xf32, #tpu.memory_space<vmem>>, vector<1x128xf32>
    %166 = vector.broadcast %165 : vector<1x128xf32> to vector<4x128xf32>
    %167 = arith.mulf %164, %166 : vector<4x128xf32>
    %168 = arith.addf %163, %167 : vector<4x128xf32>
    %c12_134 = arith.constant 12 : index
    %c768_135 = arith.constant 768 : index
    %169 = vector.load %arg8[%c12_134, %c768_135] : memref<16x1024xf32, #tpu.memory_space<vmem>>, vector<4x128xf32>
    %c3_136 = arith.constant 3 : index
    %c768_137 = arith.constant 768 : index
    %170 = vector.load %arg1[%c3_136, %c768_137] : memref<4x1024xf32, #tpu.memory_space<vmem>>, vector<1x128xf32>
    %171 = vector.broadcast %170 : vector<1x128xf32> to vector<4x128xf32>
    %172 = arith.mulf %169, %171 : vector<4x128xf32>
    %173 = arith.addf %168, %172 : vector<4x128xf32>
    %c0_138 = arith.constant 0 : index
    %c896_139 = arith.constant 896 : index
    %174 = vector.load %arg8[%c0_138, %c896_139] : memref<16x1024xf32, #tpu.memory_space<vmem>>, vector<4x128xf32>
    %c0_140 = arith.constant 0 : index
    %c896_141 = arith.constant 896 : index
    %175 = vector.load %arg1[%c0_140, %c896_141] : memref<4x1024xf32, #tpu.memory_space<vmem>>, vector<1x128xf32>
    %176 = vector.broadcast %175 : vector<1x128xf32> to vector<4x128xf32>
    %177 = arith.mulf %174, %176 : vector<4x128xf32>
    %178 = arith.addf %173, %177 : vector<4x128xf32>
    %c4_142 = arith.constant 4 : index
    %c896_143 = arith.constant 896 : index
    %179 = vector.load %arg8[%c4_142, %c896_143] : memref<16x1024xf32, #tpu.memory_space<vmem>>, vector<4x128xf32>
    %c1_144 = arith.constant 1 : index
    %c896_145 = arith.constant 896 : index
    %180 = vector.load %arg1[%c1_144, %c896_145] : memref<4x1024xf32, #tpu.memory_space<vmem>>, vector<1x128xf32>
    %181 = vector.broadcast %180 : vector<1x128xf32> to vector<4x128xf32>
    %182 = arith.mulf %179, %181 : vector<4x128xf32>
    %183 = arith.addf %178, %182 : vector<4x128xf32>
    %c8_146 = arith.constant 8 : index
    %c896_147 = arith.constant 896 : index
    %184 = vector.load %arg8[%c8_146, %c896_147] : memref<16x1024xf32, #tpu.memory_space<vmem>>, vector<4x128xf32>
    %c2_148 = arith.constant 2 : index
    %c896_149 = arith.constant 896 : index
    %185 = vector.load %arg1[%c2_148, %c896_149] : memref<4x1024xf32, #tpu.memory_space<vmem>>, vector<1x128xf32>
    %186 = vector.broadcast %185 : vector<1x128xf32> to vector<4x128xf32>
    %187 = arith.mulf %184, %186 : vector<4x128xf32>
    %188 = arith.addf %183, %187 : vector<4x128xf32>
    %c12_150 = arith.constant 12 : index
    %c896_151 = arith.constant 896 : index
    %189 = vector.load %arg8[%c12_150, %c896_151] : memref<16x1024xf32, #tpu.memory_space<vmem>>, vector<4x128xf32>
    %c3_152 = arith.constant 3 : index
    %c896_153 = arith.constant 896 : index
    %190 = vector.load %arg1[%c3_152, %c896_153] : memref<4x1024xf32, #tpu.memory_space<vmem>>, vector<1x128xf32>
    %191 = vector.broadcast %190 : vector<1x128xf32> to vector<4x128xf32>
    %192 = arith.mulf %189, %191 : vector<4x128xf32>
    %193 = arith.addf %188, %192 : vector<4x128xf32>
    %194 = vector.extract_strided_slice %32 {offsets = [0, 0], sizes = [4, 1], strides = [1, 1]} : vector<8x1xf32> to vector<4x1xf32>
    %195 = vector.broadcast %194 : vector<4x1xf32> to vector<4x128xf32>
    %196 = arith.addf %193, %195 : vector<4x128xf32>
    %c0_154 = arith.constant 0 : index
    %c0_155 = arith.constant 0 : index
    %197 = vector.load %arg7[%c0_154, %c0_155] : memref<8x128xf32, #tpu.memory_space<vmem>>, vector<4x128xf32>
    tpu.vector_store %arg7[%c0_154, %c0_155], %196 {strides = array<i32>} : memref<8x128xf32, #tpu.memory_space<vmem>>, vector<4x128xf32>,
    %cst_156 = arith.constant 0.000000e+00 : f32
    %198 = vector.broadcast %cst_156 : f32 to vector<20x128xf32>
    %c0_157 = arith.constant 0 : index
    %c0_158 = arith.constant 0 : index
    %199 = vector.load %arg9[%c0_157, %c0_158] : memref<24x1024xf32, #tpu.memory_space<vmem>>, vector<1x128xf32>
    %200 = vector.shape_cast %199 : vector<1x128xf32> to vector<1x128xf32>
    %201 = vector.broadcast %200 : vector<1x128xf32> to vector<20x128xf32>
    %c0_159 = arith.constant 0 : index
    %c0_160 = arith.constant 0 : index
    %202 = vector.load %arg2[%c0_159, %c0_160] : memref<20x1024xf32, #tpu.memory_space<vmem>>, vector<20x128xf32>
    %203 = arith.mulf %202, %201 : vector<20x128xf32>
    %204 = arith.addf %198, %203 : vector<20x128xf32>
    %c0_161 = arith.constant 0 : index
    %c128_162 = arith.constant 128 : index
    %205 = vector.load %arg9[%c0_161, %c128_162] : memref<24x1024xf32, #tpu.memory_space<vmem>>, vector<1x128xf32>
    %206 = vector.shape_cast %205 : vector<1x128xf32> to vector<1x128xf32>
    %207 = vector.broadcast %206 : vector<1x128xf32> to vector<20x128xf32>
    %c0_163 = arith.constant 0 : index
    %c128_164 = arith.constant 128 : index
    %208 = vector.load %arg2[%c0_163, %c128_164] : memref<20x1024xf32, #tpu.memory_space<vmem>>, vector<20x128xf32>
    %209 = arith.mulf %208, %207 : vector<20x128xf32>
    %210 = arith.addf %204, %209 : vector<20x128xf32>
    %c0_165 = arith.constant 0 : index
    %c256_166 = arith.constant 256 : index
    %211 = vector.load %arg9[%c0_165, %c256_166] : memref<24x1024xf32, #tpu.memory_space<vmem>>, vector<1x128xf32>
    %212 = vector.shape_cast %211 : vector<1x128xf32> to vector<1x128xf32>
    %213 = vector.broadcast %212 : vector<1x128xf32> to vector<20x128xf32>
    %c0_167 = arith.constant 0 : index
    %c256_168 = arith.constant 256 : index
    %214 = vector.load %arg2[%c0_167, %c256_168] : memref<20x1024xf32, #tpu.memory_space<vmem>>, vector<20x128xf32>
    %215 = arith.mulf %214, %213 : vector<20x128xf32>
    %216 = arith.addf %210, %215 : vector<20x128xf32>
    %c0_169 = arith.constant 0 : index
    %c384_170 = arith.constant 384 : index
    %217 = vector.load %arg9[%c0_169, %c384_170] : memref<24x1024xf32, #tpu.memory_space<vmem>>, vector<1x128xf32>
    %218 = vector.shape_cast %217 : vector<1x128xf32> to vector<1x128xf32>
    %219 = vector.broadcast %218 : vector<1x128xf32> to vector<20x128xf32>
    %c0_171 = arith.constant 0 : index
    %c384_172 = arith.constant 384 : index
    %220 = vector.load %arg2[%c0_171, %c384_172] : memref<20x1024xf32, #tpu.memory_space<vmem>>, vector<20x128xf32>
    %221 = arith.mulf %220, %219 : vector<20x128xf32>
    %222 = arith.addf %216, %221 : vector<20x128xf32>
    %c0_173 = arith.constant 0 : index
    %c512_174 = arith.constant 512 : index
    %223 = vector.load %arg9[%c0_173, %c512_174] : memref<24x1024xf32, #tpu.memory_space<vmem>>, vector<1x128xf32>
    %224 = vector.shape_cast %223 : vector<1x128xf32> to vector<1x128xf32>
    %225 = vector.broadcast %224 : vector<1x128xf32> to vector<20x128xf32>
    %c0_175 = arith.constant 0 : index
    %c512_176 = arith.constant 512 : index
    %226 = vector.load %arg2[%c0_175, %c512_176] : memref<20x1024xf32, #tpu.memory_space<vmem>>, vector<20x128xf32>
    %227 = arith.mulf %226, %225 : vector<20x128xf32>
    %228 = arith.addf %222, %227 : vector<20x128xf32>
    %c0_177 = arith.constant 0 : index
    %c640_178 = arith.constant 640 : index
    %229 = vector.load %arg9[%c0_177, %c640_178] : memref<24x1024xf32, #tpu.memory_space<vmem>>, vector<1x128xf32>
    %230 = vector.shape_cast %229 : vector<1x128xf32> to vector<1x128xf32>
    %231 = vector.broadcast %230 : vector<1x128xf32> to vector<20x128xf32>
    %c0_179 = arith.constant 0 : index
    %c640_180 = arith.constant 640 : index
    %232 = vector.load %arg2[%c0_179, %c640_180] : memref<20x1024xf32, #tpu.memory_space<vmem>>, vector<20x128xf32>
    %233 = arith.mulf %232, %231 : vector<20x128xf32>
    %234 = arith.addf %228, %233 : vector<20x128xf32>
    %c0_181 = arith.constant 0 : index
    %c768_182 = arith.constant 768 : index
    %235 = vector.load %arg9[%c0_181, %c768_182] : memref<24x1024xf32, #tpu.memory_space<vmem>>, vector<1x128xf32>
    %236 = vector.shape_cast %235 : vector<1x128xf32> to vector<1x128xf32>
    %237 = vector.broadcast %236 : vector<1x128xf32> to vector<20x128xf32>
    %c0_183 = arith.constant 0 : index
    %c768_184 = arith.constant 768 : index
    %238 = vector.load %arg2[%c0_183, %c768_184] : memref<20x1024xf32, #tpu.memory_space<vmem>>, vector<20x128xf32>
    %239 = arith.mulf %238, %237 : vector<20x128xf32>
    %240 = arith.addf %234, %239 : vector<20x128xf32>
    %c0_185 = arith.constant 0 : index
    %c896_186 = arith.constant 896 : index
    %241 = vector.load %arg9[%c0_185, %c896_186] : memref<24x1024xf32, #tpu.memory_space<vmem>>, vector<1x128xf32>
    %242 = vector.shape_cast %241 : vector<1x128xf32> to vector<1x128xf32>
    %243 = vector.broadcast %242 : vector<1x128xf32> to vector<20x128xf32>
    %c0_187 = arith.constant 0 : index
    %c896_188 = arith.constant 896 : index
    %244 = vector.load %arg2[%c0_187, %c896_188] : memref<20x1024xf32, #tpu.memory_space<vmem>>, vector<20x128xf32>
    %245 = arith.mulf %244, %243 : vector<20x128xf32>
    %246 = arith.addf %240, %245 : vector<20x128xf32>
    %c0_189 = arith.constant 0 : index
    %c0_190 = arith.constant 0 : index
    %247 = vector.load %arg10[%c0_189, %c0_190] : memref<20x128xf32, #tpu.memory_space<vmem>>, vector<20x128xf32>
    %248 = arith.mulf %246, %247 : vector<20x128xf32>
    %cst_191 = arith.constant dense<0xFF800000> : vector<128xf32>
    %249 = vector.multi_reduction <maximumf>, %248, %cst_191 [0] : vector<20x128xf32> to vector<128xf32>
    %250 = vector.shape_cast %249 : vector<128xf32> to vector<1x128xf32>
    %251 = vector.extract_strided_slice %32 {offsets = [4, 0], sizes = [1, 1], strides = [1, 1]} : vector<8x1xf32> to vector<1x1xf32>
    %252 = vector.broadcast %251 : vector<1x1xf32> to vector<1x128xf32>
    %253 = arith.addf %250, %252 : vector<1x128xf32>
    %c4_192 = arith.constant 4 : index
    %c0_193 = arith.constant 0 : index
    %254 = vector.load %arg7[%c4_192, %c0_193] : memref<8x128xf32, #tpu.memory_space<vmem>>, vector<1x128xf32>
    tpu.vector_store %arg7[%c4_192, %c0_193], %253 {strides = array<i32>} : memref<8x128xf32, #tpu.memory_space<vmem>>, vector<1x128xf32>,
    %cst_194 = arith.constant 0.000000e+00 : f32
    %255 = vector.broadcast %cst_194 : f32 to vector<20x128xf32>
    %c1_195 = arith.constant 1 : index
    %c0_196 = arith.constant 0 : index
    %256 = vector.load %arg9[%c1_195, %c0_196] : memref<24x1024xf32, #tpu.memory_space<vmem>>, vector<1x128xf32>
    %257 = vector.shape_cast %256 : vector<1x128xf32> to vector<1x128xf32>
    %258 = vector.broadcast %257 : vector<1x128xf32> to vector<20x128xf32>
    %c0_197 = arith.constant 0 : index
    %c0_198 = arith.constant 0 : index
    %259 = vector.load %arg2[%c0_197, %c0_198] : memref<20x1024xf32, #tpu.memory_space<vmem>>, vector<20x128xf32>
    %260 = arith.mulf %259, %258 : vector<20x128xf32>
    %261 = arith.addf %255, %260 : vector<20x128xf32>
    %c1_199 = arith.constant 1 : index
    %c128_200 = arith.constant 128 : index
    %262 = vector.load %arg9[%c1_199, %c128_200] : memref<24x1024xf32, #tpu.memory_space<vmem>>, vector<1x128xf32>
    %263 = vector.shape_cast %262 : vector<1x128xf32> to vector<1x128xf32>
    %264 = vector.broadcast %263 : vector<1x128xf32> to vector<20x128xf32>
    %c0_201 = arith.constant 0 : index
    %c128_202 = arith.constant 128 : index
    %265 = vector.load %arg2[%c0_201, %c128_202] : memref<20x1024xf32, #tpu.memory_space<vmem>>, vector<20x128xf32>
    %266 = arith.mulf %265, %264 : vector<20x128xf32>
    %267 = arith.addf %261, %266 : vector<20x128xf32>
    %c1_203 = arith.constant 1 : index
    %c256_204 = arith.constant 256 : index
    %268 = vector.load %arg9[%c1_203, %c256_204] : memref<24x1024xf32, #tpu.memory_space<vmem>>, vector<1x128xf32>
    %269 = vector.shape_cast %268 : vector<1x128xf32> to vector<1x128xf32>
    %270 = vector.broadcast %269 : vector<1x128xf32> to vector<20x128xf32>
    %c0_205 = arith.constant 0 : index
    %c256_206 = arith.constant 256 : index
    %271 = vector.load %arg2[%c0_205, %c256_206] : memref<20x1024xf32, #tpu.memory_space<vmem>>, vector<20x128xf32>
    %272 = arith.mulf %271, %270 : vector<20x128xf32>
    %273 = arith.addf %267, %272 : vector<20x128xf32>
    %c1_207 = arith.constant 1 : index
    %c384_208 = arith.constant 384 : index
    %274 = vector.load %arg9[%c1_207, %c384_208] : memref<24x1024xf32, #tpu.memory_space<vmem>>, vector<1x128xf32>
    %275 = vector.shape_cast %274 : vector<1x128xf32> to vector<1x128xf32>
    %276 = vector.broadcast %275 : vector<1x128xf32> to vector<20x128xf32>
    %c0_209 = arith.constant 0 : index
    %c384_210 = arith.constant 384 : index
    %277 = vector.load %arg2[%c0_209, %c384_210] : memref<20x1024xf32, #tpu.memory_space<vmem>>, vector<20x128xf32>
    %278 = arith.mulf %277, %276 : vector<20x128xf32>
    %279 = arith.addf %273, %278 : vector<20x128xf32>
    %c1_211 = arith.constant 1 : index
    %c512_212 = arith.constant 512 : index
    %280 = vector.load %arg9[%c1_211, %c512_212] : memref<24x1024xf32, #tpu.memory_space<vmem>>, vector<1x128xf32>
    %281 = vector.shape_cast %280 : vector<1x128xf32> to vector<1x128xf32>
    %282 = vector.broadcast %281 : vector<1x128xf32> to vector<20x128xf32>
    %c0_213 = arith.constant 0 : index
    %c512_214 = arith.constant 512 : index
    %283 = vector.load %arg2[%c0_213, %c512_214] : memref<20x1024xf32, #tpu.memory_space<vmem>>, vector<20x128xf32>
    %284 = arith.mulf %283, %282 : vector<20x128xf32>
    %285 = arith.addf %279, %284 : vector<20x128xf32>
    %c1_215 = arith.constant 1 : index
    %c640_216 = arith.constant 640 : index
    %286 = vector.load %arg9[%c1_215, %c640_216] : memref<24x1024xf32, #tpu.memory_space<vmem>>, vector<1x128xf32>
    %287 = vector.shape_cast %286 : vector<1x128xf32> to vector<1x128xf32>
    %288 = vector.broadcast %287 : vector<1x128xf32> to vector<20x128xf32>
    %c0_217 = arith.constant 0 : index
    %c640_218 = arith.constant 640 : index
    %289 = vector.load %arg2[%c0_217, %c640_218] : memref<20x1024xf32, #tpu.memory_space<vmem>>, vector<20x128xf32>
    %290 = arith.mulf %289, %288 : vector<20x128xf32>
    %291 = arith.addf %285, %290 : vector<20x128xf32>
    %c1_219 = arith.constant 1 : index
    %c768_220 = arith.constant 768 : index
    %292 = vector.load %arg9[%c1_219, %c768_220] : memref<24x1024xf32, #tpu.memory_space<vmem>>, vector<1x128xf32>
    %293 = vector.shape_cast %292 : vector<1x128xf32> to vector<1x128xf32>
    %294 = vector.broadcast %293 : vector<1x128xf32> to vector<20x128xf32>
    %c0_221 = arith.constant 0 : index
    %c768_222 = arith.constant 768 : index
    %295 = vector.load %arg2[%c0_221, %c768_222] : memref<20x1024xf32, #tpu.memory_space<vmem>>, vector<20x128xf32>
    %296 = arith.mulf %295, %294 : vector<20x128xf32>
    %297 = arith.addf %291, %296 : vector<20x128xf32>
    %c1_223 = arith.constant 1 : index
    %c896_224 = arith.constant 896 : index
    %298 = vector.load %arg9[%c1_223, %c896_224] : memref<24x1024xf32, #tpu.memory_space<vmem>>, vector<1x128xf32>
    %299 = vector.shape_cast %298 : vector<1x128xf32> to vector<1x128xf32>
    %300 = vector.broadcast %299 : vector<1x128xf32> to vector<20x128xf32>
    %c0_225 = arith.constant 0 : index
    %c896_226 = arith.constant 896 : index
    %301 = vector.load %arg2[%c0_225, %c896_226] : memref<20x1024xf32, #tpu.memory_space<vmem>>, vector<20x128xf32>
    %302 = arith.mulf %301, %300 : vector<20x128xf32>
    %303 = arith.addf %297, %302 : vector<20x128xf32>
    %c0_227 = arith.constant 0 : index
    %c0_228 = arith.constant 0 : index
    %304 = vector.load %arg10[%c0_227, %c0_228] : memref<20x128xf32, #tpu.memory_space<vmem>>, vector<20x128xf32>
    %305 = arith.mulf %303, %304 : vector<20x128xf32>
    %cst_229 = arith.constant dense<0xFF800000> : vector<128xf32>
    %306 = vector.multi_reduction <maximumf>, %305, %cst_229 [0] : vector<20x128xf32> to vector<128xf32>
    %307 = vector.shape_cast %306 : vector<128xf32> to vector<1x128xf32>
    %308 = vector.extract_strided_slice %32 {offsets = [5, 0], sizes = [1, 1], strides = [1, 1]} : vector<8x1xf32> to vector<1x1xf32>
    %309 = vector.broadcast %308 : vector<1x1xf32> to vector<1x128xf32>
    %310 = arith.addf %307, %309 : vector<1x128xf32>
    %c5 = arith.constant 5 : index
    %c0_230 = arith.constant 0 : index
    %311 = vector.load %arg7[%c5, %c0_230] : memref<8x128xf32, #tpu.memory_space<vmem>>, vector<1x128xf32>
    tpu.vector_store %arg7[%c5, %c0_230], %310 {strides = array<i32>} : memref<8x128xf32, #tpu.memory_space<vmem>>, vector<1x128xf32>,
    %cst_231 = arith.constant 0.000000e+00 : f32
    %312 = vector.broadcast %cst_231 : f32 to vector<20x128xf32>
    %c2_232 = arith.constant 2 : index
    %c0_233 = arith.constant 0 : index
    %313 = vector.load %arg9[%c2_232, %c0_233] : memref<24x1024xf32, #tpu.memory_space<vmem>>, vector<1x128xf32>
    %314 = vector.shape_cast %313 : vector<1x128xf32> to vector<1x128xf32>
    %315 = vector.broadcast %314 : vector<1x128xf32> to vector<20x128xf32>
    %c0_234 = arith.constant 0 : index
    %c0_235 = arith.constant 0 : index
    %316 = vector.load %arg2[%c0_234, %c0_235] : memref<20x1024xf32, #tpu.memory_space<vmem>>, vector<20x128xf32>
    %317 = arith.mulf %316, %315 : vector<20x128xf32>
    %318 = arith.addf %312, %317 : vector<20x128xf32>
    %c2_236 = arith.constant 2 : index
    %c128_237 = arith.constant 128 : index
    %319 = vector.load %arg9[%c2_236, %c128_237] : memref<24x1024xf32, #tpu.memory_space<vmem>>, vector<1x128xf32>
    %320 = vector.shape_cast %319 : vector<1x128xf32> to vector<1x128xf32>
    %321 = vector.broadcast %320 : vector<1x128xf32> to vector<20x128xf32>
    %c0_238 = arith.constant 0 : index
    %c128_239 = arith.constant 128 : index
    %322 = vector.load %arg2[%c0_238, %c128_239] : memref<20x1024xf32, #tpu.memory_space<vmem>>, vector<20x128xf32>
    %323 = arith.mulf %322, %321 : vector<20x128xf32>
    %324 = arith.addf %318, %323 : vector<20x128xf32>
    %c2_240 = arith.constant 2 : index
    %c256_241 = arith.constant 256 : index
    %325 = vector.load %arg9[%c2_240, %c256_241] : memref<24x1024xf32, #tpu.memory_space<vmem>>, vector<1x128xf32>
    %326 = vector.shape_cast %325 : vector<1x128xf32> to vector<1x128xf32>
    %327 = vector.broadcast %326 : vector<1x128xf32> to vector<20x128xf32>
    %c0_242 = arith.constant 0 : index
    %c256_243 = arith.constant 256 : index
    %328 = vector.load %arg2[%c0_242, %c256_243] : memref<20x1024xf32, #tpu.memory_space<vmem>>, vector<20x128xf32>
    %329 = arith.mulf %328, %327 : vector<20x128xf32>
    %330 = arith.addf %324, %329 : vector<20x128xf32>
    %c2_244 = arith.constant 2 : index
    %c384_245 = arith.constant 384 : index
    %331 = vector.load %arg9[%c2_244, %c384_245] : memref<24x1024xf32, #tpu.memory_space<vmem>>, vector<1x128xf32>
    %332 = vector.shape_cast %331 : vector<1x128xf32> to vector<1x128xf32>
    %333 = vector.broadcast %332 : vector<1x128xf32> to vector<20x128xf32>
    %c0_246 = arith.constant 0 : index
    %c384_247 = arith.constant 384 : index
    %334 = vector.load %arg2[%c0_246, %c384_247] : memref<20x1024xf32, #tpu.memory_space<vmem>>, vector<20x128xf32>
    %335 = arith.mulf %334, %333 : vector<20x128xf32>
    %336 = arith.addf %330, %335 : vector<20x128xf32>
    %c2_248 = arith.constant 2 : index
    %c512_249 = arith.constant 512 : index
    %337 = vector.load %arg9[%c2_248, %c512_249] : memref<24x1024xf32, #tpu.memory_space<vmem>>, vector<1x128xf32>
    %338 = vector.shape_cast %337 : vector<1x128xf32> to vector<1x128xf32>
    %339 = vector.broadcast %338 : vector<1x128xf32> to vector<20x128xf32>
    %c0_250 = arith.constant 0 : index
    %c512_251 = arith.constant 512 : index
    %340 = vector.load %arg2[%c0_250, %c512_251] : memref<20x1024xf32, #tpu.memory_space<vmem>>, vector<20x128xf32>
    %341 = arith.mulf %340, %339 : vector<20x128xf32>
    %342 = arith.addf %336, %341 : vector<20x128xf32>
    %c2_252 = arith.constant 2 : index
    %c640_253 = arith.constant 640 : index
    %343 = vector.load %arg9[%c2_252, %c640_253] : memref<24x1024xf32, #tpu.memory_space<vmem>>, vector<1x128xf32>
    %344 = vector.shape_cast %343 : vector<1x128xf32> to vector<1x128xf32>
    %345 = vector.broadcast %344 : vector<1x128xf32> to vector<20x128xf32>
    %c0_254 = arith.constant 0 : index
    %c640_255 = arith.constant 640 : index
    %346 = vector.load %arg2[%c0_254, %c640_255] : memref<20x1024xf32, #tpu.memory_space<vmem>>, vector<20x128xf32>
    %347 = arith.mulf %346, %345 : vector<20x128xf32>
    %348 = arith.addf %342, %347 : vector<20x128xf32>
    %c2_256 = arith.constant 2 : index
    %c768_257 = arith.constant 768 : index
    %349 = vector.load %arg9[%c2_256, %c768_257] : memref<24x1024xf32, #tpu.memory_space<vmem>>, vector<1x128xf32>
    %350 = vector.shape_cast %349 : vector<1x128xf32> to vector<1x128xf32>
    %351 = vector.broadcast %350 : vector<1x128xf32> to vector<20x128xf32>
    %c0_258 = arith.constant 0 : index
    %c768_259 = arith.constant 768 : index
    %352 = vector.load %arg2[%c0_258, %c768_259] : memref<20x1024xf32, #tpu.memory_space<vmem>>, vector<20x128xf32>
    %353 = arith.mulf %352, %351 : vector<20x128xf32>
    %354 = arith.addf %348, %353 : vector<20x128xf32>
    %c2_260 = arith.constant 2 : index
    %c896_261 = arith.constant 896 : index
    %355 = vector.load %arg9[%c2_260, %c896_261] : memref<24x1024xf32, #tpu.memory_space<vmem>>, vector<1x128xf32>
    %356 = vector.shape_cast %355 : vector<1x128xf32> to vector<1x128xf32>
    %357 = vector.broadcast %356 : vector<1x128xf32> to vector<20x128xf32>
    %c0_262 = arith.constant 0 : index
    %c896_263 = arith.constant 896 : index
    %358 = vector.load %arg2[%c0_262, %c896_263] : memref<20x1024xf32, #tpu.memory_space<vmem>>, vector<20x128xf32>
    %359 = arith.mulf %358, %357 : vector<20x128xf32>
    %360 = arith.addf %354, %359 : vector<20x128xf32>
    %c0_264 = arith.constant 0 : index
    %c0_265 = arith.constant 0 : index
    %361 = vector.load %arg10[%c0_264, %c0_265] : memref<20x128xf32, #tpu.memory_space<vmem>>, vector<20x128xf32>
    %362 = arith.mulf %360, %361 : vector<20x128xf32>
    %cst_266 = arith.constant dense<0xFF800000> : vector<128xf32>
    %363 = vector.multi_reduction <maximumf>, %362, %cst_266 [0] : vector<20x128xf32> to vector<128xf32>
    %364 = vector.shape_cast %363 : vector<128xf32> to vector<1x128xf32>
    %365 = vector.extract_strided_slice %32 {offsets = [6, 0], sizes = [1, 1], strides = [1, 1]} : vector<8x1xf32> to vector<1x1xf32>
    %366 = vector.broadcast %365 : vector<1x1xf32> to vector<1x128xf32>
    %367 = arith.addf %364, %366 : vector<1x128xf32>
    %c6 = arith.constant 6 : index
    %c0_267 = arith.constant 0 : index
    %368 = vector.load %arg7[%c6, %c0_267] : memref<8x128xf32, #tpu.memory_space<vmem>>, vector<1x128xf32>
    tpu.vector_store %arg7[%c6, %c0_267], %367 {strides = array<i32>} : memref<8x128xf32, #tpu.memory_space<vmem>>, vector<1x128xf32>,
    %cst_268 = arith.constant 0.000000e+00 : f32
    %369 = vector.broadcast %cst_268 : f32 to vector<20x128xf32>
    %c3_269 = arith.constant 3 : index
    %c0_270 = arith.constant 0 : index
    %370 = vector.load %arg9[%c3_269, %c0_270] : memref<24x1024xf32, #tpu.memory_space<vmem>>, vector<1x128xf32>
    %371 = vector.shape_cast %370 : vector<1x128xf32> to vector<1x128xf32>
    %372 = vector.broadcast %371 : vector<1x128xf32> to vector<20x128xf32>
    %c0_271 = arith.constant 0 : index
    %c0_272 = arith.constant 0 : index
    %373 = vector.load %arg2[%c0_271, %c0_272] : memref<20x1024xf32, #tpu.memory_space<vmem>>, vector<20x128xf32>
    %374 = arith.mulf %373, %372 : vector<20x128xf32>
    %375 = arith.addf %369, %374 : vector<20x128xf32>
    %c3_273 = arith.constant 3 : index
    %c128_274 = arith.constant 128 : index
    %376 = vector.load %arg9[%c3_273, %c128_274] : memref<24x1024xf32, #tpu.memory_space<vmem>>, vector<1x128xf32>
    %377 = vector.shape_cast %376 : vector<1x128xf32> to vector<1x128xf32>
    %378 = vector.broadcast %377 : vector<1x128xf32> to vector<20x128xf32>
    %c0_275 = arith.constant 0 : index
    %c128_276 = arith.constant 128 : index
    %379 = vector.load %arg2[%c0_275, %c128_276] : memref<20x1024xf32, #tpu.memory_space<vmem>>, vector<20x128xf32>
    %380 = arith.mulf %379, %378 : vector<20x128xf32>
    %381 = arith.addf %375, %380 : vector<20x128xf32>
    %c3_277 = arith.constant 3 : index
    %c256_278 = arith.constant 256 : index
    %382 = vector.load %arg9[%c3_277, %c256_278] : memref<24x1024xf32, #tpu.memory_space<vmem>>, vector<1x128xf32>
    %383 = vector.shape_cast %382 : vector<1x128xf32> to vector<1x128xf32>
    %384 = vector.broadcast %383 : vector<1x128xf32> to vector<20x128xf32>
    %c0_279 = arith.constant 0 : index
    %c256_280 = arith.constant 256 : index
    %385 = vector.load %arg2[%c0_279, %c256_280] : memref<20x1024xf32, #tpu.memory_space<vmem>>, vector<20x128xf32>
    %386 = arith.mulf %385, %384 : vector<20x128xf32>
    %387 = arith.addf %381, %386 : vector<20x128xf32>
    %c3_281 = arith.constant 3 : index
    %c384_282 = arith.constant 384 : index
    %388 = vector.load %arg9[%c3_281, %c384_282] : memref<24x1024xf32, #tpu.memory_space<vmem>>, vector<1x128xf32>
    %389 = vector.shape_cast %388 : vector<1x128xf32> to vector<1x128xf32>
    %390 = vector.broadcast %389 : vector<1x128xf32> to vector<20x128xf32>
    %c0_283 = arith.constant 0 : index
    %c384_284 = arith.constant 384 : index
    %391 = vector.load %arg2[%c0_283, %c384_284] : memref<20x1024xf32, #tpu.memory_space<vmem>>, vector<20x128xf32>
    %392 = arith.mulf %391, %390 : vector<20x128xf32>
    %393 = arith.addf %387, %392 : vector<20x128xf32>
    %c3_285 = arith.constant 3 : index
    %c512_286 = arith.constant 512 : index
    %394 = vector.load %arg9[%c3_285, %c512_286] : memref<24x1024xf32, #tpu.memory_space<vmem>>, vector<1x128xf32>
    %395 = vector.shape_cast %394 : vector<1x128xf32> to vector<1x128xf32>
    %396 = vector.broadcast %395 : vector<1x128xf32> to vector<20x128xf32>
    %c0_287 = arith.constant 0 : index
    %c512_288 = arith.constant 512 : index
    %397 = vector.load %arg2[%c0_287, %c512_288] : memref<20x1024xf32, #tpu.memory_space<vmem>>, vector<20x128xf32>
    %398 = arith.mulf %397, %396 : vector<20x128xf32>
    %399 = arith.addf %393, %398 : vector<20x128xf32>
    %c3_289 = arith.constant 3 : index
    %c640_290 = arith.constant 640 : index
    %400 = vector.load %arg9[%c3_289, %c640_290] : memref<24x1024xf32, #tpu.memory_space<vmem>>, vector<1x128xf32>
    %401 = vector.shape_cast %400 : vector<1x128xf32> to vector<1x128xf32>
    %402 = vector.broadcast %401 : vector<1x128xf32> to vector<20x128xf32>
    %c0_291 = arith.constant 0 : index
    %c640_292 = arith.constant 640 : index
    %403 = vector.load %arg2[%c0_291, %c640_292] : memref<20x1024xf32, #tpu.memory_space<vmem>>, vector<20x128xf32>
    %404 = arith.mulf %403, %402 : vector<20x128xf32>
    %405 = arith.addf %399, %404 : vector<20x128xf32>
    %c3_293 = arith.constant 3 : index
    %c768_294 = arith.constant 768 : index
    %406 = vector.load %arg9[%c3_293, %c768_294] : memref<24x1024xf32, #tpu.memory_space<vmem>>, vector<1x128xf32>
    %407 = vector.shape_cast %406 : vector<1x128xf32> to vector<1x128xf32>
    %408 = vector.broadcast %407 : vector<1x128xf32> to vector<20x128xf32>
    %c0_295 = arith.constant 0 : index
    %c768_296 = arith.constant 768 : index
    %409 = vector.load %arg2[%c0_295, %c768_296] : memref<20x1024xf32, #tpu.memory_space<vmem>>, vector<20x128xf32>
    %410 = arith.mulf %409, %408 : vector<20x128xf32>
    %411 = arith.addf %405, %410 : vector<20x128xf32>
    %c3_297 = arith.constant 3 : index
    %c896_298 = arith.constant 896 : index
    %412 = vector.load %arg9[%c3_297, %c896_298] : memref<24x1024xf32, #tpu.memory_space<vmem>>, vector<1x128xf32>
    %413 = vector.shape_cast %412 : vector<1x128xf32> to vector<1x128xf32>
    %414 = vector.broadcast %413 : vector<1x128xf32> to vector<20x128xf32>
    %c0_299 = arith.constant 0 : index
    %c896_300 = arith.constant 896 : index
    %415 = vector.load %arg2[%c0_299, %c896_300] : memref<20x1024xf32, #tpu.memory_space<vmem>>, vector<20x128xf32>
    %416 = arith.mulf %415, %414 : vector<20x128xf32>
    %417 = arith.addf %411, %416 : vector<20x128xf32>
    %c0_301 = arith.constant 0 : index
    %c0_302 = arith.constant 0 : index
    %418 = vector.load %arg10[%c0_301, %c0_302] : memref<20x128xf32, #tpu.memory_space<vmem>>, vector<20x128xf32>
    %419 = arith.mulf %417, %418 : vector<20x128xf32>
    %cst_303 = arith.constant dense<0xFF800000> : vector<128xf32>
    %420 = vector.multi_reduction <maximumf>, %419, %cst_303 [0] : vector<20x128xf32> to vector<128xf32>
    %421 = vector.shape_cast %420 : vector<128xf32> to vector<1x128xf32>
    %422 = vector.extract_strided_slice %32 {offsets = [7, 0], sizes = [1, 1], strides = [1, 1]} : vector<8x1xf32> to vector<1x1xf32>
    %423 = vector.broadcast %422 : vector<1x1xf32> to vector<1x128xf32>
    %424 = arith.addf %421, %423 : vector<1x128xf32>
    %c7 = arith.constant 7 : index
    %c0_304 = arith.constant 0 : index
    %425 = vector.load %arg7[%c7, %c0_304] : memref<8x128xf32, #tpu.memory_space<vmem>>, vector<1x128xf32>
    tpu.vector_store %arg7[%c7, %c0_304], %424 {strides = array<i32>} : memref<8x128xf32, #tpu.memory_space<vmem>>, vector<1x128xf32>,
    return
  }
  func.func @transform_0(%arg0: i32) -> (i32, i32) {
    %c0_i32 = arith.constant 0 : i32
    %c0_i32_0 = arith.constant 0 : i32
    return %c0_i32, %arg0 : i32, i32
  }
  func.func @transform_1(%arg0: i32) -> (i32, i32) {
    %c0_i32 = arith.constant 0 : i32
    %c0_i32_0 = arith.constant 0 : i32
    return %c0_i32, %arg0 : i32, i32
  }
  func.func @transform_2(%arg0: i32) -> (i32, i32) {
    %c0_i32 = arith.constant 0 : i32
    %c0_i32_0 = arith.constant 0 : i32
    %c0_i32_1 = arith.constant 0 : i32
    return %c0_i32, %c0_i32_0 : i32, i32
  }
  func.func @transform_3(%arg0: i32) -> (i32, i32) {
    %c0_i32 = arith.constant 0 : i32
    %c0_i32_0 = arith.constant 0 : i32
    %c0_i32_1 = arith.constant 0 : i32
    return %c0_i32, %c0_i32_0 : i32, i32
  }
  func.func @transform_4(%arg0: i32) -> (i32, i32) {
    %c0_i32 = arith.constant 0 : i32
    %c0_i32_0 = arith.constant 0 : i32
    %c0_i32_1 = arith.constant 0 : i32
    return %c0_i32, %c0_i32_0 : i32, i32
  }
  func.func @transform_5(%arg0: i32) -> (i32, i32) {
    %c0_i32 = arith.constant 0 : i32
    %c0_i32_0 = arith.constant 0 : i32
    %c0_i32_1 = arith.constant 0 : i32
    return %c0_i32, %c0_i32_0 : i32, i32
  }
  func.func @transform_6(%arg0: i32) -> (i32, i32) {
    %c0_i32 = arith.constant 0 : i32
    %c0_i32_0 = arith.constant 0 : i32
    return %c0_i32, %arg0 : i32, i32
  }
}

</mosaic_0001>

<llo_original>
// kernel: tpu_custom_call.1
$region0: #{tpu_custom_call.1}
  #allocation0 [shape = 'u32[]', space=smem, size = 0x4, offset = 0x4, fixed_abs, tag = 'smem constant byte address 0x4 - core index']
  #allocation1 [shape = 'u32[144,128]{1,0:T(1,128)}', space=vmem, size = 0x12000, scoped, tag = 'internal scratch']
  #allocation2 [shape = 'f32[16,1024]{1,0:T(8,128)}', space=vmem, size = 0x10000, scoped, tag = 'scratch operand']
  #allocation3 [shape = 'f32[24,1024]{1,0:T(8,128)}', space=vmem, size = 0x18000, scoped, tag = 'scratch operand']
  #allocation4 [shape = 'f32[20,128]{1,0:T(8,128)}', space=vmem, size = 0x3000, scoped, tag = 'scratch operand']
  %s0 = inlined_call_operand.hbm [shape: f32[4,1024], index: 0, kind: input, shape index: {}]
  %s1 = inlined_call_operand.hbm [shape: f32[20,1024], index: 1, kind: input, shape index: {}]
  %s2 = inlined_call_operand.vmem [shape: f32[16,20], index: 2, kind: input, shape index: {}]
  %s3 = inlined_call_operand.vmem [shape: f32[4,4], index: 3, kind: input, shape index: {}]
  %s4 = inlined_call_operand.vmem [shape: f32[4,4], index: 4, kind: input, shape index: {}]
  %s5 = inlined_call_operand.vmem [shape: f32[8,1], index: 5, kind: input, shape index: {}]
  %s6 = inlined_call_operand.hbm [shape: f32[8,128], index: 6, kind: output, shape index: {}]
  %s7 = sld [smem:[#allocation0]]
  $region42: #{tpu_custom_call.1} parent=0
    _
  %s9 = ssub.s32 1, %s7
  %s10 = scalar_select 0, %s9, %s7
  $region1: #{tpu_custom_call.1} parent=0
    #allocation5 [shape = 'u8[16384]{0}', space=vmem, size = 0x4000, scoped, tag = 'input window, operand 0, single buffered']
    #allocation6 [shape = 's32[1]{0}', space=sflag, size = 0x4, scoped, tag = 'scoped memory for tpu_custom_call.1']
    #allocation7 [shape = 's32[1]{0}', space=sflag, size = 0x4, scoped, tag = 'scoped memory for tpu_custom_call.1']
    #allocation8 [shape = 'u8[98304]{0}', space=vmem, size = 0x18000, scoped, tag = 'input window, operand 1, single buffered']
    #allocation9 [shape = 's32[1]{0}', space=sflag, size = 0x4, scoped, tag = 'scoped memory for tpu_custom_call.1']
    #allocation10 [shape = 'u8[4096]{0}', space=vmem, size = 0x1000, scoped, tag = 'output window, operand 0, single buffered']
    %11 = vsyncpa [#allocation6], 0
    %12 = vsyncpa [#allocation9], 0
    %13 = vsyncpa [#allocation7], 0
    // Predicated region
    $region2: #{tpu_custom_call.1} parent=1 // pred_check
      _
    $region3: #{tpu_custom_call.1} parent=1 // pred_check_branch
      %15 = sbr.rel (0) target = $region5
    $region4: #{tpu_custom_call.1} parent=1 // pred_region
      %s17 = ssub.s32 512, 512
      %18 = vsyncadd [#allocation6], %s17
      %s20 = sshll.u32 [#allocation5], 4
      %s21 = int_to_ptr.vmem [resolvable:$true] %s20
      %23 = dma.hbm_to_vmem [thread:$0]  %s0, 512, %s21, [#allocation6]
    $region5: #{tpu_custom_call.1} parent=1 // pred_fallthru
      _
    // Predicated region
    $region6: #{tpu_custom_call.1} parent=1 // pred_check
      _
    $region7: #{tpu_custom_call.1} parent=1 // pred_check_branch
      %25 = sbr.rel (0) target = $region9
    $region8: #{tpu_custom_call.1} parent=1 // pred_region
      %s27 = ssub.s32 3072, 3072
      %28 = vsyncadd [#allocation9], %s27
      %s29 = sshll.u32 [#allocation8], 4
      %s30 = int_to_ptr.vmem [resolvable:$true] %s29
      %35 = dma.hbm_to_vmem [thread:$0]  %s1, 3072, %s30, [#allocation9], 1024, 1024, 64
    $region9: #{tpu_custom_call.1} parent=1 // pred_fallthru
      _
    // Predicated region
    $region10: #{tpu_custom_call.1} parent=1 // pred_check
      _
    $region11: #{tpu_custom_call.1} parent=1 // pred_check_branch
      %37 = sbr.rel (0) target = $region13
    $region12: #{tpu_custom_call.1} parent=1 // pred_region
      _
    $region13: #{tpu_custom_call.1} parent=1 // pred_fallthru
      _
    // Predicated region
    $region14: #{tpu_custom_call.1} parent=1 // pred_check
      _
    $region15: #{tpu_custom_call.1} parent=1 // pred_check_branch
      %39 = sbr.rel (0) target = $region17
    $region16: #{tpu_custom_call.1} parent=1 // pred_region
      _
    $region17: #{tpu_custom_call.1} parent=1 // pred_fallthru
      _
    // Predicated region
    $region18: #{tpu_custom_call.1} parent=1 // pred_check
      _
    $region19: #{tpu_custom_call.1} parent=1 // pred_check_branch
      %41 = sbr.rel (0) target = $region21
    $region20: #{tpu_custom_call.1} parent=1 // pred_region
      _
    $region21: #{tpu_custom_call.1} parent=1 // pred_fallthru
      _
    // Predicated region
    $region22: #{tpu_custom_call.1} parent=1 // pred_check
      _
    $region23: #{tpu_custom_call.1} parent=1 // pred_check_branch
      %43 = sbr.rel (0) target = $region25
    $region24: #{tpu_custom_call.1} parent=1 // pred_region
      _
    $region25: #{tpu_custom_call.1} parent=1 // pred_fallthru
      _
    // Predicated region
    $region26: #{tpu_custom_call.1} parent=1 // pred_check
      _
    $region27: #{tpu_custom_call.1} parent=1 // pred_check_branch
      %45 = sbr.rel (0) target = $region29
    $region28: #{tpu_custom_call.1} parent=1 // pred_region
      %46 = dma.done [#allocation6], 512
    $region29: #{tpu_custom_call.1} parent=1 // pred_fallthru
      _
    // Predicated region
    $region30: #{tpu_custom_call.1} parent=1 // pred_check
      _
    $region31: #{tpu_custom_call.1} parent=1 // pred_check_branch
      %48 = sbr.rel (0) target = $region33
    $region32: #{tpu_custom_call.1} parent=1 // pred_region
      %49 = dma.done [#allocation9], 3072
    $region33: #{tpu_custom_call.1} parent=1 // pred_fallthru
      _
    %v50 = vld [vmem:[%s2] sm:$0xff]
    %v51 = vld [vmem:[%s2 + $0x8] sm:$0xff]
    %v52 = vld [vmem:[#allocation8] sm:$0xff]
    %v53 = vld [vmem:[#allocation8 + $0x8] sm:$0xff]
    %v54 = vld [vmem:[#allocation8 + $0x10] sm:$0xff]
    %v55 = vld [vmem:[#allocation8 + $0x18] sm:$0xff]
    %v56 = vld [vmem:[#allocation8 + $0x20] sm:$0xff]
    %v57 = vld [vmem:[#allocation8 + $0x28] sm:$0xff]
    %v58 = vld [vmem:[#allocation8 + $0x30] sm:$0xff]
    %v59 = vld [vmem:[#allocation8 + $0x38] sm:$0xff]
    %v60 = vld [vmem:[#allocation8 + $0x40] sm:$0xff]
    %v61 = vld [vmem:[#allocation8 + $0x48] sm:$0xff]
    %v62 = vld [vmem:[#allocation8 + $0x50] sm:$0xff]
    %v63 = vld [vmem:[#allocation8 + $0x58] sm:$0xff]
    %v64 = vld [vmem:[#allocation8 + $0x60] sm:$0xff]
    %v65 = vld [vmem:[#allocation8 + $0x68] sm:$0xff]
    %v66 = vld [vmem:[#allocation8 + $0x70] sm:$0xff]
    %v67 = vld [vmem:[#allocation8 + $0x78] sm:$0xff]
    %v68 = vld [vmem:[#allocation8 + $0x80] sm:$0xf]
    %v69 = vld [vmem:[#allocation8 + $0x88] sm:$0xf]
    %v70 = vld [vmem:[#allocation8 + $0x90] sm:$0xf]
    %v71 = vld [vmem:[#allocation8 + $0x98] sm:$0xf]
    %v72 = vld [vmem:[#allocation8 + $0xa0] sm:$0xf]
    %v73 = vld [vmem:[#allocation8 + $0xa8] sm:$0xf]
    %v74 = vld [vmem:[#allocation8 + $0xb0] sm:$0xf]
    %v75 = vld [vmem:[#allocation8 + $0xb8] sm:$0xf]
    %vm76 = vcmask 162816
    %v78 = vsel %vm76, %v50, 0
    %v81 = vsel %vm76, %v51, 0
    %vm83 = vcmask 1043456
    %v85 = vsel %vm83, %v68, 0
    %v88 = vsel %vm83, %v69, 0
    %v91 = vsel %vm83, %v70, 0
    %v94 = vsel %vm83, %v71, 0
    %v97 = vsel %vm83, %v72, 0
    %v100 = vsel %vm83, %v73, 0
    %v103 = vsel %vm83, %v74, 0
    %v106 = vsel %vm83, %v75, 0
    %108 = vmatprep.subr.mxu0 %v53
    %109 = vmatpush1.msra.mxu0 %v52
    %110 = vmatprep.subr.mxu0 %v61
    %111 = vmatpush1.msra.mxu0 %v60
    %112 = vmatprep.subr.mxu0 %v88
    %113 = vmatpush1.msra.mxu0 %v85
    %114 = vmatprep.subr.mxu0 0.0
    %115 = vmatpush1.msra.mxu0 0.0
    %116 = vmatprep.subr.mxu0 0.0
    %117 = vmatpush1.msra.mxu0 0.0
    %118 = vmatprep.subr.mxu0 0.0
    %119 = vmatpush1.msra.mxu0 0.0
    %120 = vmatprep.subr.mxu0 0.0
    %121 = vmatpush1.msra.mxu0 0.0
    %122 = vmatprep.subr.mxu0 0.0
    %123 = vmatpush1.msra.mxu0 0.0
    %124 = vmatprep.subr.mxu0 0.0
    %125 = vmatpush1.msra.mxu0 0.0
    %126 = vmatprep.subr.mxu0 0.0
    %127 = vmatpush1.msra.mxu0 0.0
    %128 = vmatprep.subr.mxu0 0.0
    %129 = vmatpush1.msra.mxu0 0.0
    %130 = vmatprep.subr.mxu0 0.0
    %131 = vmatpush1.msra.mxu0 0.0
    %132 = vmatprep.subr.mxu0 0.0
    %133 = vmatpush1.msra.mxu0 0.0
    %134 = vmatprep.subr.mxu0 0.0
    %135 = vmatpush1.msra.mxu0 0.0
    %136 = vmatprep.subr.mxu0 0.0
    %137 = vmatpush1.msra.mxu0 0.0
    %138 = vmatprep.subr.mxu0 0.0
    %139 = vmatpush1.msra.mxu0 0.0
    %140 = vmatprep.subr.mxu0 0.0
    %141 = vmatpush1.msra.mxu0 0.0
    %142 = vmatprep.subr.mxu0 0.0
    %143 = vmatpush1.msra.mxu0 0.0
    %144 = vmatprep.subr.mxu0 0.0
    %145 = vmatpush1.msra.mxu0 0.0
    %146 = vmatprep.subr.mxu0 0.0
    %147 = vmatpush1.msra.mxu0 0.0
    %148 = vmatprep.subr.mxu0 0.0
    %149 = vmatpush1.msra.mxu0 0.0
    %150 = vmatprep.subr.mxu0 0.0
    %151 = vmatpush1.msra.mxu0 0.0
    %152 = vmatprep.subr.mxu0 0.0
    %153 = vmatpush1.msra.mxu0 0.0
    %154 = vmatprep.subr.mxu0 0.0
    %155 = vmatpush1.msra.mxu0 0.0
    %156 = vmatprep.subr.mxu0 0.0
    %157 = vmatpush1.msra.mxu0 0.0
    %158 = vmatprep.subr.mxu0 0.0
    %159 = vmatpush1.msra.mxu0 0.0
    %160 = vmatprep.subr.mxu0 0.0
    %161 = vmatpush1.msra.mxu0 0.0
    %162 = vmatprep.subr.mxu0 0.0
    %163 = vmatpush1.msra.mxu0 0.0
    %164 = vmatprep.subr.mxu0 0.0
    %165 = vmatpush1.msra.mxu0 0.0
    %166 = vmatprep.subr.mxu0 0.0
    %167 = vmatpush1.msra.mxu0 0.0
    %168 = vmatprep.subr.mxu0 0.0
    %169 = vmatpush1.msra.mxu0 0.0
    %170 = vmatprep.subr.mxu0 0.0
    %171 = vmatpush1.msra.mxu0 0.0
    %172 = vmatprep.mubr.f32.mxu0 0.0
    %173 = vmatmul.mubr.f32.gmra.mrb[0].mxu0 %v78
    %v174 = vpop.f32.mrb[0].mxu0
    %v175 = vadd.f32 0.0, %v174
    %v176 = vpop.f32.mrb[0].mxu0
    %v177 = vadd.f32 0.0, %v176
    %178 = vmatprep.mubr.f32.mxu0 0.0
    %179 = vmatmul.mubr.f32.gmra.mrb[0].mxu0 %v81
    %v180 = vpop.f32.mrb[0].mxu0
    %v181 = vadd.f32 0.0, %v180
    %v182 = vpop.f32.mrb[0].mxu0
    %v183 = vadd.f32 0.0, %v182
    %184 = vdwg.mxu0
    %185 = vmatprep.subr.mxu0 %v55
    %186 = vmatpush1.msra.mxu0 %v54
    %187 = vmatprep.subr.mxu0 %v63
    %188 = vmatpush1.msra.mxu0 %v62
    %189 = vmatprep.subr.mxu0 %v94
    %190 = vmatpush1.msra.mxu0 %v91
    %191 = vmatprep.subr.mxu0 0.0
    %192 = vmatpush1.msra.mxu0 0.0
    %193 = vmatprep.subr.mxu0 0.0
    %194 = vmatpush1.msra.mxu0 0.0
    %195 = vmatprep.subr.mxu0 0.0
    %196 = vmatpush1.msra.mxu0 0.0
    %197 = vmatprep.subr.mxu0 0.0
    %198 = vmatpush1.msra.mxu0 0.0
    %199 = vmatprep.subr.mxu0 0.0
    %200 = vmatpush1.msra.mxu0 0.0
    %201 = vmatprep.subr.mxu0 0.0
    %202 = vmatpush1.msra.mxu0 0.0
    %203 = vmatprep.subr.mxu0 0.0
    %204 = vmatpush1.msra.mxu0 0.0
    %205 = vmatprep.subr.mxu0 0.0
    %206 = vmatpush1.msra.mxu0 0.0
    %207 = vmatprep.subr.mxu0 0.0
    %208 = vmatpush1.msra.mxu0 0.0
    %209 = vmatprep.subr.mxu0 0.0
    %210 = vmatpush1.msra.mxu0 0.0
    %211 = vmatprep.subr.mxu0 0.0
    %212 = vmatpush1.msra.mxu0 0.0
    %213 = vmatprep.subr.mxu0 0.0
    %214 = vmatpush1.msra.mxu0 0.0
    %215 = vmatprep.subr.mxu0 0.0
    %216 = vmatpush1.msra.mxu0 0.0
    %217 = vmatprep.subr.mxu0 0.0
    %218 = vmatpush1.msra.mxu0 0.0
    %219 = vmatprep.subr.mxu0 0.0
    %220 = vmatpush1.msra.mxu0 0.0
    %221 = vmatprep.subr.mxu0 0.0
    %222 = vmatpush1.msra.mxu0 0.0
    %223 = vmatprep.subr.mxu0 0.0
    %224 = vmatpush1.msra.mxu0 0.0
    %225 = vmatprep.subr.mxu0 0.0
    %226 = vmatpush1.msra.mxu0 0.0
    %227 = vmatprep.subr.mxu0 0.0
    %228 = vmatpush1.msra.mxu0 0.0
    %229 = vmatprep.subr.mxu0 0.0
    %230 = vmatpush1.msra.mxu0 0.0
    %231 = vmatprep.subr.mxu0 0.0
    %232 = vmatpush1.msra.mxu0 0.0
    %233 = vmatprep.subr.mxu0 0.0
    %234 = vmatpush1.msra.mxu0 0.0
    %235 = vmatprep.subr.mxu0 0.0
    %236 = vmatpush1.msra.mxu0 0.0
    %237 = vmatprep.subr.mxu0 0.0
    %238 = vmatpush1.msra.mxu0 0.0
    %239 = vmatprep.subr.mxu0 0.0
    %240 = vmatpush1.msra.mxu0 0.0
    %241 = vmatprep.subr.mxu0 0.0
    %242 = vmatpush1.msra.mxu0 0.0
    %243 = vmatprep.subr.mxu0 0.0
    %244 = vmatpush1.msra.mxu0 0.0
    %245 = vmatprep.subr.mxu0 0.0
    %246 = vmatpush1.msra.mxu0 0.0
    %247 = vmatprep.subr.mxu0 0.0
    %248 = vmatpush1.msra.mxu0 0.0
    %249 = vmatprep.mubr.f32.mxu0 0.0
    %250 = vmatmul.mubr.f32.gmra.mrb[0].mxu0 %v78
    %v251 = vpop.f32.mrb[0].mxu0
    %v252 = vadd.f32 0.0, %v251
    %v253 = vpop.f32.mrb[0].mxu0
    %v254 = vadd.f32 0.0, %v253
    %255 = vmatprep.mubr.f32.mxu0 0.0
    %256 = vmatmul.mubr.f32.gmra.mrb[0].mxu0 %v81
    %v257 = vpop.f32.mrb[0].mxu0
    %v258 = vadd.f32 0.0, %v257
    %v259 = vpop.f32.mrb[0].mxu0
    %v260 = vadd.f32 0.0, %v259
    %261 = vdwg.mxu0
    %262 = vmatprep.subr.mxu0 %v57
    %263 = vmatpush1.msra.mxu0 %v56
    %264 = vmatprep.subr.mxu0 %v65
    %265 = vmatpush1.msra.mxu0 %v64
    %266 = vmatprep.subr.mxu0 %v100
    %267 = vmatpush1.msra.mxu0 %v97
    %268 = vmatprep.subr.mxu0 0.0
    %269 = vmatpush1.msra.mxu0 0.0
    %270 = vmatprep.subr.mxu0 0.0
    %271 = vmatpush1.msra.mxu0 0.0
    %272 = vmatprep.subr.mxu0 0.0
    %273 = vmatpush1.msra.mxu0 0.0
    %274 = vmatprep.subr.mxu0 0.0
    %275 = vmatpush1.msra.mxu0 0.0
    %276 = vmatprep.subr.mxu0 0.0
    %277 = vmatpush1.msra.mxu0 0.0
    %278 = vmatprep.subr.mxu0 0.0
    %279 = vmatpush1.msra.mxu0 0.0
    %280 = vmatprep.subr.mxu0 0.0
    %281 = vmatpush1.msra.mxu0 0.0
    %282 = vmatprep.subr.mxu0 0.0
    %283 = vmatpush1.msra.mxu0 0.0
    %284 = vmatprep.subr.mxu0 0.0
    %285 = vmatpush1.msra.mxu0 0.0
    %286 = vmatprep.subr.mxu0 0.0
    %287 = vmatpush1.msra.mxu0 0.0
    %288 = vmatprep.subr.mxu0 0.0
    %289 = vmatpush1.msra.mxu0 0.0
    %290 = vmatprep.subr.mxu0 0.0
    %291 = vmatpush1.msra.mxu0 0.0
    %292 = vmatprep.subr.mxu0 0.0
    %293 = vmatpush1.msra.mxu0 0.0
    %294 = vmatprep.subr.mxu0 0.0
    %295 = vmatpush1.msra.mxu0 0.0
    %296 = vmatprep.subr.mxu0 0.0
    %297 = vmatpush1.msra.mxu0 0.0
    %298 = vmatprep.subr.mxu0 0.0
    %299 = vmatpush1.msra.mxu0 0.0
    %300 = vmatprep.subr.mxu0 0.0
    %301 = vmatpush1.msra.mxu0 0.0
    %302 = vmatprep.subr.mxu0 0.0
    %303 = vmatpush1.msra.mxu0 0.0
    %304 = vmatprep.subr.mxu0 0.0
    %305 = vmatpush1.msra.mxu0 0.0
    %306 = vmatprep.subr.mxu0 0.0
    %307 = vmatpush1.msra.mxu0 0.0
    %308 = vmatprep.subr.mxu0 0.0
    %309 = vmatpush1.msra.mxu0 0.0
    %310 = vmatprep.subr.mxu0 0.0
    %311 = vmatpush1.msra.mxu0 0.0
    %312 = vmatprep.subr.mxu0 0.0
    %313 = vmatpush1.msra.mxu0 0.0
    %314 = vmatprep.subr.mxu0 0.0
    %315 = vmatpush1.msra.mxu0 0.0
    %316 = vmatprep.subr.mxu0 0.0
    %317 = vmatpush1.msra.mxu0 0.0
    %318 = vmatprep.subr.mxu0 0.0
    %319 = vmatpush1.msra.mxu0 0.0
    %320 = vmatprep.subr.mxu0 0.0
    %321 = vmatpush1.msra.mxu0 0.0
    %322 = vmatprep.subr.mxu0 0.0
    %323 = vmatpush1.msra.mxu0 0.0
    %324 = vmatprep.subr.mxu0 0.0
    %325 = vmatpush1.msra.mxu0 0.0
    %326 = vmatprep.mubr.f32.mxu0 0.0
    %327 = vmatmul.mubr.f32.gmra.mrb[0].mxu0 %v78
    %v328 = vpop.f32.mrb[0].mxu0
    %v329 = vadd.f32 0.0, %v328
    %v330 = vpop.f32.mrb[0].mxu0
    %v331 = vadd.f32 0.0, %v330
    %332 = vmatprep.mubr.f32.mxu0 0.0
    %333 = vmatmul.mubr.f32.gmra.mrb[0].mxu0 %v81
    %v334 = vpop.f32.mrb[0].mxu0
    %v335 = vadd.f32 0.0, %v334
    %v336 = vpop.f32.mrb[0].mxu0
    %v337 = vadd.f32 0.0, %v336
    %338 = vdwg.mxu0
    %339 = vmatprep.subr.mxu0 %v59
    %340 = vmatpush1.msra.mxu0 %v58
    %341 = vmatprep.subr.mxu0 %v67
    %342 = vmatpush1.msra.mxu0 %v66
    %343 = vmatprep.subr.mxu0 %v106
    %344 = vmatpush1.msra.mxu0 %v103
    %345 = vmatprep.subr.mxu0 0.0
    %346 = vmatpush1.msra.mxu0 0.0
    %347 = vmatprep.subr.mxu0 0.0
    %348 = vmatpush1.msra.mxu0 0.0
    %349 = vmatprep.subr.mxu0 0.0
    %350 = vmatpush1.msra.mxu0 0.0
    %351 = vmatprep.subr.mxu0 0.0
    %352 = vmatpush1.msra.mxu0 0.0
    %353 = vmatprep.subr.mxu0 0.0
    %354 = vmatpush1.msra.mxu0 0.0
    %355 = vmatprep.subr.mxu0 0.0
    %356 = vmatpush1.msra.mxu0 0.0
    %357 = vmatprep.subr.mxu0 0.0
    %358 = vmatpush1.msra.mxu0 0.0
    %359 = vmatprep.subr.mxu0 0.0
    %360 = vmatpush1.msra.mxu0 0.0
    %361 = vmatprep.subr.mxu0 0.0
    %362 = vmatpush1.msra.mxu0 0.0
    %363 = vmatprep.subr.mxu0 0.0
    %364 = vmatpush1.msra.mxu0 0.0
    %365 = vmatprep.subr.mxu0 0.0
    %366 = vmatpush1.msra.mxu0 0.0
    %367 = vmatprep.subr.mxu0 0.0
    %368 = vmatpush1.msra.mxu0 0.0
    %369 = vmatprep.subr.mxu0 0.0
    %370 = vmatpush1.msra.mxu0 0.0
    %371 = vmatprep.subr.mxu0 0.0
    %372 = vmatpush1.msra.mxu0 0.0
    %373 = vmatprep.subr.mxu0 0.0
    %374 = vmatpush1.msra.mxu0 0.0
    %375 = vmatprep.subr.mxu0 0.0
    %376 = vmatpush1.msra.mxu0 0.0
    %377 = vmatprep.subr.mxu0 0.0
    %378 = vmatpush1.msra.mxu0 0.0
    %379 = vmatprep.subr.mxu0 0.0
    %380 = vmatpush1.msra.mxu0 0.0
    %381 = vmatprep.subr.mxu0 0.0
    %382 = vmatpush1.msra.mxu0 0.0
    %383 = vmatprep.subr.mxu0 0.0
    %384 = vmatpush1.msra.mxu0 0.0
    %385 = vmatprep.subr.mxu0 0.0
    %386 = vmatpush1.msra.mxu0 0.0
    %387 = vmatprep.subr.mxu0 0.0
    %388 = vmatpush1.msra.mxu0 0.0
    %389 = vmatprep.subr.mxu0 0.0
    %390 = vmatpush1.msra.mxu0 0.0
    %391 = vmatprep.subr.mxu0 0.0
    %392 = vmatpush1.msra.mxu0 0.0
    %393 = vmatprep.subr.mxu0 0.0
    %394 = vmatpush1.msra.mxu0 0.0
    %395 = vmatprep.subr.mxu0 0.0
    %396 = vmatpush1.msra.mxu0 0.0
    %397 = vmatprep.subr.mxu0 0.0
    %398 = vmatpush1.msra.mxu0 0.0
    %399 = vmatprep.subr.mxu0 0.0
    %400 = vmatpush1.msra.mxu0 0.0
    %401 = vmatprep.subr.mxu0 0.0
    %402 = vmatpush1.msra.mxu0 0.0
    %403 = vmatprep.mubr.f32.mxu0 0.0
    %404 = vmatmul.mubr.f32.gmra.mrb[0].mxu0 %v78
    %v405 = vpop.f32.mrb[0].mxu0
    %v406 = vadd.f32 0.0, %v405
    %v407 = vpop.f32.mrb[0].mxu0
    %v408 = vadd.f32 0.0, %v407
    %409 = vmatprep.mubr.f32.mxu0 0.0
    %410 = vmatmul.mubr.f32.gmra.mrb[0].mxu0 %v81
    %v411 = vpop.f32.mrb[0].mxu0
    %v412 = vadd.f32 0.0, %v411
    %v413 = vpop.f32.mrb[0].mxu0
    %v414 = vadd.f32 0.0, %v413
    %415 = vdwg.mxu0
    %416 = vst [vmem:[#allocation2] sm:$0xff] %v175
    %417 = vst [vmem:[#allocation2 + $0x8] sm:$0xff] %v177
    %418 = vst [vmem:[#allocation2 + $0x10] sm:$0xff] %v252
    %419 = vst [vmem:[#allocation2 + $0x18] sm:$0xff] %v254
    %420 = vst [vmem:[#allocation2 + $0x20] sm:$0xff] %v329
    %421 = vst [vmem:[#allocation2 + $0x28] sm:$0xff] %v331
    %422 = vst [vmem:[#allocation2 + $0x30] sm:$0xff] %v406
    %423 = vst [vmem:[#allocation2 + $0x38] sm:$0xff] %v408
    %424 = vst [vmem:[#allocation2 + $0x40] sm:$0xff] %v181
    %425 = vst [vmem:[#allocation2 + $0x48] sm:$0xff] %v183
    %426 = vst [vmem:[#allocation2 + $0x50] sm:$0xff] %v258
    %427 = vst [vmem:[#allocation2 + $0x58] sm:$0xff] %v260
    %428 = vst [vmem:[#allocation2 + $0x60] sm:$0xff] %v335
    %429 = vst [vmem:[#allocation2 + $0x68] sm:$0xff] %v337
    %430 = vst [vmem:[#allocation2 + $0x70] sm:$0xff] %v412
    %431 = vst [vmem:[#allocation2 + $0x78] sm:$0xff] %v414
    %v432 = vld [vmem:[%s4] sm:$0xf]
    %v433 = vld [vmem:[#allocation5] sm:$0xf]
    %vm434 = vcmask 31744
    %v436 = vsel %vm434, %v432, 0
    %v439 = vsel %vm83, %v433, 0
    %441 = vmatprep.subr.mxu0 0.0
    %442 = vmatpush1.msra.mxu0 %v439
    %443 = vmatprep.subr.mxu0 0.0
    %444 = vmatpush1.msra.mxu0 0.0
    %445 = vmatprep.subr.mxu0 0.0
    %446 = vmatpush1.msra.mxu0 0.0
    %447 = vmatprep.subr.mxu0 0.0
    %448 = vmatpush1.msra.mxu0 0.0
    %449 = vmatprep.subr.mxu0 0.0
    %450 = vmatpush1.msra.mxu0 0.0
    %451 = vmatprep.subr.mxu0 0.0
    %452 = vmatpush1.msra.mxu0 0.0
    %453 = vmatprep.subr.mxu0 0.0
    %454 = vmatpush1.msra.mxu0 0.0
    %455 = vmatprep.subr.mxu0 0.0
    %456 = vmatpush1.msra.mxu0 0.0
    %457 = vmatprep.subr.mxu0 0.0
    %458 = vmatpush1.msra.mxu0 0.0
    %459 = vmatprep.subr.mxu0 0.0
    %460 = vmatpush1.msra.mxu0 0.0
    %461 = vmatprep.subr.mxu0 0.0
    %462 = vmatpush1.msra.mxu0 0.0
    %463 = vmatprep.subr.mxu0 0.0
    %464 = vmatpush1.msra.mxu0 0.0
    %465 = vmatprep.subr.mxu0 0.0
    %466 = vmatpush1.msra.mxu0 0.0
    %467 = vmatprep.subr.mxu0 0.0
    %468 = vmatpush1.msra.mxu0 0.0
    %469 = vmatprep.subr.mxu0 0.0
    %470 = vmatpush1.msra.mxu0 0.0
    %471 = vmatprep.subr.mxu0 0.0
    %472 = vmatpush1.msra.mxu0 0.0
    %473 = vmatprep.subr.mxu0 0.0
    %474 = vmatpush1.msra.mxu0 0.0
    %475 = vmatprep.subr.mxu0 0.0
    %476 = vmatpush1.msra.mxu0 0.0
    %477 = vmatprep.subr.mxu0 0.0
    %478 = vmatpush1.msra.mxu0 0.0
    %479 = vmatprep.subr.mxu0 0.0
    %480 = vmatpush1.msra.mxu0 0.0
    %481 = vmatprep.subr.mxu0 0.0
    %482 = vmatpush1.msra.mxu0 0.0
    %483 = vmatprep.subr.mxu0 0.0
    %484 = vmatpush1.msra.mxu0 0.0
    %485 = vmatprep.subr.mxu0 0.0
    %486 = vmatpush1.msra.mxu0 0.0
    %487 = vmatprep.subr.mxu0 0.0
    %488 = vmatpush1.msra.mxu0 0.0
    %489 = vmatprep.subr.mxu0 0.0
    %490 = vmatpush1.msra.mxu0 0.0
    %491 = vmatprep.subr.mxu0 0.0
    %492 = vmatpush1.msra.mxu0 0.0
    %493 = vmatprep.subr.mxu0 0.0
    %494 = vmatpush1.msra.mxu0 0.0
    %495 = vmatprep.subr.mxu0 0.0
    %496 = vmatpush1.msra.mxu0 0.0
    %497 = vmatprep.subr.mxu0 0.0
    %498 = vmatpush1.msra.mxu0 0.0
    %499 = vmatprep.subr.mxu0 0.0
    %500 = vmatpush1.msra.mxu0 0.0
    %501 = vmatprep.subr.mxu0 0.0
    %502 = vmatpush1.msra.mxu0 0.0
    %503 = vmatprep.subr.mxu0 0.0
    %504 = vmatpush1.msra.mxu0 0.0
    %505 = vmatprep.mubr.f32.mxu0 0.0
    %506 = vmatmul.mubr.f32.gmra.mrb[0].mxu0 %v436
    %v507 = vpop.f32.mrb[0].mxu0
    %v508 = vadd.f32 0.0, %v507
    %v509 = vpop.f32.mrb[0].mxu0
    %510 = vdwg.mxu0
    %v511 = vld [vmem:[%s3] sm:$0xf]
    %v512 = vld [vmem:[#allocation5] sm:$0xff]
    %v513 = vld [vmem:[#allocation5 + $0x8] sm:$0xff]
    %v514 = vld [vmem:[#allocation5 + $0x10] sm:$0xff]
    %v515 = vld [vmem:[#allocation5 + $0x18] sm:$0xff]
    %v520 = vcombine.high %v512, %v512
    %v521 = vcombine.high %v513, %v513
    %v522 = vcombine.high %v514, %v514
    %v523 = vcombine.high %v515, %v515
    %v525 = vsel %vm434, %v511, 0
    %v527 = vsel %vm83, %v512, 0
    %v529 = vsel %vm83, %v520, 0
    %v531 = vsel %vm83, %v513, 0
    %v533 = vsel %vm83, %v521, 0
    %v535 = vsel %vm83, %v514, 0
    %v537 = vsel %vm83, %v522, 0
    %v539 = vsel %vm83, %v515, 0
    %v541 = vsel %vm83, %v523, 0
    %543 = vmatprep.subr.mxu0 %v529
    %544 = vmatpush1.msra.mxu0 %v527
    %545 = vmatprep.subr.mxu0 0.0
    %546 = vmatpush1.msra.mxu0 0.0
    %547 = vmatprep.subr.mxu0 0.0
    %548 = vmatpush1.msra.mxu0 0.0
    %549 = vmatprep.subr.mxu0 0.0
    %550 = vmatpush1.msra.mxu0 0.0
    %551 = vmatprep.subr.mxu0 0.0
    %552 = vmatpush1.msra.mxu0 0.0
    %553 = vmatprep.subr.mxu0 0.0
    %554 = vmatpush1.msra.mxu0 0.0
    %555 = vmatprep.subr.mxu0 0.0
    %556 = vmatpush1.msra.mxu0 0.0
    %557 = vmatprep.subr.mxu0 0.0
    %558 = vmatpush1.msra.mxu0 0.0
    %559 = vmatprep.subr.mxu0 0.0
    %560 = vmatpush1.msra.mxu0 0.0
    %561 = vmatprep.subr.mxu0 0.0
    %562 = vmatpush1.msra.mxu0 0.0
    %563 = vmatprep.subr.mxu0 0.0
    %564 = vmatpush1.msra.mxu0 0.0
    %565 = vmatprep.subr.mxu0 0.0
    %566 = vmatpush1.msra.mxu0 0.0
    %567 = vmatprep.subr.mxu0 0.0
    %568 = vmatpush1.msra.mxu0 0.0
    %569 = vmatprep.subr.mxu0 0.0
    %570 = vmatpush1.msra.mxu0 0.0
    %571 = vmatprep.subr.mxu0 0.0
    %572 = vmatpush1.msra.mxu0 0.0
    %573 = vmatprep.subr.mxu0 0.0
    %574 = vmatpush1.msra.mxu0 0.0
    %575 = vmatprep.subr.mxu0 0.0
    %576 = vmatpush1.msra.mxu0 0.0
    %577 = vmatprep.subr.mxu0 0.0
    %578 = vmatpush1.msra.mxu0 0.0
    %579 = vmatprep.subr.mxu0 0.0
    %580 = vmatpush1.msra.mxu0 0.0
    %581 = vmatprep.subr.mxu0 0.0
    %582 = vmatpush1.msra.mxu0 0.0
    %583 = vmatprep.subr.mxu0 0.0
    %584 = vmatpush1.msra.mxu0 0.0
    %585 = vmatprep.subr.mxu0 0.0
    %586 = vmatpush1.msra.mxu0 0.0
    %587 = vmatprep.subr.mxu0 0.0
    %588 = vmatpush1.msra.mxu0 0.0
    %589 = vmatprep.subr.mxu0 0.0
    %590 = vmatpush1.msra.mxu0 0.0
    %591 = vmatprep.subr.mxu0 0.0
    %592 = vmatpush1.msra.mxu0 0.0
    %593 = vmatprep.subr.mxu0 0.0
    %594 = vmatpush1.msra.mxu0 0.0
    %595 = vmatprep.subr.mxu0 0.0
    %596 = vmatpush1.msra.mxu0 0.0
    %597 = vmatprep.subr.mxu0 0.0
    %598 = vmatpush1.msra.mxu0 0.0
    %599 = vmatprep.subr.mxu0 0.0
    %600 = vmatpush1.msra.mxu0 0.0
    %601 = vmatprep.subr.mxu0 0.0
    %602 = vmatpush1.msra.mxu0 0.0
    %603 = vmatprep.subr.mxu0 0.0
    %604 = vmatpush1.msra.mxu0 0.0
    %605 = vmatprep.subr.mxu0 0.0
    %606 = vmatpush1.msra.mxu0 0.0
    %607 = vmatprep.mubr.f32.mxu0 0.0
    %608 = vmatmul.mubr.f32.gmra.mrb[0].mxu0 %v525
    %v609 = vpop.f32.mrb[0].mxu0
    %v610 = vadd.f32 %v508, %v609
    %v611 = vpop.f32.mrb[0].mxu0
    %v612 = vadd.f32 %v508, %v611
    %613 = vdwg.mxu0
    %614 = vmatprep.subr.mxu0 %v533
    %615 = vmatpush1.msra.mxu0 %v531
    %616 = vmatprep.subr.mxu0 0.0
    %617 = vmatpush1.msra.mxu0 0.0
    %618 = vmatprep.subr.mxu0 0.0
    %619 = vmatpush1.msra.mxu0 0.0
    %620 = vmatprep.subr.mxu0 0.0
    %621 = vmatpush1.msra.mxu0 0.0
    %622 = vmatprep.subr.mxu0 0.0
    %623 = vmatpush1.msra.mxu0 0.0
    %624 = vmatprep.subr.mxu0 0.0
    %625 = vmatpush1.msra.mxu0 0.0
    %626 = vmatprep.subr.mxu0 0.0
    %627 = vmatpush1.msra.mxu0 0.0
    %628 = vmatprep.subr.mxu0 0.0
    %629 = vmatpush1.msra.mxu0 0.0
    %630 = vmatprep.subr.mxu0 0.0
    %631 = vmatpush1.msra.mxu0 0.0
    %632 = vmatprep.subr.mxu0 0.0
    %633 = vmatpush1.msra.mxu0 0.0
    %634 = vmatprep.subr.mxu0 0.0
    %635 = vmatpush1.msra.mxu0 0.0
    %636 = vmatprep.subr.mxu0 0.0
    %637 = vmatpush1.msra.mxu0 0.0
    %638 = vmatprep.subr.mxu0 0.0
    %639 = vmatpush1.msra.mxu0 0.0
    %640 = vmatprep.subr.mxu0 0.0
    %641 = vmatpush1.msra.mxu0 0.0
    %642 = vmatprep.subr.mxu0 0.0
    %643 = vmatpush1.msra.mxu0 0.0
    %644 = vmatprep.subr.mxu0 0.0
    %645 = vmatpush1.msra.mxu0 0.0
    %646 = vmatprep.subr.mxu0 0.0
    %647 = vmatpush1.msra.mxu0 0.0
    %648 = vmatprep.subr.mxu0 0.0
    %649 = vmatpush1.msra.mxu0 0.0
    %650 = vmatprep.subr.mxu0 0.0
    %651 = vmatpush1.msra.mxu0 0.0
    %652 = vmatprep.subr.mxu0 0.0
    %653 = vmatpush1.msra.mxu0 0.0
    %654 = vmatprep.subr.mxu0 0.0
    %655 = vmatpush1.msra.mxu0 0.0
    %656 = vmatprep.subr.mxu0 0.0
    %657 = vmatpush1.msra.mxu0 0.0
    %658 = vmatprep.subr.mxu0 0.0
    %659 = vmatpush1.msra.mxu0 0.0
    %660 = vmatprep.subr.mxu0 0.0
    %661 = vmatpush1.msra.mxu0 0.0
    %662 = vmatprep.subr.mxu0 0.0
    %663 = vmatpush1.msra.mxu0 0.0
    %664 = vmatprep.subr.mxu0 0.0
    %665 = vmatpush1.msra.mxu0 0.0
    %666 = vmatprep.subr.mxu0 0.0
    %667 = vmatpush1.msra.mxu0 0.0
    %668 = vmatprep.subr.mxu0 0.0
    %669 = vmatpush1.msra.mxu0 0.0
    %670 = vmatprep.subr.mxu0 0.0
    %671 = vmatpush1.msra.mxu0 0.0
    %672 = vmatprep.subr.mxu0 0.0
    %673 = vmatpush1.msra.mxu0 0.0
    %674 = vmatprep.subr.mxu0 0.0
    %675 = vmatpush1.msra.mxu0 0.0
    %676 = vmatprep.subr.mxu0 0.0
    %677 = vmatpush1.msra.mxu0 0.0
    %678 = vmatprep.mubr.f32.mxu0 0.0
    %679 = vmatmul.mubr.f32.gmra.mrb[0].mxu0 %v525
    %v680 = vpop.f32.mrb[0].mxu0
    %v681 = vadd.f32 %v508, %v680
    %v682 = vpop.f32.mrb[0].mxu0
    %v683 = vadd.f32 %v508, %v682
    %684 = vdwg.mxu0
    %685 = vmatprep.subr.mxu0 %v537
    %686 = vmatpush1.msra.mxu0 %v535
    %687 = vmatprep.subr.mxu0 0.0
    %688 = vmatpush1.msra.mxu0 0.0
    %689 = vmatprep.subr.mxu0 0.0
    %690 = vmatpush1.msra.mxu0 0.0
    %691 = vmatprep.subr.mxu0 0.0
    %692 = vmatpush1.msra.mxu0 0.0
    %693 = vmatprep.subr.mxu0 0.0
    %694 = vmatpush1.msra.mxu0 0.0
    %695 = vmatprep.subr.mxu0 0.0
    %696 = vmatpush1.msra.mxu0 0.0
    %697 = vmatprep.subr.mxu0 0.0
    %698 = vmatpush1.msra.mxu0 0.0
    %699 = vmatprep.subr.mxu0 0.0
    %700 = vmatpush1.msra.mxu0 0.0
    %701 = vmatprep.subr.mxu0 0.0
    %702 = vmatpush1.msra.mxu0 0.0
    %703 = vmatprep.subr.mxu0 0.0
    %704 = vmatpush1.msra.mxu0 0.0
    %705 = vmatprep.subr.mxu0 0.0
    %706 = vmatpush1.msra.mxu0 0.0
    %707 = vmatprep.subr.mxu0 0.0
    %708 = vmatpush1.msra.mxu0 0.0
    %709 = vmatprep.subr.mxu0 0.0
    %710 = vmatpush1.msra.mxu0 0.0
    %711 = vmatprep.subr.mxu0 0.0
    %712 = vmatpush1.msra.mxu0 0.0
    %713 = vmatprep.subr.mxu0 0.0
    %714 = vmatpush1.msra.mxu0 0.0
    %715 = vmatprep.subr.mxu0 0.0
    %716 = vmatpush1.msra.mxu0 0.0
    %717 = vmatprep.subr.mxu0 0.0
    %718 = vmatpush1.msra.mxu0 0.0
    %719 = vmatprep.subr.mxu0 0.0
    %720 = vmatpush1.msra.mxu0 0.0
    %721 = vmatprep.subr.mxu0 0.0
    %722 = vmatpush1.msra.mxu0 0.0
    %723 = vmatprep.subr.mxu0 0.0
    %724 = vmatpush1.msra.mxu0 0.0
    %725 = vmatprep.subr.mxu0 0.0
    %726 = vmatpush1.msra.mxu0 0.0
    %727 = vmatprep.subr.mxu0 0.0
    %728 = vmatpush1.msra.mxu0 0.0
    %729 = vmatprep.subr.mxu0 0.0
    %730 = vmatpush1.msra.mxu0 0.0
    %731 = vmatprep.subr.mxu0 0.0
    %732 = vmatpush1.msra.mxu0 0.0
    %733 = vmatprep.subr.mxu0 0.0
    %734 = vmatpush1.msra.mxu0 0.0
    %735 = vmatprep.subr.mxu0 0.0
    %736 = vmatpush1.msra.mxu0 0.0
    %737 = vmatprep.subr.mxu0 0.0
    %738 = vmatpush1.msra.mxu0 0.0
    %739 = vmatprep.subr.mxu0 0.0
    %740 = vmatpush1.msra.mxu0 0.0
    %741 = vmatprep.subr.mxu0 0.0
    %742 = vmatpush1.msra.mxu0 0.0
    %743 = vmatprep.subr.mxu0 0.0
    %744 = vmatpush1.msra.mxu0 0.0
    %745 = vmatprep.subr.mxu0 0.0
    %746 = vmatpush1.msra.mxu0 0.0
    %747 = vmatprep.subr.mxu0 0.0
    %748 = vmatpush1.msra.mxu0 0.0
    %749 = vmatprep.mubr.f32.mxu0 0.0
    %750 = vmatmul.mubr.f32.gmra.mrb[0].mxu0 %v525
    %v751 = vpop.f32.mrb[0].mxu0
    %v752 = vadd.f32 %v508, %v751
    %v753 = vpop.f32.mrb[0].mxu0
    %v754 = vadd.f32 %v508, %v753
    %755 = vdwg.mxu0
    %756 = vmatprep.subr.mxu0 %v541
    %757 = vmatpush1.msra.mxu0 %v539
    %758 = vmatprep.subr.mxu0 0.0
    %759 = vmatpush1.msra.mxu0 0.0
    %760 = vmatprep.subr.mxu0 0.0
    %761 = vmatpush1.msra.mxu0 0.0
    %762 = vmatprep.subr.mxu0 0.0
    %763 = vmatpush1.msra.mxu0 0.0
    %764 = vmatprep.subr.mxu0 0.0
    %765 = vmatpush1.msra.mxu0 0.0
    %766 = vmatprep.subr.mxu0 0.0
    %767 = vmatpush1.msra.mxu0 0.0
    %768 = vmatprep.subr.mxu0 0.0
    %769 = vmatpush1.msra.mxu0 0.0
    %770 = vmatprep.subr.mxu0 0.0
    %771 = vmatpush1.msra.mxu0 0.0
    %772 = vmatprep.subr.mxu0 0.0
    %773 = vmatpush1.msra.mxu0 0.0
    %774 = vmatprep.subr.mxu0 0.0
    %775 = vmatpush1.msra.mxu0 0.0
    %776 = vmatprep.subr.mxu0 0.0
    %777 = vmatpush1.msra.mxu0 0.0
    %778 = vmatprep.subr.mxu0 0.0
    %779 = vmatpush1.msra.mxu0 0.0
    %780 = vmatprep.subr.mxu0 0.0
    %781 = vmatpush1.msra.mxu0 0.0
    %782 = vmatprep.subr.mxu0 0.0
    %783 = vmatpush1.msra.mxu0 0.0
    %784 = vmatprep.subr.mxu0 0.0
    %785 = vmatpush1.msra.mxu0 0.0
    %786 = vmatprep.subr.mxu0 0.0
    %787 = vmatpush1.msra.mxu0 0.0
    %788 = vmatprep.subr.mxu0 0.0
    %789 = vmatpush1.msra.mxu0 0.0
    %790 = vmatprep.subr.mxu0 0.0
    %791 = vmatpush1.msra.mxu0 0.0
    %792 = vmatprep.subr.mxu0 0.0
    %793 = vmatpush1.msra.mxu0 0.0
    %794 = vmatprep.subr.mxu0 0.0
    %795 = vmatpush1.msra.mxu0 0.0
    %796 = vmatprep.subr.mxu0 0.0
    %797 = vmatpush1.msra.mxu0 0.0
    %798 = vmatprep.subr.mxu0 0.0
    %799 = vmatpush1.msra.mxu0 0.0
    %800 = vmatprep.subr.mxu0 0.0
    %801 = vmatpush1.msra.mxu0 0.0
    %802 = vmatprep.subr.mxu0 0.0
    %803 = vmatpush1.msra.mxu0 0.0
    %804 = vmatprep.subr.mxu0 0.0
    %805 = vmatpush1.msra.mxu0 0.0
    %806 = vmatprep.subr.mxu0 0.0
    %807 = vmatpush1.msra.mxu0 0.0
    %808 = vmatprep.subr.mxu0 0.0
    %809 = vmatpush1.msra.mxu0 0.0
    %810 = vmatprep.subr.mxu0 0.0
    %811 = vmatpush1.msra.mxu0 0.0
    %812 = vmatprep.subr.mxu0 0.0
    %813 = vmatpush1.msra.mxu0 0.0
    %814 = vmatprep.subr.mxu0 0.0
    %815 = vmatpush1.msra.mxu0 0.0
    %816 = vmatprep.subr.mxu0 0.0
    %817 = vmatpush1.msra.mxu0 0.0
    %818 = vmatprep.subr.mxu0 0.0
    %819 = vmatpush1.msra.mxu0 0.0
    %820 = vmatprep.mubr.f32.mxu0 0.0
    %821 = vmatmul.mubr.f32.gmra.mrb[0].mxu0 %v525
    %v822 = vpop.f32.mrb[0].mxu0
    %v823 = vadd.f32 %v508, %v822
    %v824 = vpop.f32.mrb[0].mxu0
    %v825 = vadd.f32 %v508, %v824
    %826 = vdwg.mxu0
    %827 = vst [vmem:[#allocation3] sm:$0xf] %v610
    %828 = vst [vmem:[#allocation3 + $0x8] sm:$0xf] %v612
    %829 = vst [vmem:[#allocation3 + $0x10] sm:$0xf] %v681
    %830 = vst [vmem:[#allocation3 + $0x18] sm:$0xf] %v683
    %831 = vst [vmem:[#allocation3 + $0x20] sm:$0xf] %v752
    %832 = vst [vmem:[#allocation3 + $0x28] sm:$0xf] %v754
    %833 = vst [vmem:[#allocation3 + $0x30] sm:$0xf] %v823
    %834 = vst [vmem:[#allocation3 + $0x38] sm:$0xf] %v825
    %v835 = vld [vmem:[#allocation8] sm:$0xff]
    %v836 = vld [vmem:[#allocation8 + $0x40] sm:$0xff]
    %v837 = vld [vmem:[#allocation8 + $0x80] sm:$0xf]
    %v838 = vld [vmem:[#allocation8 + $0x8] sm:$0xff]
    %v839 = vld [vmem:[#allocation8 + $0x48] sm:$0xff]
    %v840 = vld [vmem:[#allocation8 + $0x88] sm:$0xf]
    %v841 = vadd.f32 %v835, %v838
    %v842 = vadd.f32 %v836, %v839
    %v843 = vadd.f32 %v837, %v840
    %v844 = vld [vmem:[#allocation8 + $0x10] sm:$0xff]
    %v845 = vld [vmem:[#allocation8 + $0x50] sm:$0xff]
    %v846 = vld [vmem:[#allocation8 + $0x90] sm:$0xf]
    %v847 = vadd.f32 %v841, %v844
    %v848 = vadd.f32 %v842, %v845
    %v849 = vadd.f32 %v843, %v846
    %v850 = vld [vmem:[#allocation8 + $0x18] sm:$0xff]
    %v851 = vld [vmem:[#allocation8 + $0x58] sm:$0xff]
    %v852 = vld [vmem:[#allocation8 + $0x98] sm:$0xf]
    %v853 = vadd.f32 %v847, %v850
    %v854 = vadd.f32 %v848, %v851
    %v855 = vadd.f32 %v849, %v852
    %v856 = vld [vmem:[#allocation8 + $0x20] sm:$0xff]
    %v857 = vld [vmem:[#allocation8 + $0x60] sm:$0xff]
    %v858 = vld [vmem:[#allocation8 + $0xa0] sm:$0xf]
    %v859 = vadd.f32 %v853, %v856
    %v860 = vadd.f32 %v854, %v857
    %v861 = vadd.f32 %v855, %v858
    %v862 = vld [vmem:[#allocation8 + $0x28] sm:$0xff]
    %v863 = vld [vmem:[#allocation8 + $0x68] sm:$0xff]
    %v864 = vld [vmem:[#allocation8 + $0xa8] sm:$0xf]
    %v865 = vadd.f32 %v859, %v862
    %v866 = vadd.f32 %v860, %v863
    %v867 = vadd.f32 %v861, %v864
    %v868 = vld [vmem:[#allocation8 + $0x30] sm:$0xff]
    %v869 = vld [vmem:[#allocation8 + $0x70] sm:$0xff]
    %v870 = vld [vmem:[#allocation8 + $0xb0] sm:$0xf]
    %v871 = vadd.f32 %v865, %v868
    %v872 = vadd.f32 %v866, %v869
    %v873 = vadd.f32 %v867, %v870
    %v874 = vld [vmem:[#allocation8 + $0x38] sm:$0xff]
    %v875 = vld [vmem:[#allocation8 + $0x78] sm:$0xff]
    %v876 = vld [vmem:[#allocation8 + $0xb8] sm:$0xf]
    %v877 = vadd.f32 %v871, %v874
    %v878 = vadd.f32 %v872, %v875
    %v879 = vadd.f32 %v873, %v876
    %v880 = vadd.f32 %v877, 1e-06
    %v881 = vadd.f32 %v878, 1e-06
    %v882 = vadd.f32 %v879, 1e-06
    %v883 = vrcp.pop %v880
    %v884 = vrcp.pop %v881
    %v885 = vrcp.pop %v882
    %886 = vst [vmem:[#allocation4] sm:$0xff] %v883
    %887 = vst [vmem:[#allocation4 + $0x8] sm:$0xff] %v884
    %888 = vst [vmem:[#allocation4 + $0x10] sm:$0xf] %v885
    %v889 = vld [vmem:[%s5] sm:$0xff]
    %v890 = vld [vmem:[#allocation2] sm:$0xf]
    %v891 = vld [vmem:[#allocation5] sm:$0x1]
    %v892 = vlaneseq
    %v893 = vshrl.u32 %v892, 7
    %v894 = vsub.s32 0, %v893
    %v895 = vrot.slane %v891, %v894
    %v896 = vmul.f32 %v890, %v895
    %v897 = vadd.f32 %v896, 0.0
    %v898 = vld [vmem:[#allocation2] sm:$0xf0]
    %v899 = vld [vmem:[#allocation5 + $0x1] sm:$0x1]
    %v900 = vlaneseq
    %v901 = vshrl.u32 %v900, 7
    %v902 = vsub.s32 0, %v901
    %v903 = vrot.slane %v899, %v902
    %v904 = vmul.f32 %v898, %v903
    %v906 = vrot.slane %v904, 4
    %v908 = vadd.f32 %v897, %v906
    %v909 = vld [vmem:[#allocation2 + $0x40] sm:$0xf]
    %v910 = vld [vmem:[#allocation5 + $0x2] sm:$0x1]
    %v911 = vlaneseq
    %v912 = vshrl.u32 %v911, 7
    %v913 = vsub.s32 0, %v912
    %v914 = vrot.slane %v910, %v913
    %v915 = vmul.f32 %v909, %v914
    %v916 = vadd.f32 %v908, %v915
    %v917 = vld [vmem:[#allocation2 + $0x40] sm:$0xf0]
    %v918 = vld [vmem:[#allocation5 + $0x3] sm:$0x1]
    %v919 = vlaneseq
    %v920 = vshrl.u32 %v919, 7
    %v921 = vsub.s32 0, %v920
    %v922 = vrot.slane %v918, %v921
    %v923 = vmul.f32 %v917, %v922
    %v925 = vrot.slane %v923, 4
    %v927 = vadd.f32 %v916, %v925
    %v928 = vld [vmem:[#allocation2 + $0x8] sm:$0xf]
    %v929 = vld [vmem:[#allocation5 + $0x4] sm:$0x1]
    %v930 = vlaneseq
    %v931 = vshrl.u32 %v930, 7
    %v932 = vsub.s32 0, %v931
    %v933 = vrot.slane %v929, %v932
    %v934 = vmul.f32 %v928, %v933
    %v935 = vadd.f32 %v927, %v934
    %v936 = vld [vmem:[#allocation2 + $0x8] sm:$0xf0]
    %v937 = vld [vmem:[#allocation5 + $0x5] sm:$0x1]
    %v938 = vlaneseq
    %v939 = vshrl.u32 %v938, 7
    %v940 = vsub.s32 0, %v939
    %v941 = vrot.slane %v937, %v940
    %v942 = vmul.f32 %v936, %v941
    %v944 = vrot.slane %v942, 4
    %v946 = vadd.f32 %v935, %v944
    %v947 = vld [vmem:[#allocation2 + $0x48] sm:$0xf]
    %v948 = vld [vmem:[#allocation5 + $0x6] sm:$0x1]
    %v949 = vlaneseq
    %v950 = vshrl.u32 %v949, 7
    %v951 = vsub.s32 0, %v950
    %v952 = vrot.slane %v948, %v951
    %v953 = vmul.f32 %v947, %v952
    %v954 = vadd.f32 %v946, %v953
    %v955 = vld [vmem:[#allocation2 + $0x48] sm:$0xf0]
    %v956 = vld [vmem:[#allocation5 + $0x7] sm:$0x1]
    %v957 = vlaneseq
    %v958 = vshrl.u32 %v957, 7
    %v959 = vsub.s32 0, %v958
    %v960 = vrot.slane %v956, %v959
    %v961 = vmul.f32 %v955, %v960
    %v963 = vrot.slane %v961, 4
    %v965 = vadd.f32 %v954, %v963
    %v966 = vld [vmem:[#allocation2 + $0x10] sm:$0xf]
    %v967 = vld [vmem:[#allocation5 + $0x8] sm:$0x1]
    %v968 = vlaneseq
    %v969 = vshrl.u32 %v968, 7
    %v970 = vsub.s32 0, %v969
    %v971 = vrot.slane %v967, %v970
    %v972 = vmul.f32 %v966, %v971
    %v973 = vadd.f32 %v965, %v972
    %v974 = vld [vmem:[#allocation2 + $0x10] sm:$0xf0]
    %v975 = vld [vmem:[#allocation5 + $0x9] sm:$0x1]
    %v976 = vlaneseq
    %v977 = vshrl.u32 %v976, 7
    %v978 = vsub.s32 0, %v977
    %v979 = vrot.slane %v975, %v978
    %v980 = vmul.f32 %v974, %v979
    %v982 = vrot.slane %v980, 4
    %v984 = vadd.f32 %v973, %v982
    %v985 = vld [vmem:[#allocation2 + $0x50] sm:$0xf]
    %v986 = vld [vmem:[#allocation5 + $0xa] sm:$0x1]
    %v987 = vlaneseq
    %v988 = vshrl.u32 %v987, 7
    %v989 = vsub.s32 0, %v988
    %v990 = vrot.slane %v986, %v989
    %v991 = vmul.f32 %v985, %v990
    %v992 = vadd.f32 %v984, %v991
    %v993 = vld [vmem:[#allocation2 + $0x50] sm:$0xf0]
    %v994 = vld [vmem:[#allocation5 + $0xb] sm:$0x1]
    %v995 = vlaneseq
    %v996 = vshrl.u32 %v995, 7
    %v997 = vsub.s32 0, %v996
    %v998 = vrot.slane %v994, %v997
    %v999 = vmul.f32 %v993, %v998
    %v1001 = vrot.slane %v999, 4
    %v1003 = vadd.f32 %v992, %v1001
    %v1004 = vld [vmem:[#allocation2 + $0x18] sm:$0xf]
    %v1005 = vld [vmem:[#allocation5 + $0xc] sm:$0x1]
    %v1006 = vlaneseq
    %v1007 = vshrl.u32 %v1006, 7
    %v1008 = vsub.s32 0, %v1007
    %v1009 = vrot.slane %v1005, %v1008
    %v1010 = vmul.f32 %v1004, %v1009
    %v1011 = vadd.f32 %v1003, %v1010
    %v1012 = vld [vmem:[#allocation2 + $0x18] sm:$0xf0]
    %v1013 = vld [vmem:[#allocation5 + $0xd] sm:$0x1]
    %v1014 = vlaneseq
    %v1015 = vshrl.u32 %v1014, 7
    %v1016 = vsub.s32 0, %v1015
    %v1017 = vrot.slane %v1013, %v1016
    %v1018 = vmul.f32 %v1012, %v1017
    %v1020 = vrot.slane %v1018, 4
    %v1022 = vadd.f32 %v1011, %v1020
    %v1023 = vld [vmem:[#allocation2 + $0x58] sm:$0xf]
    %v1024 = vld [vmem:[#allocation5 + $0xe] sm:$0x1]
    %v1025 = vlaneseq
    %v1026 = vshrl.u32 %v1025, 7
    %v1027 = vsub.s32 0, %v1026
    %v1028 = vrot.slane %v1024, %v1027
    %v1029 = vmul.f32 %v1023, %v1028
    %v1030 = vadd.f32 %v1022, %v1029
    %v1031 = vld [vmem:[#allocation2 + $0x58] sm:$0xf0]
    %v1032 = vld [vmem:[#allocation5 + $0xf] sm:$0x1]
    %v1033 = vlaneseq
    %v1034 = vshrl.u32 %v1033, 7
    %v1035 = vsub.s32 0, %v1034
    %v1036 = vrot.slane %v1032, %v1035
    %v1037 = vmul.f32 %v1031, %v1036
    %v1039 = vrot.slane %v1037, 4
    %v1041 = vadd.f32 %v1030, %v1039
    %v1042 = vld [vmem:[#allocation2 + $0x20] sm:$0xf]
    %v1043 = vld [vmem:[#allocation5 + $0x10] sm:$0x1]
    %v1044 = vlaneseq
    %v1045 = vshrl.u32 %v1044, 7
    %v1046 = vsub.s32 0, %v1045
    %v1047 = vrot.slane %v1043, %v1046
    %v1048 = vmul.f32 %v1042, %v1047
    %v1049 = vadd.f32 %v1041, %v1048
    %v1050 = vld [vmem:[#allocation2 + $0x20] sm:$0xf0]
    %v1051 = vld [vmem:[#allocation5 + $0x11] sm:$0x1]
    %v1052 = vlaneseq
    %v1053 = vshrl.u32 %v1052, 7
    %v1054 = vsub.s32 0, %v1053
    %v1055 = vrot.slane %v1051, %v1054
    %v1056 = vmul.f32 %v1050, %v1055
    %v1058 = vrot.slane %v1056, 4
    %v1060 = vadd.f32 %v1049, %v1058
    %v1061 = vld [vmem:[#allocation2 + $0x60] sm:$0xf]
    %v1062 = vld [vmem:[#allocation5 + $0x12] sm:$0x1]
    %v1063 = vlaneseq
    %v1064 = vshrl.u32 %v1063, 7
    %v1065 = vsub.s32 0, %v1064
    %v1066 = vrot.slane %v1062, %v1065
    %v1067 = vmul.f32 %v1061, %v1066
    %v1068 = vadd.f32 %v1060, %v1067
    %v1069 = vld [vmem:[#allocation2 + $0x60] sm:$0xf0]
    %v1070 = vld [vmem:[#allocation5 + $0x13] sm:$0x1]
    %v1071 = vlaneseq
    %v1072 = vshrl.u32 %v1071, 7
    %v1073 = vsub.s32 0, %v1072
    %v1074 = vrot.slane %v1070, %v1073
    %v1075 = vmul.f32 %v1069, %v1074
    %v1077 = vrot.slane %v1075, 4
    %v1079 = vadd.f32 %v1068, %v1077
    %v1080 = vld [vmem:[#allocation2 + $0x28] sm:$0xf]
    %v1081 = vld [vmem:[#allocation5 + $0x14] sm:$0x1]
    %v1082 = vlaneseq
    %v1083 = vshrl.u32 %v1082, 7
    %v1084 = vsub.s32 0, %v1083
    %v1085 = vrot.slane %v1081, %v1084
    %v1086 = vmul.f32 %v1080, %v1085
    %v1087 = vadd.f32 %v1079, %v1086
    %v1088 = vld [vmem:[#allocation2 + $0x28] sm:$0xf0]
    %v1089 = vld [vmem:[#allocation5 + $0x15] sm:$0x1]
    %v1090 = vlaneseq
    %v1091 = vshrl.u32 %v1090, 7
    %v1092 = vsub.s32 0, %v1091
    %v1093 = vrot.slane %v1089, %v1092
    %v1094 = vmul.f32 %v1088, %v1093
    %v1096 = vrot.slane %v1094, 4
    %v1098 = vadd.f32 %v1087, %v1096
    %v1099 = vld [vmem:[#allocation2 + $0x68] sm:$0xf]
    %v1100 = vld [vmem:[#allocation5 + $0x16] sm:$0x1]
    %v1101 = vlaneseq
    %v1102 = vshrl.u32 %v1101, 7
    %v1103 = vsub.s32 0, %v1102
    %v1104 = vrot.slane %v1100, %v1103
    %v1105 = vmul.f32 %v1099, %v1104
    %v1106 = vadd.f32 %v1098, %v1105
    %v1107 = vld [vmem:[#allocation2 + $0x68] sm:$0xf0]
    %v1108 = vld [vmem:[#allocation5 + $0x17] sm:$0x1]
    %v1109 = vlaneseq
    %v1110 = vshrl.u32 %v1109, 7
    %v1111 = vsub.s32 0, %v1110
    %v1112 = vrot.slane %v1108, %v1111
    %v1113 = vmul.f32 %v1107, %v1112
    %v1115 = vrot.slane %v1113, 4
    %v1117 = vadd.f32 %v1106, %v1115
    %v1118 = vld [vmem:[#allocation2 + $0x30] sm:$0xf]
    %v1119 = vld [vmem:[#allocation5 + $0x18] sm:$0x1]
    %v1120 = vlaneseq
    %v1121 = vshrl.u32 %v1120, 7
    %v1122 = vsub.s32 0, %v1121
    %v1123 = vrot.slane %v1119, %v1122
    %v1124 = vmul.f32 %v1118, %v1123
    %v1125 = vadd.f32 %v1117, %v1124
    %v1126 = vld [vmem:[#allocation2 + $0x30] sm:$0xf0]
    %v1127 = vld [vmem:[#allocation5 + $0x19] sm:$0x1]
    %v1128 = vlaneseq
    %v1129 = vshrl.u32 %v1128, 7
    %v1130 = vsub.s32 0, %v1129
    %v1131 = vrot.slane %v1127, %v1130
    %v1132 = vmul.f32 %v1126, %v1131
    %v1134 = vrot.slane %v1132, 4
    %v1136 = vadd.f32 %v1125, %v1134
    %v1137 = vld [vmem:[#allocation2 + $0x70] sm:$0xf]
    %v1138 = vld [vmem:[#allocation5 + $0x1a] sm:$0x1]
    %v1139 = vlaneseq
    %v1140 = vshrl.u32 %v1139, 7
    %v1141 = vsub.s32 0, %v1140
    %v1142 = vrot.slane %v1138, %v1141
    %v1143 = vmul.f32 %v1137, %v1142
    %v1144 = vadd.f32 %v1136, %v1143
    %v1145 = vld [vmem:[#allocation2 + $0x70] sm:$0xf0]
    %v1146 = vld [vmem:[#allocation5 + $0x1b] sm:$0x1]
    %v1147 = vlaneseq
    %v1148 = vshrl.u32 %v1147, 7
    %v1149 = vsub.s32 0, %v1148
    %v1150 = vrot.slane %v1146, %v1149
    %v1151 = vmul.f32 %v1145, %v1150
    %v1153 = vrot.slane %v1151, 4
    %v1155 = vadd.f32 %v1144, %v1153
    %v1156 = vld [vmem:[#allocation2 + $0x38] sm:$0xf]
    %v1157 = vld [vmem:[#allocation5 + $0x1c] sm:$0x1]
    %v1158 = vlaneseq
    %v1159 = vshrl.u32 %v1158, 7
    %v1160 = vsub.s32 0, %v1159
    %v1161 = vrot.slane %v1157, %v1160
    %v1162 = vmul.f32 %v1156, %v1161
    %v1163 = vadd.f32 %v1155, %v1162
    %v1164 = vld [vmem:[#allocation2 + $0x38] sm:$0xf0]
    %v1165 = vld [vmem:[#allocation5 + $0x1d] sm:$0x1]
    %v1166 = vlaneseq
    %v1167 = vshrl.u32 %v1166, 7
    %v1168 = vsub.s32 0, %v1167
    %v1169 = vrot.slane %v1165, %v1168
    %v1170 = vmul.f32 %v1164, %v1169
    %v1172 = vrot.slane %v1170, 4
    %v1174 = vadd.f32 %v1163, %v1172
    %v1175 = vld [vmem:[#allocation2 + $0x78] sm:$0xf]
    %v1176 = vld [vmem:[#allocation5 + $0x1e] sm:$0x1]
    %v1177 = vlaneseq
    %v1178 = vshrl.u32 %v1177, 7
    %v1179 = vsub.s32 0, %v1178
    %v1180 = vrot.slane %v1176, %v1179
    %v1181 = vmul.f32 %v1175, %v1180
    %v1182 = vadd.f32 %v1174, %v1181
    %v1183 = vld [vmem:[#allocation2 + $0x78] sm:$0xf0]
    %v1184 = vld [vmem:[#allocation5 + $0x1f] sm:$0x1]
    %v1185 = vlaneseq
    %v1186 = vshrl.u32 %v1185, 7
    %v1187 = vsub.s32 0, %v1186
    %v1188 = vrot.slane %v1184, %v1187
    %v1189 = vmul.f32 %v1183, %v1188
    %v1191 = vrot.slane %v1189, 4
    %v1193 = vadd.f32 %v1182, %v1191
    %1195 = vset.pattern.permute.xlu0 0
    %1196 = vperm.xlu0 %1195, %v889
    %v1197 = vpop.permute.xlu0 %1196
    %v1199 = vadd.f32 %v1193, %v1197
    %1200 = vst [vmem:[#allocation10] sm:$0xf] %v1199
    %v1201 = vld [vmem:[#allocation3] ss:$0 sm:$0xff]
    %v1202 = vld [vmem:[#allocation8] sm:$0xff]
    %v1203 = vld [vmem:[#allocation8 + $0x40] sm:$0xff]
    %v1204 = vld [vmem:[#allocation8 + $0x80] sm:$0xf]
    %v1205 = vmul.f32 %v1202, %v1201
    %v1206 = vmul.f32 %v1203, %v1201
    %v1207 = vmul.f32 %v1204, %v1201
    %v1208 = vadd.f32 %v1205, 0.0
    %v1209 = vadd.f32 %v1206, 0.0
    %v1210 = vadd.f32 %v1207, 0.0
    %v1211 = vld [vmem:[#allocation3 + $0x8] ss:$0 sm:$0xff]
    %v1212 = vld [vmem:[#allocation8 + $0x8] sm:$0xff]
    %v1213 = vld [vmem:[#allocation8 + $0x48] sm:$0xff]
    %v1214 = vld [vmem:[#allocation8 + $0x88] sm:$0xf]
    %v1215 = vmul.f32 %v1212, %v1211
    %v1216 = vmul.f32 %v1213, %v1211
    %v1217 = vmul.f32 %v1214, %v1211
    %v1218 = vadd.f32 %v1208, %v1215
    %v1219 = vadd.f32 %v1209, %v1216
    %v1220 = vadd.f32 %v1210, %v1217
    %v1221 = vld [vmem:[#allocation3 + $0x10] ss:$0 sm:$0xff]
    %v1222 = vld [vmem:[#allocation8 + $0x10] sm:$0xff]
    %v1223 = vld [vmem:[#allocation8 + $0x50] sm:$0xff]
    %v1224 = vld [vmem:[#allocation8 + $0x90] sm:$0xf]
    %v1225 = vmul.f32 %v1222, %v1221
    %v1226 = vmul.f32 %v1223, %v1221
    %v1227 = vmul.f32 %v1224, %v1221
    %v1228 = vadd.f32 %v1218, %v1225
    %v1229 = vadd.f32 %v1219, %v1226
    %v1230 = vadd.f32 %v1220, %v1227
    %v1231 = vld [vmem:[#allocation3 + $0x18] ss:$0 sm:$0xff]
    %v1232 = vld [vmem:[#allocation8 + $0x18] sm:$0xff]
    %v1233 = vld [vmem:[#allocation8 + $0x58] sm:$0xff]
    %v1234 = vld [vmem:[#allocation8 + $0x98] sm:$0xf]
    %v1235 = vmul.f32 %v1232, %v1231
    %v1236 = vmul.f32 %v1233, %v1231
    %v1237 = vmul.f32 %v1234, %v1231
    %v1238 = vadd.f32 %v1228, %v1235
    %v1239 = vadd.f32 %v1229, %v1236
    %v1240 = vadd.f32 %v1230, %v1237
    %v1241 = vld [vmem:[#allocation3 + $0x20] ss:$0 sm:$0xff]
    %v1242 = vld [vmem:[#allocation8 + $0x20] sm:$0xff]
    %v1243 = vld [vmem:[#allocation8 + $0x60] sm:$0xff]
    %v1244 = vld [vmem:[#allocation8 + $0xa0] sm:$0xf]
    %v1245 = vmul.f32 %v1242, %v1241
    %v1246 = vmul.f32 %v1243, %v1241
    %v1247 = vmul.f32 %v1244, %v1241
    %v1248 = vadd.f32 %v1238, %v1245
    %v1249 = vadd.f32 %v1239, %v1246
    %v1250 = vadd.f32 %v1240, %v1247
    %v1251 = vld [vmem:[#allocation3 + $0x28] ss:$0 sm:$0xff]
    %v1252 = vld [vmem:[#allocation8 + $0x28] sm:$0xff]
    %v1253 = vld [vmem:[#allocation8 + $0x68] sm:$0xff]
    %v1254 = vld [vmem:[#allocation8 + $0xa8] sm:$0xf]
    %v1255 = vmul.f32 %v1252, %v1251
    %v1256 = vmul.f32 %v1253, %v1251
    %v1257 = vmul.f32 %v1254, %v1251
    %v1258 = vadd.f32 %v1248, %v1255
    %v1259 = vadd.f32 %v1249, %v1256
    %v1260 = vadd.f32 %v1250, %v1257
    %v1261 = vld [vmem:[#allocation3 + $0x30] ss:$0 sm:$0xff]
    %v1262 = vld [vmem:[#allocation8 + $0x30] sm:$0xff]
    %v1263 = vld [vmem:[#allocation8 + $0x70] sm:$0xff]
    %v1264 = vld [vmem:[#allocation8 + $0xb0] sm:$0xf]
    %v1265 = vmul.f32 %v1262, %v1261
    %v1266 = vmul.f32 %v1263, %v1261
    %v1267 = vmul.f32 %v1264, %v1261
    %v1268 = vadd.f32 %v1258, %v1265
    %v1269 = vadd.f32 %v1259, %v1266
    %v1270 = vadd.f32 %v1260, %v1267
    %v1271 = vld [vmem:[#allocation3 + $0x38] ss:$0 sm:$0xff]
    %v1272 = vld [vmem:[#allocation8 + $0x38] sm:$0xff]
    %v1273 = vld [vmem:[#allocation8 + $0x78] sm:$0xff]
    %v1274 = vld [vmem:[#allocation8 + $0xb8] sm:$0xf]
    %v1275 = vmul.f32 %v1272, %v1271
    %v1276 = vmul.f32 %v1273, %v1271
    %v1277 = vmul.f32 %v1274, %v1271
    %v1278 = vadd.f32 %v1268, %v1275
    %v1279 = vadd.f32 %v1269, %v1276
    %v1280 = vadd.f32 %v1270, %v1277
    %v1281 = vld [vmem:[#allocation4] sm:$0xff]
    %v1282 = vld [vmem:[#allocation4 + $0x8] sm:$0xff]
    %v1283 = vld [vmem:[#allocation4 + $0x10] sm:$0xf]
    %v1284 = vmul.f32 %v1278, %v1281
    %v1285 = vmul.f32 %v1279, %v1282
    %v1286 = vmul.f32 %v1280, %v1283
    %v1287 = vsel %vm83, %v1286, -inf
    %v1288 = vmax.f32 %v1284, %v1285
    %v1289 = vmax.f32 %v1288, %v1287
    %v1290 = vrot.slane %v1289, 4
    %v1291 = vmax.f32 %v1289, %v1290
    %v1292 = vrot.slane %v1291, 2
    %v1293 = vmax.f32 %v1291, %v1292
    %v1294 = vrot.slane %v1293, 1
    %v1295 = vmax.f32 %v1293, %v1294
    %v1296 = vadd.f32 %v1295, %v1197
    %1297 = vst [vmem:[#allocation10] sm:$0x10] %v1296
    %v1298 = vld [vmem:[#allocation3 + $0x1] ss:$0 sm:$0xff]
    %v1299 = vld [vmem:[#allocation8] sm:$0xff]
    %v1300 = vld [vmem:[#allocation8 + $0x40] sm:$0xff]
    %v1301 = vld [vmem:[#allocation8 + $0x80] sm:$0xf]
    %v1302 = vmul.f32 %v1299, %v1298
    %v1303 = vmul.f32 %v1300, %v1298
    %v1304 = vmul.f32 %v1301, %v1298
    %v1305 = vadd.f32 %v1302, 0.0
    %v1306 = vadd.f32 %v1303, 0.0
    %v1307 = vadd.f32 %v1304, 0.0
    %v1308 = vld [vmem:[#allocation3 + $0x9] ss:$0 sm:$0xff]
    %v1309 = vld [vmem:[#allocation8 + $0x8] sm:$0xff]
    %v1310 = vld [vmem:[#allocation8 + $0x48] sm:$0xff]
    %v1311 = vld [vmem:[#allocation8 + $0x88] sm:$0xf]
    %v1312 = vmul.f32 %v1309, %v1308
    %v1313 = vmul.f32 %v1310, %v1308
    %v1314 = vmul.f32 %v1311, %v1308
    %v1315 = vadd.f32 %v1305, %v1312
    %v1316 = vadd.f32 %v1306, %v1313
    %v1317 = vadd.f32 %v1307, %v1314
    %v1318 = vld [vmem:[#allocation3 + $0x11] ss:$0 sm:$0xff]
    %v1319 = vld [vmem:[#allocation8 + $0x10] sm:$0xff]
    %v1320 = vld [vmem:[#allocation8 + $0x50] sm:$0xff]
    %v1321 = vld [vmem:[#allocation8 + $0x90] sm:$0xf]
    %v1322 = vmul.f32 %v1319, %v1318
    %v1323 = vmul.f32 %v1320, %v1318
    %v1324 = vmul.f32 %v1321, %v1318
    %v1325 = vadd.f32 %v1315, %v1322
    %v1326 = vadd.f32 %v1316, %v1323
    %v1327 = vadd.f32 %v1317, %v1324
    %v1328 = vld [vmem:[#allocation3 + $0x19] ss:$0 sm:$0xff]
    %v1329 = vld [vmem:[#allocation8 + $0x18] sm:$0xff]
    %v1330 = vld [vmem:[#allocation8 + $0x58] sm:$0xff]
    %v1331 = vld [vmem:[#allocation8 + $0x98] sm:$0xf]
    %v1332 = vmul.f32 %v1329, %v1328
    %v1333 = vmul.f32 %v1330, %v1328
    %v1334 = vmul.f32 %v1331, %v1328
    %v1335 = vadd.f32 %v1325, %v1332
    %v1336 = vadd.f32 %v1326, %v1333
    %v1337 = vadd.f32 %v1327, %v1334
    %v1338 = vld [vmem:[#allocation3 + $0x21] ss:$0 sm:$0xff]
    %v1339 = vld [vmem:[#allocation8 + $0x20] sm:$0xff]
    %v1340 = vld [vmem:[#allocation8 + $0x60] sm:$0xff]
    %v1341 = vld [vmem:[#allocation8 + $0xa0] sm:$0xf]
    %v1342 = vmul.f32 %v1339, %v1338
    %v1343 = vmul.f32 %v1340, %v1338
    %v1344 = vmul.f32 %v1341, %v1338
    %v1345 = vadd.f32 %v1335, %v1342
    %v1346 = vadd.f32 %v1336, %v1343
    %v1347 = vadd.f32 %v1337, %v1344
    %v1348 = vld [vmem:[#allocation3 + $0x29] ss:$0 sm:$0xff]
    %v1349 = vld [vmem:[#allocation8 + $0x28] sm:$0xff]
    %v1350 = vld [vmem:[#allocation8 + $0x68] sm:$0xff]
    %v1351 = vld [vmem:[#allocation8 + $0xa8] sm:$0xf]
    %v1352 = vmul.f32 %v1349, %v1348
    %v1353 = vmul.f32 %v1350, %v1348
    %v1354 = vmul.f32 %v1351, %v1348
    %v1355 = vadd.f32 %v1345, %v1352
    %v1356 = vadd.f32 %v1346, %v1353
    %v1357 = vadd.f32 %v1347, %v1354
    %v1358 = vld [vmem:[#allocation3 + $0x31] ss:$0 sm:$0xff]
    %v1359 = vld [vmem:[#allocation8 + $0x30] sm:$0xff]
    %v1360 = vld [vmem:[#allocation8 + $0x70] sm:$0xff]
    %v1361 = vld [vmem:[#allocation8 + $0xb0] sm:$0xf]
    %v1362 = vmul.f32 %v1359, %v1358
    %v1363 = vmul.f32 %v1360, %v1358
    %v1364 = vmul.f32 %v1361, %v1358
    %v1365 = vadd.f32 %v1355, %v1362
    %v1366 = vadd.f32 %v1356, %v1363
    %v1367 = vadd.f32 %v1357, %v1364
    %v1368 = vld [vmem:[#allocation3 + $0x39] ss:$0 sm:$0xff]
    %v1369 = vld [vmem:[#allocation8 + $0x38] sm:$0xff]
    %v1370 = vld [vmem:[#allocation8 + $0x78] sm:$0xff]
    %v1371 = vld [vmem:[#allocation8 + $0xb8] sm:$0xf]
    %v1372 = vmul.f32 %v1369, %v1368
    %v1373 = vmul.f32 %v1370, %v1368
    %v1374 = vmul.f32 %v1371, %v1368
    %v1375 = vadd.f32 %v1365, %v1372
    %v1376 = vadd.f32 %v1366, %v1373
    %v1377 = vadd.f32 %v1367, %v1374
    %v1378 = vld [vmem:[#allocation4] sm:$0xff]
    %v1379 = vld [vmem:[#allocation4 + $0x8] sm:$0xff]
    %v1380 = vld [vmem:[#allocation4 + $0x10] sm:$0xf]
    %v1381 = vmul.f32 %v1375, %v1378
    %v1382 = vmul.f32 %v1376, %v1379
    %v1383 = vmul.f32 %v1377, %v1380
    %v1384 = vsel %vm83, %v1383, -inf
    %v1385 = vmax.f32 %v1381, %v1382
    %v1386 = vmax.f32 %v1385, %v1384
    %v1387 = vrot.slane %v1386, 4
    %v1388 = vmax.f32 %v1386, %v1387
    %v1389 = vrot.slane %v1388, 2
    %v1390 = vmax.f32 %v1388, %v1389
    %v1391 = vrot.slane %v1390, 1
    %v1392 = vmax.f32 %v1390, %v1391
    %v1393 = vadd.f32 %v1392, %v1197
    %1394 = vst [vmem:[#allocation10] sm:$0x20] %v1393
    %v1395 = vld [vmem:[#allocation3 + $0x2] ss:$0 sm:$0xff]
    %v1396 = vld [vmem:[#allocation8] sm:$0xff]
    %v1397 = vld [vmem:[#allocation8 + $0x40] sm:$0xff]
    %v1398 = vld [vmem:[#allocation8 + $0x80] sm:$0xf]
    %v1399 = vmul.f32 %v1396, %v1395
    %v1400 = vmul.f32 %v1397, %v1395
    %v1401 = vmul.f32 %v1398, %v1395
    %v1402 = vadd.f32 %v1399, 0.0
    %v1403 = vadd.f32 %v1400, 0.0
    %v1404 = vadd.f32 %v1401, 0.0
    %v1405 = vld [vmem:[#allocation3 + $0xa] ss:$0 sm:$0xff]
    %v1406 = vld [vmem:[#allocation8 + $0x8] sm:$0xff]
    %v1407 = vld [vmem:[#allocation8 + $0x48] sm:$0xff]
    %v1408 = vld [vmem:[#allocation8 + $0x88] sm:$0xf]
    %v1409 = vmul.f32 %v1406, %v1405
    %v1410 = vmul.f32 %v1407, %v1405
    %v1411 = vmul.f32 %v1408, %v1405
    %v1412 = vadd.f32 %v1402, %v1409
    %v1413 = vadd.f32 %v1403, %v1410
    %v1414 = vadd.f32 %v1404, %v1411
    %v1415 = vld [vmem:[#allocation3 + $0x12] ss:$0 sm:$0xff]
    %v1416 = vld [vmem:[#allocation8 + $0x10] sm:$0xff]
    %v1417 = vld [vmem:[#allocation8 + $0x50] sm:$0xff]
    %v1418 = vld [vmem:[#allocation8 + $0x90] sm:$0xf]
    %v1419 = vmul.f32 %v1416, %v1415
    %v1420 = vmul.f32 %v1417, %v1415
    %v1421 = vmul.f32 %v1418, %v1415
    %v1422 = vadd.f32 %v1412, %v1419
    %v1423 = vadd.f32 %v1413, %v1420
    %v1424 = vadd.f32 %v1414, %v1421
    %v1425 = vld [vmem:[#allocation3 + $0x1a] ss:$0 sm:$0xff]
    %v1426 = vld [vmem:[#allocation8 + $0x18] sm:$0xff]
    %v1427 = vld [vmem:[#allocation8 + $0x58] sm:$0xff]
    %v1428 = vld [vmem:[#allocation8 + $0x98] sm:$0xf]
    %v1429 = vmul.f32 %v1426, %v1425
    %v1430 = vmul.f32 %v1427, %v1425
    %v1431 = vmul.f32 %v1428, %v1425
    %v1432 = vadd.f32 %v1422, %v1429
    %v1433 = vadd.f32 %v1423, %v1430
    %v1434 = vadd.f32 %v1424, %v1431
    %v1435 = vld [vmem:[#allocation3 + $0x22] ss:$0 sm:$0xff]
    %v1436 = vld [vmem:[#allocation8 + $0x20] sm:$0xff]
    %v1437 = vld [vmem:[#allocation8 + $0x60] sm:$0xff]
    %v1438 = vld [vmem:[#allocation8 + $0xa0] sm:$0xf]
    %v1439 = vmul.f32 %v1436, %v1435
    %v1440 = vmul.f32 %v1437, %v1435
    %v1441 = vmul.f32 %v1438, %v1435
    %v1442 = vadd.f32 %v1432, %v1439
    %v1443 = vadd.f32 %v1433, %v1440
    %v1444 = vadd.f32 %v1434, %v1441
    %v1445 = vld [vmem:[#allocation3 + $0x2a] ss:$0 sm:$0xff]
    %v1446 = vld [vmem:[#allocation8 + $0x28] sm:$0xff]
    %v1447 = vld [vmem:[#allocation8 + $0x68] sm:$0xff]
    %v1448 = vld [vmem:[#allocation8 + $0xa8] sm:$0xf]
    %v1449 = vmul.f32 %v1446, %v1445
    %v1450 = vmul.f32 %v1447, %v1445
    %v1451 = vmul.f32 %v1448, %v1445
    %v1452 = vadd.f32 %v1442, %v1449
    %v1453 = vadd.f32 %v1443, %v1450
    %v1454 = vadd.f32 %v1444, %v1451
    %v1455 = vld [vmem:[#allocation3 + $0x32] ss:$0 sm:$0xff]
    %v1456 = vld [vmem:[#allocation8 + $0x30] sm:$0xff]
    %v1457 = vld [vmem:[#allocation8 + $0x70] sm:$0xff]
    %v1458 = vld [vmem:[#allocation8 + $0xb0] sm:$0xf]
    %v1459 = vmul.f32 %v1456, %v1455
    %v1460 = vmul.f32 %v1457, %v1455
    %v1461 = vmul.f32 %v1458, %v1455
    %v1462 = vadd.f32 %v1452, %v1459
    %v1463 = vadd.f32 %v1453, %v1460
    %v1464 = vadd.f32 %v1454, %v1461
    %v1465 = vld [vmem:[#allocation3 + $0x3a] ss:$0 sm:$0xff]
    %v1466 = vld [vmem:[#allocation8 + $0x38] sm:$0xff]
    %v1467 = vld [vmem:[#allocation8 + $0x78] sm:$0xff]
    %v1468 = vld [vmem:[#allocation8 + $0xb8] sm:$0xf]
    %v1469 = vmul.f32 %v1466, %v1465
    %v1470 = vmul.f32 %v1467, %v1465
    %v1471 = vmul.f32 %v1468, %v1465
    %v1472 = vadd.f32 %v1462, %v1469
    %v1473 = vadd.f32 %v1463, %v1470
    %v1474 = vadd.f32 %v1464, %v1471
    %v1475 = vld [vmem:[#allocation4] sm:$0xff]
    %v1476 = vld [vmem:[#allocation4 + $0x8] sm:$0xff]
    %v1477 = vld [vmem:[#allocation4 + $0x10] sm:$0xf]
    %v1478 = vmul.f32 %v1472, %v1475
    %v1479 = vmul.f32 %v1473, %v1476
    %v1480 = vmul.f32 %v1474, %v1477
    %v1481 = vsel %vm83, %v1480, -inf
    %v1482 = vmax.f32 %v1478, %v1479
    %v1483 = vmax.f32 %v1482, %v1481
    %v1484 = vrot.slane %v1483, 4
    %v1485 = vmax.f32 %v1483, %v1484
    %v1486 = vrot.slane %v1485, 2
    %v1487 = vmax.f32 %v1485, %v1486
    %v1488 = vrot.slane %v1487, 1
    %v1489 = vmax.f32 %v1487, %v1488
    %v1490 = vadd.f32 %v1489, %v1197
    %1491 = vst [vmem:[#allocation10] sm:$0x40] %v1490
    %v1492 = vld [vmem:[#allocation3 + $0x3] ss:$0 sm:$0xff]
    %v1493 = vld [vmem:[#allocation8] sm:$0xff]
    %v1494 = vld [vmem:[#allocation8 + $0x40] sm:$0xff]
    %v1495 = vld [vmem:[#allocation8 + $0x80] sm:$0xf]
    %v1496 = vmul.f32 %v1493, %v1492
    %v1497 = vmul.f32 %v1494, %v1492
    %v1498 = vmul.f32 %v1495, %v1492
    %v1499 = vadd.f32 %v1496, 0.0
    %v1500 = vadd.f32 %v1497, 0.0
    %v1501 = vadd.f32 %v1498, 0.0
    %v1502 = vld [vmem:[#allocation3 + $0xb] ss:$0 sm:$0xff]
    %v1503 = vld [vmem:[#allocation8 + $0x8] sm:$0xff]
    %v1504 = vld [vmem:[#allocation8 + $0x48] sm:$0xff]
    %v1505 = vld [vmem:[#allocation8 + $0x88] sm:$0xf]
    %v1506 = vmul.f32 %v1503, %v1502
    %v1507 = vmul.f32 %v1504, %v1502
    %v1508 = vmul.f32 %v1505, %v1502
    %v1509 = vadd.f32 %v1499, %v1506
    %v1510 = vadd.f32 %v1500, %v1507
    %v1511 = vadd.f32 %v1501, %v1508
    %v1512 = vld [vmem:[#allocation3 + $0x13] ss:$0 sm:$0xff]
    %v1513 = vld [vmem:[#allocation8 + $0x10] sm:$0xff]
    %v1514 = vld [vmem:[#allocation8 + $0x50] sm:$0xff]
    %v1515 = vld [vmem:[#allocation8 + $0x90] sm:$0xf]
    %v1516 = vmul.f32 %v1513, %v1512
    %v1517 = vmul.f32 %v1514, %v1512
    %v1518 = vmul.f32 %v1515, %v1512
    %v1519 = vadd.f32 %v1509, %v1516
    %v1520 = vadd.f32 %v1510, %v1517
    %v1521 = vadd.f32 %v1511, %v1518
    %v1522 = vld [vmem:[#allocation3 + $0x1b] ss:$0 sm:$0xff]
    %v1523 = vld [vmem:[#allocation8 + $0x18] sm:$0xff]
    %v1524 = vld [vmem:[#allocation8 + $0x58] sm:$0xff]
    %v1525 = vld [vmem:[#allocation8 + $0x98] sm:$0xf]
    %v1526 = vmul.f32 %v1523, %v1522
    %v1527 = vmul.f32 %v1524, %v1522
    %v1528 = vmul.f32 %v1525, %v1522
    %v1529 = vadd.f32 %v1519, %v1526
    %v1530 = vadd.f32 %v1520, %v1527
    %v1531 = vadd.f32 %v1521, %v1528
    %v1532 = vld [vmem:[#allocation3 + $0x23] ss:$0 sm:$0xff]
    %v1533 = vld [vmem:[#allocation8 + $0x20] sm:$0xff]
    %v1534 = vld [vmem:[#allocation8 + $0x60] sm:$0xff]
    %v1535 = vld [vmem:[#allocation8 + $0xa0] sm:$0xf]
    %v1536 = vmul.f32 %v1533, %v1532
    %v1537 = vmul.f32 %v1534, %v1532
    %v1538 = vmul.f32 %v1535, %v1532
    %v1539 = vadd.f32 %v1529, %v1536
    %v1540 = vadd.f32 %v1530, %v1537
    %v1541 = vadd.f32 %v1531, %v1538
    %v1542 = vld [vmem:[#allocation3 + $0x2b] ss:$0 sm:$0xff]
    %v1543 = vld [vmem:[#allocation8 + $0x28] sm:$0xff]
    %v1544 = vld [vmem:[#allocation8 + $0x68] sm:$0xff]
    %v1545 = vld [vmem:[#allocation8 + $0xa8] sm:$0xf]
    %v1546 = vmul.f32 %v1543, %v1542
    %v1547 = vmul.f32 %v1544, %v1542
    %v1548 = vmul.f32 %v1545, %v1542
    %v1549 = vadd.f32 %v1539, %v1546
    %v1550 = vadd.f32 %v1540, %v1547
    %v1551 = vadd.f32 %v1541, %v1548
    %v1552 = vld [vmem:[#allocation3 + $0x33] ss:$0 sm:$0xff]
    %v1553 = vld [vmem:[#allocation8 + $0x30] sm:$0xff]
    %v1554 = vld [vmem:[#allocation8 + $0x70] sm:$0xff]
    %v1555 = vld [vmem:[#allocation8 + $0xb0] sm:$0xf]
    %v1556 = vmul.f32 %v1553, %v1552
    %v1557 = vmul.f32 %v1554, %v1552
    %v1558 = vmul.f32 %v1555, %v1552
    %v1559 = vadd.f32 %v1549, %v1556
    %v1560 = vadd.f32 %v1550, %v1557
    %v1561 = vadd.f32 %v1551, %v1558
    %v1562 = vld [vmem:[#allocation3 + $0x3b] ss:$0 sm:$0xff]
    %v1563 = vld [vmem:[#allocation8 + $0x38] sm:$0xff]
    %v1564 = vld [vmem:[#allocation8 + $0x78] sm:$0xff]
    %v1565 = vld [vmem:[#allocation8 + $0xb8] sm:$0xf]
    %v1566 = vmul.f32 %v1563, %v1562
    %v1567 = vmul.f32 %v1564, %v1562
    %v1568 = vmul.f32 %v1565, %v1562
    %v1569 = vadd.f32 %v1559, %v1566
    %v1570 = vadd.f32 %v1560, %v1567
    %v1571 = vadd.f32 %v1561, %v1568
    %v1572 = vld [vmem:[#allocation4] sm:$0xff]
    %v1573 = vld [vmem:[#allocation4 + $0x8] sm:$0xff]
    %v1574 = vld [vmem:[#allocation4 + $0x10] sm:$0xf]
    %v1575 = vmul.f32 %v1569, %v1572
    %v1576 = vmul.f32 %v1570, %v1573
    %v1577 = vmul.f32 %v1571, %v1574
    %v1578 = vsel %vm83, %v1577, -inf
    %v1579 = vmax.f32 %v1575, %v1576
    %v1580 = vmax.f32 %v1579, %v1578
    %v1581 = vrot.slane %v1580, 4
    %v1582 = vmax.f32 %v1580, %v1581
    %v1583 = vrot.slane %v1582, 2
    %v1584 = vmax.f32 %v1582, %v1583
    %v1585 = vrot.slane %v1584, 1
    %v1586 = vmax.f32 %v1584, %v1585
    %v1587 = vadd.f32 %v1586, %v1197
    %1588 = vst [vmem:[#allocation10] sm:$0x80] %v1587
    // Predicated region
    $region34: #{tpu_custom_call.1} parent=1 // pred_check
      _
    $region35: #{tpu_custom_call.1} parent=1 // pred_check_branch
      %1590 = sbr.rel (0) target = $region37
    $region36: #{tpu_custom_call.1} parent=1 // pred_region
      %s1592 = ssub.s32 128, 128
      %1593 = vsyncadd [#allocation7], %s1592
      %s1595 = sshll.u32 [#allocation10], 4
      %s1596 = int_to_ptr.vmem [resolvable:$true] %s1595
      %1598 = dma.vmem_to_hbm [thread:$0]  %s1596, 128, %s6, [#allocation7]
    $region37: #{tpu_custom_call.1} parent=1 // pred_fallthru
      _
    // Predicated region
    $region38: #{tpu_custom_call.1} parent=1 // pred_check
      _
    $region39: #{tpu_custom_call.1} parent=1 // pred_check_branch
      %1600 = sbr.rel (0) target = $region41
    $region40: #{tpu_custom_call.1} parent=1 // pred_region
      %1601 = dma.done [#allocation7], 128
    $region41: #{tpu_custom_call.1} parent=1 // pred_fallthru
      _
    %1602 = vsyncpa [#allocation6], 1
    %1603 = vsyncpa [#allocation9], 1
    %1604 = vsyncpa [#allocation7], 1

</llo_original>
